<compile_context>
chip_gen: v7x
topology: tpu7x:2x2x1
jax: 0.10.0
libtpu: 0.0.40
codegen_flags: <defaults>
</compile_context>

<pallas_src>
import jax
import jax.numpy as jnp
from jax.experimental import pallas as pl
from jax.experimental.pallas import tpu as pltpu

HID1 = 1024
HID2 = 512
LANE = 128
SUBLANE = 8


def _policy_kernel(x_ref, w1_ref, b1_ref, w2_ref, b2_ref, w3_ref, b3_ref, o_ref):
    # fc1 + relu (bf16 inputs, f32 accumulation on the MXU)
    h1 = jnp.dot(x_ref[...], w1_ref[...], preferred_element_type=jnp.float32)
    h1 = jnp.maximum(h1 + b1_ref[...], 0.0).astype(jnp.bfloat16)
    # fc2 + relu
    h2 = jnp.dot(h1, w2_ref[...], preferred_element_type=jnp.float32)
    h2 = jnp.maximum(h2 + b2_ref[...], 0.0).astype(jnp.bfloat16)
    # fc3 logits (lane-padded; padded columns carry bias -1e30 -> exp == 0)
    logits = jnp.dot(h2, w3_ref[...], preferred_element_type=jnp.float32)
    logits = logits + b3_ref[...]
    # numerically-stable softmax along the last dim
    m = jnp.max(logits, axis=-1, keepdims=True)
    e = jnp.exp(logits - m)
    denom = jnp.sum(e, axis=-1, keepdims=True)
    # TODO(synk): renormalize / approx=False if downstream needs exact log-probs.
    o_ref[...] = e * pl.reciprocal(denom, approx=True)


def init_params(key, input_dim, output_dim):
    """Deterministic synthetic parameters (shapes match the nn.Linear layers,
    stored as [in, out] i.e. transposed vs PyTorch), in float32."""
    k1, k2, k3, k4, k5, k6 = jax.random.split(key, 6)
    w1 = jax.random.normal(k1, (input_dim, HID1), jnp.float32) * (1.0 / jnp.sqrt(input_dim))
    b1 = jax.random.normal(k2, (1, HID1), jnp.float32) * 0.01
    w2 = jax.random.normal(k3, (HID1, HID2), jnp.float32) * (1.0 / jnp.sqrt(HID1))
    b2 = jax.random.normal(k4, (1, HID2), jnp.float32) * 0.01
    w3 = jax.random.normal(k5, (HID2, output_dim), jnp.float32) * (1.0 / jnp.sqrt(HID2))
    b3 = jax.random.normal(k6, (1, output_dim), jnp.float32) * 0.01
    return (w1, b1, w2, b2, w3, b3)


def prepare_params(params):
    """One-time prep: cast weights to bf16, zero-pad the input dim and pad the
    output dim to full 128-lane vregs (output pad bias = -1e30 so softmax
    ignores padded columns)."""
    w1, b1, w2, b2, w3, b3 = params
    input_dim = w1.shape[0]
    output_dim = w3.shape[1]
    in_pad = pl.cdiv(input_dim, LANE) * LANE
    out_pad = pl.cdiv(output_dim, LANE) * LANE
    if in_pad != input_dim:
        w1 = jnp.pad(w1, ((0, in_pad - input_dim), (0, 0)))
    if out_pad != output_dim:
        w3 = jnp.pad(w3, ((0, 0), (0, out_pad - output_dim)))
        b3 = jnp.pad(b3, ((0, 0), (0, out_pad - output_dim)), constant_values=-1e30)
    prepared = (
        w1.astype(jnp.bfloat16), b1.astype(jnp.float32),
        w2.astype(jnp.bfloat16), b2.astype(jnp.float32),
        w3.astype(jnp.bfloat16), b3.astype(jnp.float32),
    )
    meta = (input_dim, in_pad, output_dim, out_pad)
    return prepared, meta


def _choose_tm(b):
    # Tiny/medium batches: one tile rounded up to the sublane multiple.
    # Large batches: 512-row tiles (amortizes ~0.35 us/step grid overhead).
    if b <= 512:
        return max(SUBLANE, pl.cdiv(b, SUBLANE) * SUBLANE)
    return 512


def _resident_spec(shape, single_buffer):
    index_map = lambda i: (0, 0)
    if single_buffer:
        # Constant block index across the grid -> no need for the default
        # double-buffer; drop the dead second weight copy.
        return pl.BlockSpec(shape, index_map, pipeline_mode=pl.Buffered(1))
    return pl.BlockSpec(shape, index_map)


def _policy_forward_impl(x, prepared, meta, single_buffer_weights):
    w1, b1, w2, b2, w3, b3 = prepared
    input_dim, in_pad, output_dim, out_pad = meta

    if x.ndim == 1:
        # matches `if x.dim() == 1: x = x.unsqueeze(0)` in the PyTorch module
        x = x[None, :]
    B, D_in = x.shape
    assert D_in == input_dim

    tm = _choose_tm(B)
    b_pad = pl.cdiv(B, tm) * tm

    xb = x.astype(jnp.bfloat16)
    pad_rows = b_pad - B
    pad_cols = in_pad - D_in
    if pad_rows or pad_cols:
        xb = jnp.pad(xb, ((0, pad_rows), (0, pad_cols)))

    grid_steps = b_pad // tm
    grid = (grid_steps,)

    # v7x: "parallel" shards batch tiles across the 2 TensorCores but each TC
    # then issues its own weight DMAs; only worth it with enough tiles that
    # MXU work dominates the weight stream. v5e/v6e: measured neutral.
    dim_sem = ("parallel",) if grid_steps >= 4 else ("arbitrary",)

    # VMEM footprint estimate: weights (single- or double-buffered), x/out
    # double-buffered tiles, f32 intermediates. Only raise vmem_limit_bytes
    # when the default scoped limit (16 MiB on v5e) is at risk.
    weight_bytes = (w1.size + w2.size + w3.size) * 2 + (b1.size + b2.size + b3.size) * 4
    if not single_buffer_weights:
        weight_bytes *= 2
    act_bytes = (2 * tm * in_pad * 2          # x tile, double-buffered, bf16
                 + 2 * tm * out_pad * 4       # out tile, double-buffered, f32
                 + tm * HID1 * 4 + tm * HID2 * 4)  # h1 / h2 intermediates
    est_vmem = weight_bytes + act_bytes
    compiler_kwargs = dict(dimension_semantics=dim_sem)
    if est_vmem > 12 * 1024 * 1024:
        compiler_kwargs["vmem_limit_bytes"] = min(
            int(est_vmem * 1.5) + (1 << 20), 56 * 1024 * 1024)

    flops = 2 * b_pad * (in_pad * HID1 + HID1 * HID2 + HID2 * out_pad)
    bytes_accessed = xb.size * 2 + weight_bytes + b_pad * out_pad * 4
    cost = pl.CostEstimate(
        flops=flops,
        transcendentals=b_pad * out_pad,
        bytes_accessed=bytes_accessed,
    )

    out = pl.pallas_call(
        _policy_kernel,
        out_shape=jax.ShapeDtypeStruct((b_pad, out_pad), jnp.float32),
        grid=grid,
        in_specs=[
            pl.BlockSpec((tm, in_pad), lambda i: (i, 0)),
            _resident_spec(w1.shape, single_buffer_weights),
            _resident_spec(b1.shape, single_buffer_weights),
            _resident_spec(w2.shape, single_buffer_weights),
            _resident_spec(b2.shape, single_buffer_weights),
            _resident_spec(w3.shape, single_buffer_weights),
            _resident_spec(b3.shape, single_buffer_weights),
        ],
        out_specs=pl.BlockSpec((tm, out_pad), lambda i: (i, 0)),
        compiler_params=pltpu.CompilerParams(**compiler_kwargs),
        cost_estimate=cost,
    )(xb, w1, b1, w2, b2, w3, b3)

    return out[:B, :output_dim]


def policy_forward(x, prepared_params):
    """Pallas implementation of PolicyNetwork.forward (f32 probabilities out).

    Tries single-buffered constant-index weight blocks first; if this JAX /
    Mosaic build rejects pl.Buffered(1), falls back to default buffering so
    the call always runs.
    """
    prepared, meta = prepared_params
    try:
        return _policy_forward_impl(x, prepared, meta, single_buffer_weights=True)
    except Exception:
        return _policy_forward_impl(x, prepared, meta, single_buffer_weights=False)


def _reference_f32(x, params):
    """Plain-JAX f32 reference (original module semantics)."""
    if x.ndim == 1:
        x = x[None, :]
    w1, b1, w2, b2, w3, b3 = params
    h1 = jnp.maximum(x @ w1 + b1, 0.0)
    h2 = jnp.maximum(h1 @ w2 + b2, 0.0)
    return jax.nn.softmax(h2 @ w3 + b3, axis=-1)


def _reference_bf16(x, prepared_params):
    """Plain-JAX reference matching the kernel's bf16/f32-accumulate recipe."""
    prepared, meta = prepared_params
    w1, b1, w2, b2, w3, b3 = prepared
    input_dim, in_pad, output_dim, out_pad = meta
    if x.ndim == 1:
        x = x[None, :]
    xb = x.astype(jnp.bfloat16)
    if in_pad != input_dim:
        xb = jnp.pad(xb, ((0, 0), (0, in_pad - input_dim)))
    h1 = jnp.maximum(jnp.dot(xb, w1, preferred_element_type=jnp.float32) + b1, 0.0)
    h1 = h1.astype(jnp.bfloat16)
    h2 = jnp.maximum(jnp.dot(h1, w2, preferred_element_type=jnp.float32) + b2, 0.0)
    h2 = h2.astype(jnp.bfloat16)
    logits = jnp.dot(h2, w3, preferred_element_type=jnp.float32) + b3
    return jax.nn.softmax(logits, axis=-1)[:, :output_dim]


if __name__ == "__main__":
    key = jax.random.PRNGKey(0)
    input_dim = 64
    output_dim = 16
    batch = 2

    kx, kp = jax.random.split(key)
    x = jax.random.normal(kx, (batch, input_dim), jnp.float32)
    params = init_params(kp, input_dim, output_dim)
    prepared = prepare_params(params)

    y = policy_forward(x, prepared)
    y = jax.block_until_ready(y)

    assert y.shape == (batch, output_dim)
    # rows are probability distributions (approx reciprocal -> ~1e-3 tolerance)
    assert jnp.allclose(jnp.sum(y, axis=-1), 1.0, atol=2e-3)
    # exact-recipe (bf16) reference: tight tolerance
    y_bf16 = jax.block_until_ready(_reference_bf16(x, prepared))
    assert jnp.allclose(y, y_bf16, atol=2e-3, rtol=2e-2)
    # original f32 module semantics: loose tolerance (bf16 weights)
    y_f32 = jax.block_until_ready(_reference_f32(x, params))
    assert jnp.allclose(y, y_f32, atol=5e-2)

    print("KERNEL_OK")
</pallas_src>

<mosaic_0001>
module attributes {stable_mosaic.version = 11 : i64} {
  func.func @_policy_kernel(%arg0: i32, %arg1: memref<8x128xbf16, #tpu.memory_space<vmem>>, %arg2: memref<128x1024xbf16, #tpu.memory_space<vmem>>, %arg3: memref<1x1024xf32, #tpu.memory_space<vmem>>, %arg4: memref<1024x512xbf16, #tpu.memory_space<vmem>>, %arg5: memref<1x512xf32, #tpu.memory_space<vmem>>, %arg6: memref<512x128xbf16, #tpu.memory_space<vmem>>, %arg7: memref<1x128xf32, #tpu.memory_space<vmem>>, %arg8: memref<8x128xf32, #tpu.memory_space<vmem>>) attributes {dimension_semantics = [#tpu.dimension_semantics<arbitrary>], iteration_bounds = array<i64: 1>, scalar_prefetch = 0 : i64, scratch_operands = 0 : i64, tpu.core_type = #tpu.core_type<tc>, window_params = [{transform_indices = @transform_0, window_bounds = array<i64: 8, 128>}, {pipeline_mode = #tpu.pipeline_mode<synchronous>, transform_indices = @transform_1, window_bounds = array<i64: 128, 1024>}, {pipeline_mode = #tpu.pipeline_mode<synchronous>, transform_indices = @transform_2, window_bounds = array<i64: 1, 1024>}, {pipeline_mode = #tpu.pipeline_mode<synchronous>, transform_indices = @transform_3, window_bounds = array<i64: 1024, 512>}, {pipeline_mode = #tpu.pipeline_mode<synchronous>, transform_indices = @transform_4, window_bounds = array<i64: 1, 512>}, {pipeline_mode = #tpu.pipeline_mode<synchronous>, transform_indices = @transform_5, window_bounds = array<i64: 512, 128>}, {pipeline_mode = #tpu.pipeline_mode<synchronous>, transform_indices = @transform_6, window_bounds = array<i64: 1, 128>}, {transform_indices = @transform_7, window_bounds = array<i64: 8, 128>}]} {
    %c0 = arith.constant 0 : index
    %c0_0 = arith.constant 0 : index
    %0 = vector.load %arg1[%c0, %c0_0] : memref<8x128xbf16, #tpu.memory_space<vmem>>, vector<8x128xbf16>
    %c0_1 = arith.constant 0 : index
    %c0_2 = arith.constant 0 : index
    %1 = vector.load %arg2[%c0_1, %c0_2] : memref<128x1024xbf16, #tpu.memory_space<vmem>>, vector<128x1024xbf16>
    %cst = arith.constant dense<0.000000e+00> : vector<8x1024xf32>
    %2 = tpu.matmul %0, %1, %cst {dimension_numbers = #tpu.dot_dimension_numbers<[1], [0], [0], [1], [0, 0, 1, 1], [], []>} : vector<8x128xbf16>, vector<128x1024xbf16>, vector<8x1024xf32> -> vector<8x1024xf32>
    %c0_3 = arith.constant 0 : index
    %c0_4 = arith.constant 0 : index
    %3 = vector.load %arg3[%c0_3, %c0_4] : memref<1x1024xf32, #tpu.memory_space<vmem>>, vector<1x1024xf32>
    %4 = vector.broadcast %3 : vector<1x1024xf32> to vector<8x1024xf32>
    %5 = arith.addf %2, %4 : vector<8x1024xf32>
    %cst_5 = arith.constant 0.000000e+00 : f32
    %6 = vector.broadcast %cst_5 : f32 to vector<8x1024xf32>
    %7 = arith.maximumf %5, %6 : vector<8x1024xf32>
    %8 = arith.truncf %7 : vector<8x1024xf32> to vector<8x1024xbf16>
    %c0_6 = arith.constant 0 : index
    %c0_7 = arith.constant 0 : index
    %9 = vector.load %arg4[%c0_6, %c0_7] : memref<1024x512xbf16, #tpu.memory_space<vmem>>, vector<1024x512xbf16>
    %cst_8 = arith.constant dense<0.000000e+00> : vector<8x512xf32>
    %10 = tpu.matmul %8, %9, %cst_8 {dimension_numbers = #tpu.dot_dimension_numbers<[1], [0], [0], [1], [0, 0, 1, 1], [], []>} : vector<8x1024xbf16>, vector<1024x512xbf16>, vector<8x512xf32> -> vector<8x512xf32>
    %c0_9 = arith.constant 0 : index
    %c0_10 = arith.constant 0 : index
    %11 = vector.load %arg5[%c0_9, %c0_10] : memref<1x512xf32, #tpu.memory_space<vmem>>, vector<1x512xf32>
    %12 = vector.broadcast %11 : vector<1x512xf32> to vector<8x512xf32>
    %13 = arith.addf %10, %12 : vector<8x512xf32>
    %cst_11 = arith.constant 0.000000e+00 : f32
    %14 = vector.broadcast %cst_11 : f32 to vector<8x512xf32>
    %15 = arith.maximumf %13, %14 : vector<8x512xf32>
    %16 = arith.truncf %15 : vector<8x512xf32> to vector<8x512xbf16>
    %c0_12 = arith.constant 0 : index
    %c0_13 = arith.constant 0 : index
    %17 = vector.load %arg6[%c0_12, %c0_13] : memref<512x128xbf16, #tpu.memory_space<vmem>>, vector<512x128xbf16>
    %cst_14 = arith.constant dense<0.000000e+00> : vector<8x128xf32>
    %18 = tpu.matmul %16, %17, %cst_14 {dimension_numbers = #tpu.dot_dimension_numbers<[1], [0], [0], [1], [0, 0, 1, 1], [], []>} : vector<8x512xbf16>, vector<512x128xbf16>, vector<8x128xf32> -> vector<8x128xf32>
    %c0_15 = arith.constant 0 : index
    %c0_16 = arith.constant 0 : index
    %19 = vector.load %arg7[%c0_15, %c0_16] : memref<1x128xf32, #tpu.memory_space<vmem>>, vector<1x128xf32>
    %20 = vector.broadcast %19 : vector<1x128xf32> to vector<8x128xf32>
    %21 = arith.addf %18, %20 : vector<8x128xf32>
    %cst_17 = arith.constant dense<0xFF800000> : vector<8xf32>
    %22 = vector.multi_reduction <maximumf>, %21, %cst_17 [1] : vector<8x128xf32> to vector<8xf32>
    %23 = vector.shape_cast %22 : vector<8xf32> to vector<8x1xf32>
    %24 = vector.broadcast %23 : vector<8x1xf32> to vector<8x128xf32>
    %25 = arith.subf %21, %24 : vector<8x128xf32>
    %26 = math.exp %25 : vector<8x128xf32>
    %cst_18 = arith.constant dense<0.000000e+00> : vector<8xf32>
    %27 = vector.multi_reduction <add>, %26, %cst_18 [1] : vector<8x128xf32> to vector<8xf32>
    %28 = vector.shape_cast %27 : vector<8xf32> to vector<8x1xf32>
    %29 = tpu.reciprocal %28 {approx = true} : vector<8x1xf32> -> vector<8x1xf32>
    %30 = vector.broadcast %29 : vector<8x1xf32> to vector<8x128xf32>
    %31 = arith.mulf %26, %30 : vector<8x128xf32>
    %c0_19 = arith.constant 0 : index
    %c0_20 = arith.constant 0 : index
    %32 = vector.load %arg8[%c0_19, %c0_20] : memref<8x128xf32, #tpu.memory_space<vmem>>, vector<8x128xf32>
    tpu.vector_store %arg8[%c0_19, %c0_20], %31 {strides = array<i32>} : memref<8x128xf32, #tpu.memory_space<vmem>>, vector<8x128xf32>,
    return
  }
  func.func @transform_0(%arg0: i32) -> (i32, i32) {
    %c0_i32 = arith.constant 0 : i32
    %c0_i32_0 = arith.constant 0 : i32
    return %arg0, %c0_i32 : i32, i32
  }
  func.func @transform_1(%arg0: i32) -> (i32, i32) {
    %c0_i32 = arith.constant 0 : i32
    %c0_i32_0 = arith.constant 0 : i32
    %c0_i32_1 = arith.constant 0 : i32
    return %c0_i32, %c0_i32_0 : i32, i32
  }
  func.func @transform_2(%arg0: i32) -> (i32, i32) {
    %c0_i32 = arith.constant 0 : i32
    %c0_i32_0 = arith.constant 0 : i32
    %c0_i32_1 = arith.constant 0 : i32
    return %c0_i32, %c0_i32_0 : i32, i32
  }
  func.func @transform_3(%arg0: i32) -> (i32, i32) {
    %c0_i32 = arith.constant 0 : i32
    %c0_i32_0 = arith.constant 0 : i32
    %c0_i32_1 = arith.constant 0 : i32
    return %c0_i32, %c0_i32_0 : i32, i32
  }
  func.func @transform_4(%arg0: i32) -> (i32, i32) {
    %c0_i32 = arith.constant 0 : i32
    %c0_i32_0 = arith.constant 0 : i32
    %c0_i32_1 = arith.constant 0 : i32
    return %c0_i32, %c0_i32_0 : i32, i32
  }
  func.func @transform_5(%arg0: i32) -> (i32, i32) {
    %c0_i32 = arith.constant 0 : i32
    %c0_i32_0 = arith.constant 0 : i32
    %c0_i32_1 = arith.constant 0 : i32
    return %c0_i32, %c0_i32_0 : i32, i32
  }
  func.func @transform_6(%arg0: i32) -> (i32, i32) {
    %c0_i32 = arith.constant 0 : i32
    %c0_i32_0 = arith.constant 0 : i32
    %c0_i32_1 = arith.constant 0 : i32
    return %c0_i32, %c0_i32_0 : i32, i32
  }
  func.func @transform_7(%arg0: i32) -> (i32, i32) {
    %c0_i32 = arith.constant 0 : i32
    %c0_i32_0 = arith.constant 0 : i32
    return %arg0, %c0_i32 : i32, i32
  }
}

module attributes {stable_mosaic.version = 11 : i64} {
  func.func @_policy_kernel(%arg0: i32, %arg1: memref<8x128xbf16, #tpu.memory_space<vmem>>, %arg2: memref<128x1024xbf16, #tpu.memory_space<vmem>>, %arg3: memref<1x1024xf32, #tpu.memory_space<vmem>>, %arg4: memref<1024x512xbf16, #tpu.memory_space<vmem>>, %arg5: memref<1x512xf32, #tpu.memory_space<vmem>>, %arg6: memref<512x128xbf16, #tpu.memory_space<vmem>>, %arg7: memref<1x128xf32, #tpu.memory_space<vmem>>, %arg8: memref<8x128xf32, #tpu.memory_space<vmem>>) attributes {dimension_semantics = [#tpu.dimension_semantics<arbitrary>], iteration_bounds = array<i64: 1>, scalar_prefetch = 0 : i64, scratch_operands = 0 : i64, tpu.core_type = #tpu.core_type<tc>, window_params = [{transform_indices = @transform_0, window_bounds = array<i64: 8, 128>}, {pipeline_mode = #tpu.pipeline_mode<synchronous>, transform_indices = @transform_1, window_bounds = array<i64: 128, 1024>}, {pipeline_mode = #tpu.pipeline_mode<synchronous>, transform_indices = @transform_2, window_bounds = array<i64: 1, 1024>}, {pipeline_mode = #tpu.pipeline_mode<synchronous>, transform_indices = @transform_3, window_bounds = array<i64: 1024, 512>}, {pipeline_mode = #tpu.pipeline_mode<synchronous>, transform_indices = @transform_4, window_bounds = array<i64: 1, 512>}, {pipeline_mode = #tpu.pipeline_mode<synchronous>, transform_indices = @transform_5, window_bounds = array<i64: 512, 128>}, {pipeline_mode = #tpu.pipeline_mode<synchronous>, transform_indices = @transform_6, window_bounds = array<i64: 1, 128>}, {transform_indices = @transform_7, window_bounds = array<i64: 8, 128>}]} {
    %c0 = arith.constant 0 : index
    %c0_0 = arith.constant 0 : index
    %0 = vector.load %arg1[%c0, %c0_0] : memref<8x128xbf16, #tpu.memory_space<vmem>>, vector<8x128xbf16>
    %c0_1 = arith.constant 0 : index
    %c0_2 = arith.constant 0 : index
    %1 = vector.load %arg2[%c0_1, %c0_2] : memref<128x1024xbf16, #tpu.memory_space<vmem>>, vector<128x1024xbf16>
    %cst = arith.constant dense<0.000000e+00> : vector<8x1024xf32>
    %2 = tpu.matmul %0, %1, %cst {dimension_numbers = #tpu.dot_dimension_numbers<[1], [0], [0], [1], [0, 0, 1, 1], [], []>} : vector<8x128xbf16>, vector<128x1024xbf16>, vector<8x1024xf32> -> vector<8x1024xf32>
    %c0_3 = arith.constant 0 : index
    %c0_4 = arith.constant 0 : index
    %3 = vector.load %arg3[%c0_3, %c0_4] : memref<1x1024xf32, #tpu.memory_space<vmem>>, vector<1x1024xf32>
    %4 = vector.broadcast %3 : vector<1x1024xf32> to vector<8x1024xf32>
    %5 = arith.addf %2, %4 : vector<8x1024xf32>
    %cst_5 = arith.constant 0.000000e+00 : f32
    %6 = vector.broadcast %cst_5 : f32 to vector<8x1024xf32>
    %7 = arith.maximumf %5, %6 : vector<8x1024xf32>
    %8 = arith.truncf %7 : vector<8x1024xf32> to vector<8x1024xbf16>
    %c0_6 = arith.constant 0 : index
    %c0_7 = arith.constant 0 : index
    %9 = vector.load %arg4[%c0_6, %c0_7] : memref<1024x512xbf16, #tpu.memory_space<vmem>>, vector<1024x512xbf16>
    %cst_8 = arith.constant dense<0.000000e+00> : vector<8x512xf32>
    %10 = tpu.matmul %8, %9, %cst_8 {dimension_numbers = #tpu.dot_dimension_numbers<[1], [0], [0], [1], [0, 0, 1, 1], [], []>} : vector<8x1024xbf16>, vector<1024x512xbf16>, vector<8x512xf32> -> vector<8x512xf32>
    %c0_9 = arith.constant 0 : index
    %c0_10 = arith.constant 0 : index
    %11 = vector.load %arg5[%c0_9, %c0_10] : memref<1x512xf32, #tpu.memory_space<vmem>>, vector<1x512xf32>
    %12 = vector.broadcast %11 : vector<1x512xf32> to vector<8x512xf32>
    %13 = arith.addf %10, %12 : vector<8x512xf32>
    %cst_11 = arith.constant 0.000000e+00 : f32
    %14 = vector.broadcast %cst_11 : f32 to vector<8x512xf32>
    %15 = arith.maximumf %13, %14 : vector<8x512xf32>
    %16 = arith.truncf %15 : vector<8x512xf32> to vector<8x512xbf16>
    %c0_12 = arith.constant 0 : index
    %c0_13 = arith.constant 0 : index
    %17 = vector.load %arg6[%c0_12, %c0_13] : memref<512x128xbf16, #tpu.memory_space<vmem>>, vector<512x128xbf16>
    %cst_14 = arith.constant dense<0.000000e+00> : vector<8x128xf32>
    %18 = tpu.matmul %16, %17, %cst_14 {dimension_numbers = #tpu.dot_dimension_numbers<[1], [0], [0], [1], [0, 0, 1, 1], [], []>} : vector<8x512xbf16>, vector<512x128xbf16>, vector<8x128xf32> -> vector<8x128xf32>
    %c0_15 = arith.constant 0 : index
    %c0_16 = arith.constant 0 : index
    %19 = vector.load %arg7[%c0_15, %c0_16] : memref<1x128xf32, #tpu.memory_space<vmem>>, vector<1x128xf32>
    %20 = vector.broadcast %19 : vector<1x128xf32> to vector<8x128xf32>
    %21 = arith.addf %18, %20 : vector<8x128xf32>
    %cst_17 = arith.constant dense<0xFF800000> : vector<8xf32>
    %22 = vector.multi_reduction <maximumf>, %21, %cst_17 [1] : vector<8x128xf32> to vector<8xf32>
    %23 = vector.shape_cast %22 : vector<8xf32> to vector<8x1xf32>
    %24 = vector.broadcast %23 : vector<8x1xf32> to vector<8x128xf32>
    %25 = arith.subf %21, %24 : vector<8x128xf32>
    %26 = math.exp %25 : vector<8x128xf32>
    %cst_18 = arith.constant dense<0.000000e+00> : vector<8xf32>
    %27 = vector.multi_reduction <add>, %26, %cst_18 [1] : vector<8x128xf32> to vector<8xf32>
    %28 = vector.shape_cast %27 : vector<8xf32> to vector<8x1xf32>
    %29 = tpu.reciprocal %28 {approx = true} : vector<8x1xf32> -> vector<8x1xf32>
    %30 = vector.broadcast %29 : vector<8x1xf32> to vector<8x128xf32>
    %31 = arith.mulf %26, %30 : vector<8x128xf32>
    %c0_19 = arith.constant 0 : index
    %c0_20 = arith.constant 0 : index
    %32 = vector.load %arg8[%c0_19, %c0_20] : memref<8x128xf32, #tpu.memory_space<vmem>>, vector<8x128xf32>
    tpu.vector_store %arg8[%c0_19, %c0_20], %31 {strides = array<i32>} : memref<8x128xf32, #tpu.memory_space<vmem>>, vector<8x128xf32>,
    return
  }
  func.func @transform_0(%arg0: i32) -> (i32, i32) {
    %c0_i32 = arith.constant 0 : i32
    %c0_i32_0 = arith.constant 0 : i32
    return %arg0, %c0_i32 : i32, i32
  }
  func.func @transform_1(%arg0: i32) -> (i32, i32) {
    %c0_i32 = arith.constant 0 : i32
    %c0_i32_0 = arith.constant 0 : i32
    %c0_i32_1 = arith.constant 0 : i32
    return %c0_i32, %c0_i32_0 : i32, i32
  }
  func.func @transform_2(%arg0: i32) -> (i32, i32) {
    %c0_i32 = arith.constant 0 : i32
    %c0_i32_0 = arith.constant 0 : i32
    %c0_i32_1 = arith.constant 0 : i32
    return %c0_i32, %c0_i32_0 : i32, i32
  }
  func.func @transform_3(%arg0: i32) -> (i32, i32) {
    %c0_i32 = arith.constant 0 : i32
    %c0_i32_0 = arith.constant 0 : i32
    %c0_i32_1 = arith.constant 0 : i32
    return %c0_i32, %c0_i32_0 : i32, i32
  }
  func.func @transform_4(%arg0: i32) -> (i32, i32) {
    %c0_i32 = arith.constant 0 : i32
    %c0_i32_0 = arith.constant 0 : i32
    %c0_i32_1 = arith.constant 0 : i32
    return %c0_i32, %c0_i32_0 : i32, i32
  }
  func.func @transform_5(%arg0: i32) -> (i32, i32) {
    %c0_i32 = arith.constant 0 : i32
    %c0_i32_0 = arith.constant 0 : i32
    %c0_i32_1 = arith.constant 0 : i32
    return %c0_i32, %c0_i32_0 : i32, i32
  }
  func.func @transform_6(%arg0: i32) -> (i32, i32) {
    %c0_i32 = arith.constant 0 : i32
    %c0_i32_0 = arith.constant 0 : i32
    %c0_i32_1 = arith.constant 0 : i32
    return %c0_i32, %c0_i32_0 : i32, i32
  }
  func.func @transform_7(%arg0: i32) -> (i32, i32) {
    %c0_i32 = arith.constant 0 : i32
    %c0_i32_0 = arith.constant 0 : i32
    return %arg0, %c0_i32 : i32, i32
  }
}

</mosaic_0001>

<llo_original>
// kernel: tpu_custom_call.1
$region0: #{tpu_custom_call.1}
  #allocation0 [shape = 'u32[]', space=smem, size = 0x4, offset = 0x4, fixed_abs, tag = 'smem constant byte address 0x4 - core index']
  #allocation1 [shape = 'u32[144,128]{1,0:T(1,128)}', space=vmem, size = 0x12000, scoped, tag = 'internal scratch']
  %s0 = inlined_call_operand.hbm [shape: bf16[8,128], index: 0, kind: input, shape index: {}]
  %s1 = inlined_call_operand.hbm [shape: bf16[128,1024], index: 1, kind: input, shape index: {}]
  %s2 = inlined_call_operand.hbm [shape: f32[1,1024], index: 2, kind: input, shape index: {}]
  %s3 = inlined_call_operand.hbm [shape: bf16[1024,512], index: 3, kind: input, shape index: {}]
  %s4 = inlined_call_operand.vmem [shape: f32[1,512], index: 4, kind: input, shape index: {}]
  %s5 = inlined_call_operand.hbm [shape: bf16[512,128], index: 5, kind: input, shape index: {}]
  %s6 = inlined_call_operand.vmem [shape: f32[1,128], index: 6, kind: input, shape index: {}]
  %s7 = inlined_call_operand.hbm [shape: f32[8,128], index: 7, kind: output, shape index: {}]
  %s8 = sld [smem:[#allocation0]]
  $region58: #{tpu_custom_call.1} parent=0
    _
  %s10 = ssub.s32 1, %s8
  %s11 = scalar_select 0, %s10, %s8
  $region1: #{tpu_custom_call.1} parent=0
    #allocation2 [shape = 'u8[2048]{0}', space=vmem, size = 0x800, scoped, tag = 'input window, operand 0, single buffered']
    #allocation3 [shape = 's32[1]{0}', space=sflag, size = 0x4, scoped, tag = 'scoped memory for tpu_custom_call.1']
    #allocation4 [shape = 's32[1]{0}', space=sflag, size = 0x4, scoped, tag = 'scoped memory for tpu_custom_call.1']
    #allocation5 [shape = 'u8[262144]{0}', space=vmem, size = 0x40000, scoped, tag = 'input window, operand 1, single buffered']
    #allocation6 [shape = 's32[1]{0}', space=sflag, size = 0x4, scoped, tag = 'scoped memory for tpu_custom_call.1']
    #allocation7 [shape = 'u8[4096]{0}', space=vmem, size = 0x1000, scoped, tag = 'input window, operand 2, single buffered']
    #allocation8 [shape = 'u8[1048576]{0}', space=vmem, size = 0x100000, scoped, tag = 'input window, operand 3, single buffered']
    #allocation9 [shape = 's32[1]{0}', space=sflag, size = 0x4, scoped, tag = 'scoped memory for tpu_custom_call.1']
    #allocation10 [shape = 'u8[131072]{0}', space=vmem, size = 0x20000, scoped, tag = 'input window, operand 5, single buffered']
    #allocation11 [shape = 'u8[4096]{0}', space=vmem, size = 0x1000, scoped, tag = 'output window, operand 0, single buffered']
    %12 = vsyncpa [#allocation3], 0
    %13 = vsyncpa [#allocation6], 0
    %14 = vsyncpa [#allocation9], 0
    %15 = vsyncpa [#allocation4], 0
    // Predicated region
    $region2: #{tpu_custom_call.1} parent=1 // pred_check
      _
    $region3: #{tpu_custom_call.1} parent=1 // pred_check_branch
      %17 = sbr.rel (0) target = $region5
    $region4: #{tpu_custom_call.1} parent=1 // pred_region
      %s19 = ssub.s32 64, 64
      %20 = vsyncadd [#allocation3], %s19
      %s22 = sshll.u32 [#allocation2], 4
      %s23 = int_to_ptr.vmem [resolvable:$true] %s22
      %25 = dma.hbm_to_vmem [thread:$0]  %s0, 64, %s23, [#allocation3]
    $region5: #{tpu_custom_call.1} parent=1 // pred_fallthru
      _
    // Predicated region
    $region6: #{tpu_custom_call.1} parent=1 // pred_check
      _
    $region7: #{tpu_custom_call.1} parent=1 // pred_check_branch
      %27 = sbr.rel (0) target = $region9
    $region8: #{tpu_custom_call.1} parent=1 // pred_region
      %s29 = ssub.s32 8192, 8192
      %30 = vsyncadd [#allocation6], %s29
      %s31 = sshll.u32 [#allocation5], 4
      %s32 = int_to_ptr.vmem [resolvable:$true] %s31
      %37 = dma.hbm_to_vmem [thread:$0]  %s1, 8192, %s32, [#allocation6], 512, 512, 32
    $region9: #{tpu_custom_call.1} parent=1 // pred_fallthru
      _
    // Predicated region
    $region10: #{tpu_custom_call.1} parent=1 // pred_check
      _
    $region11: #{tpu_custom_call.1} parent=1 // pred_check_branch
      %39 = sbr.rel (0) target = $region13
    $region12: #{tpu_custom_call.1} parent=1 // pred_region
      %s41 = ssub.s32 128, 128
      %42 = vsyncadd [#allocation6], %s41
      %s44 = sshll.u32 [#allocation7], 4
      %s45 = int_to_ptr.vmem [resolvable:$true] %s44
      %47 = dma.hbm_to_vmem [thread:$0]  %s2, 128, %s45, [#allocation6]
    $region13: #{tpu_custom_call.1} parent=1 // pred_fallthru
      _
    // Predicated region
    $region14: #{tpu_custom_call.1} parent=1 // pred_check
      _
    $region15: #{tpu_custom_call.1} parent=1 // pred_check_branch
      %49 = sbr.rel (0) target = $region17
    $region16: #{tpu_custom_call.1} parent=1 // pred_region
      %s51 = ssub.s32 32768, 32768
      %52 = vsyncadd [#allocation9], %s51
      %s53 = sshll.u32 [#allocation8], 4
      %s54 = int_to_ptr.vmem [resolvable:$true] %s53
      %59 = dma.hbm_to_vmem [thread:$0]  %s3, 32768, %s54, [#allocation9], 256, 256, 16
    $region17: #{tpu_custom_call.1} parent=1 // pred_fallthru
      _
    // Predicated region
    $region18: #{tpu_custom_call.1} parent=1 // pred_check
      _
    $region19: #{tpu_custom_call.1} parent=1 // pred_check_branch
      %61 = sbr.rel (0) target = $region21
    $region20: #{tpu_custom_call.1} parent=1 // pred_region
      _
    $region21: #{tpu_custom_call.1} parent=1 // pred_fallthru
      _
    // Predicated region
    $region22: #{tpu_custom_call.1} parent=1 // pred_check
      _
    $region23: #{tpu_custom_call.1} parent=1 // pred_check_branch
      %63 = sbr.rel (0) target = $region25
    $region24: #{tpu_custom_call.1} parent=1 // pred_region
      %s65 = ssub.s32 4096, 4096
      %66 = vsyncadd [#allocation9], %s65
      %s67 = sshll.u32 [#allocation10], 4
      %s68 = int_to_ptr.vmem [resolvable:$true] %s67
      %73 = dma.hbm_to_vmem [thread:$0]  %s5, 4096, %s68, [#allocation9], 64, 64, 4
    $region25: #{tpu_custom_call.1} parent=1 // pred_fallthru
      _
    // Predicated region
    $region26: #{tpu_custom_call.1} parent=1 // pred_check
      _
    $region27: #{tpu_custom_call.1} parent=1 // pred_check_branch
      %75 = sbr.rel (0) target = $region29
    $region28: #{tpu_custom_call.1} parent=1 // pred_region
      _
    $region29: #{tpu_custom_call.1} parent=1 // pred_fallthru
      _
    // Predicated region
    $region30: #{tpu_custom_call.1} parent=1 // pred_check
      _
    $region31: #{tpu_custom_call.1} parent=1 // pred_check_branch
      %77 = sbr.rel (0) target = $region33
    $region32: #{tpu_custom_call.1} parent=1 // pred_region
      %78 = dma.done [#allocation3], 64
    $region33: #{tpu_custom_call.1} parent=1 // pred_fallthru
      _
    // Predicated region
    $region34: #{tpu_custom_call.1} parent=1 // pred_check
      _
    $region35: #{tpu_custom_call.1} parent=1 // pred_check_branch
      %80 = sbr.rel (0) target = $region37
    $region36: #{tpu_custom_call.1} parent=1 // pred_region
      %81 = dma.done [#allocation6], 8192
    $region37: #{tpu_custom_call.1} parent=1 // pred_fallthru
      _
    // Predicated region
    $region38: #{tpu_custom_call.1} parent=1 // pred_check
      _
    $region39: #{tpu_custom_call.1} parent=1 // pred_check_branch
      %83 = sbr.rel (0) target = $region41
    $region40: #{tpu_custom_call.1} parent=1 // pred_region
      %84 = dma.done [#allocation6], 128
    $region41: #{tpu_custom_call.1} parent=1 // pred_fallthru
      _
    // Predicated region
    $region42: #{tpu_custom_call.1} parent=1 // pred_check
      _
    $region43: #{tpu_custom_call.1} parent=1 // pred_check_branch
      %86 = sbr.rel (0) target = $region45
    $region44: #{tpu_custom_call.1} parent=1 // pred_region
      %87 = dma.done [#allocation9], 32768
    $region45: #{tpu_custom_call.1} parent=1 // pred_fallthru
      _
    // Predicated region
    $region46: #{tpu_custom_call.1} parent=1 // pred_check
      _
    $region47: #{tpu_custom_call.1} parent=1 // pred_check_branch
      %89 = sbr.rel (0) target = $region49
    $region48: #{tpu_custom_call.1} parent=1 // pred_region
      %90 = dma.done [#allocation9], 4096
    $region49: #{tpu_custom_call.1} parent=1 // pred_fallthru
      _
    %v92 = vld [vmem:[#allocation2] sm:$0xf]
    %v93 = vld [vmem:[#allocation5] sm:$0xff]
    %v94 = vld [vmem:[#allocation5 + $0x8] sm:$0xff]
    %v95 = vld [vmem:[#allocation5 + $0x10] sm:$0xff]
    %v96 = vld [vmem:[#allocation5 + $0x18] sm:$0xff]
    %v97 = vld [vmem:[#allocation5 + $0x20] sm:$0xff]
    %v98 = vld [vmem:[#allocation5 + $0x28] sm:$0xff]
    %v99 = vld [vmem:[#allocation5 + $0x30] sm:$0xff]
    %v100 = vld [vmem:[#allocation5 + $0x38] sm:$0xff]
    %v101 = vld [vmem:[#allocation5 + $0x40] sm:$0xff]
    %v102 = vld [vmem:[#allocation5 + $0x48] sm:$0xff]
    %v103 = vld [vmem:[#allocation5 + $0x50] sm:$0xff]
    %v104 = vld [vmem:[#allocation5 + $0x58] sm:$0xff]
    %v105 = vld [vmem:[#allocation5 + $0x60] sm:$0xff]
    %v106 = vld [vmem:[#allocation5 + $0x68] sm:$0xff]
    %v107 = vld [vmem:[#allocation5 + $0x70] sm:$0xff]
    %v108 = vld [vmem:[#allocation5 + $0x78] sm:$0xff]
    %v109 = vld [vmem:[#allocation5 + $0x80] sm:$0xff]
    %v110 = vld [vmem:[#allocation5 + $0x88] sm:$0xff]
    %v111 = vld [vmem:[#allocation5 + $0x90] sm:$0xff]
    %v112 = vld [vmem:[#allocation5 + $0x98] sm:$0xff]
    %v113 = vld [vmem:[#allocation5 + $0xa0] sm:$0xff]
    %v114 = vld [vmem:[#allocation5 + $0xa8] sm:$0xff]
    %v115 = vld [vmem:[#allocation5 + $0xb0] sm:$0xff]
    %v116 = vld [vmem:[#allocation5 + $0xb8] sm:$0xff]
    %v117 = vld [vmem:[#allocation5 + $0xc0] sm:$0xff]
    %v118 = vld [vmem:[#allocation5 + $0xc8] sm:$0xff]
    %v119 = vld [vmem:[#allocation5 + $0xd0] sm:$0xff]
    %v120 = vld [vmem:[#allocation5 + $0xd8] sm:$0xff]
    %v121 = vld [vmem:[#allocation5 + $0xe0] sm:$0xff]
    %v122 = vld [vmem:[#allocation5 + $0xe8] sm:$0xff]
    %v123 = vld [vmem:[#allocation5 + $0xf0] sm:$0xff]
    %v124 = vld [vmem:[#allocation5 + $0xf8] sm:$0xff]
    %v125 = vld [vmem:[#allocation5 + $0x100] sm:$0xff]
    %v126 = vld [vmem:[#allocation5 + $0x108] sm:$0xff]
    %v127 = vld [vmem:[#allocation5 + $0x110] sm:$0xff]
    %v128 = vld [vmem:[#allocation5 + $0x118] sm:$0xff]
    %v129 = vld [vmem:[#allocation5 + $0x120] sm:$0xff]
    %v130 = vld [vmem:[#allocation5 + $0x128] sm:$0xff]
    %v131 = vld [vmem:[#allocation5 + $0x130] sm:$0xff]
    %v132 = vld [vmem:[#allocation5 + $0x138] sm:$0xff]
    %v133 = vld [vmem:[#allocation5 + $0x140] sm:$0xff]
    %v134 = vld [vmem:[#allocation5 + $0x148] sm:$0xff]
    %v135 = vld [vmem:[#allocation5 + $0x150] sm:$0xff]
    %v136 = vld [vmem:[#allocation5 + $0x158] sm:$0xff]
    %v137 = vld [vmem:[#allocation5 + $0x160] sm:$0xff]
    %v138 = vld [vmem:[#allocation5 + $0x168] sm:$0xff]
    %v139 = vld [vmem:[#allocation5 + $0x170] sm:$0xff]
    %v140 = vld [vmem:[#allocation5 + $0x178] sm:$0xff]
    %v141 = vld [vmem:[#allocation5 + $0x180] sm:$0xff]
    %v142 = vld [vmem:[#allocation5 + $0x188] sm:$0xff]
    %v143 = vld [vmem:[#allocation5 + $0x190] sm:$0xff]
    %v144 = vld [vmem:[#allocation5 + $0x198] sm:$0xff]
    %v145 = vld [vmem:[#allocation5 + $0x1a0] sm:$0xff]
    %v146 = vld [vmem:[#allocation5 + $0x1a8] sm:$0xff]
    %v147 = vld [vmem:[#allocation5 + $0x1b0] sm:$0xff]
    %v148 = vld [vmem:[#allocation5 + $0x1b8] sm:$0xff]
    %v149 = vld [vmem:[#allocation5 + $0x1c0] sm:$0xff]
    %v150 = vld [vmem:[#allocation5 + $0x1c8] sm:$0xff]
    %v151 = vld [vmem:[#allocation5 + $0x1d0] sm:$0xff]
    %v152 = vld [vmem:[#allocation5 + $0x1d8] sm:$0xff]
    %v153 = vld [vmem:[#allocation5 + $0x1e0] sm:$0xff]
    %v154 = vld [vmem:[#allocation5 + $0x1e8] sm:$0xff]
    %v155 = vld [vmem:[#allocation5 + $0x1f0] sm:$0xff]
    %v156 = vld [vmem:[#allocation5 + $0x1f8] sm:$0xff]
    %v157 = vld [vmem:[#allocation7] sm:$0xff]
    %v159 = vlaneseq
    %v160 = vshrl.u32 %v159, 7
    %v161 = vsub.s32 0, %v160
    %v162 = vrot.slane %v157, %v161
    %v163 = vlaneseq
    %v164 = vshrl.u32 %v163, 7
    %v165 = vsub.s32 1, %v164
    %v166 = vrot.slane %v157, %v165
    %v167 = vlaneseq
    %v168 = vshrl.u32 %v167, 7
    %v169 = vsub.s32 2, %v168
    %v170 = vrot.slane %v157, %v169
    %v171 = vlaneseq
    %v172 = vshrl.u32 %v171, 7
    %v173 = vsub.s32 3, %v172
    %v174 = vrot.slane %v157, %v173
    %v175 = vlaneseq
    %v176 = vshrl.u32 %v175, 7
    %v177 = vsub.s32 4, %v176
    %v178 = vrot.slane %v157, %v177
    %v179 = vlaneseq
    %v180 = vshrl.u32 %v179, 7
    %v181 = vsub.s32 5, %v180
    %v182 = vrot.slane %v157, %v181
    %v183 = vlaneseq
    %v184 = vshrl.u32 %v183, 7
    %v185 = vsub.s32 6, %v184
    %v186 = vrot.slane %v157, %v185
    %v187 = vlaneseq
    %v188 = vshrl.u32 %v187, 7
    %v189 = vsub.s32 7, %v188
    %v190 = vrot.slane %v157, %v189
    %v263 = vunpack.c.l.b16 %v93
    %v264 = vunpack.c.h.b16 %v93
    %v265 = vunpack.c.l.b16 %v94
    %v266 = vunpack.c.h.b16 %v94
    %v267 = vunpack.c.l.b16 %v95
    %v268 = vunpack.c.h.b16 %v95
    %v269 = vunpack.c.l.b16 %v96
    %v270 = vunpack.c.h.b16 %v96
    %v271 = vunpack.c.l.b16 %v97
    %v272 = vunpack.c.h.b16 %v97
    %v273 = vunpack.c.l.b16 %v98
    %v274 = vunpack.c.h.b16 %v98
    %v275 = vunpack.c.l.b16 %v99
    %v276 = vunpack.c.h.b16 %v99
    %v277 = vunpack.c.l.b16 %v100
    %v278 = vunpack.c.h.b16 %v100
    %v279 = vunpack.c.l.b16 %v101
    %v280 = vunpack.c.h.b16 %v101
    %v281 = vunpack.c.l.b16 %v102
    %v282 = vunpack.c.h.b16 %v102
    %v283 = vunpack.c.l.b16 %v103
    %v284 = vunpack.c.h.b16 %v103
    %v285 = vunpack.c.l.b16 %v104
    %v286 = vunpack.c.h.b16 %v104
    %v287 = vunpack.c.l.b16 %v105
    %v288 = vunpack.c.h.b16 %v105
    %v289 = vunpack.c.l.b16 %v106
    %v290 = vunpack.c.h.b16 %v106
    %v291 = vunpack.c.l.b16 %v107
    %v292 = vunpack.c.h.b16 %v107
    %v293 = vunpack.c.l.b16 %v108
    %v294 = vunpack.c.h.b16 %v108
    %v295 = vunpack.c.l.b16 %v109
    %v296 = vunpack.c.h.b16 %v109
    %v297 = vunpack.c.l.b16 %v110
    %v298 = vunpack.c.h.b16 %v110
    %v299 = vunpack.c.l.b16 %v111
    %v300 = vunpack.c.h.b16 %v111
    %v301 = vunpack.c.l.b16 %v112
    %v302 = vunpack.c.h.b16 %v112
    %v303 = vunpack.c.l.b16 %v113
    %v304 = vunpack.c.h.b16 %v113
    %v305 = vunpack.c.l.b16 %v114
    %v306 = vunpack.c.h.b16 %v114
    %v307 = vunpack.c.l.b16 %v115
    %v308 = vunpack.c.h.b16 %v115
    %v309 = vunpack.c.l.b16 %v116
    %v310 = vunpack.c.h.b16 %v116
    %v311 = vunpack.c.l.b16 %v117
    %v312 = vunpack.c.h.b16 %v117
    %v313 = vunpack.c.l.b16 %v118
    %v314 = vunpack.c.h.b16 %v118
    %v315 = vunpack.c.l.b16 %v119
    %v316 = vunpack.c.h.b16 %v119
    %v317 = vunpack.c.l.b16 %v120
    %v318 = vunpack.c.h.b16 %v120
    %v319 = vunpack.c.l.b16 %v121
    %v320 = vunpack.c.h.b16 %v121
    %v321 = vunpack.c.l.b16 %v122
    %v322 = vunpack.c.h.b16 %v122
    %v323 = vunpack.c.l.b16 %v123
    %v324 = vunpack.c.h.b16 %v123
    %v325 = vunpack.c.l.b16 %v124
    %v326 = vunpack.c.h.b16 %v124
    %v327 = vunpack.c.l.b16 %v125
    %v328 = vunpack.c.h.b16 %v125
    %v329 = vunpack.c.l.b16 %v126
    %v330 = vunpack.c.h.b16 %v126
    %v331 = vunpack.c.l.b16 %v127
    %v332 = vunpack.c.h.b16 %v127
    %v333 = vunpack.c.l.b16 %v128
    %v334 = vunpack.c.h.b16 %v128
    %v335 = vunpack.c.l.b16 %v129
    %v336 = vunpack.c.h.b16 %v129
    %v337 = vunpack.c.l.b16 %v130
    %v338 = vunpack.c.h.b16 %v130
    %v339 = vunpack.c.l.b16 %v131
    %v340 = vunpack.c.h.b16 %v131
    %v341 = vunpack.c.l.b16 %v132
    %v342 = vunpack.c.h.b16 %v132
    %v343 = vunpack.c.l.b16 %v133
    %v344 = vunpack.c.h.b16 %v133
    %v345 = vunpack.c.l.b16 %v134
    %v346 = vunpack.c.h.b16 %v134
    %v347 = vunpack.c.l.b16 %v135
    %v348 = vunpack.c.h.b16 %v135
    %v349 = vunpack.c.l.b16 %v136
    %v350 = vunpack.c.h.b16 %v136
    %v351 = vunpack.c.l.b16 %v137
    %v352 = vunpack.c.h.b16 %v137
    %v353 = vunpack.c.l.b16 %v138
    %v354 = vunpack.c.h.b16 %v138
    %v355 = vunpack.c.l.b16 %v139
    %v356 = vunpack.c.h.b16 %v139
    %v357 = vunpack.c.l.b16 %v140
    %v358 = vunpack.c.h.b16 %v140
    %v359 = vunpack.c.l.b16 %v141
    %v360 = vunpack.c.h.b16 %v141
    %v361 = vunpack.c.l.b16 %v142
    %v362 = vunpack.c.h.b16 %v142
    %v363 = vunpack.c.l.b16 %v143
    %v364 = vunpack.c.h.b16 %v143
    %v365 = vunpack.c.l.b16 %v144
    %v366 = vunpack.c.h.b16 %v144
    %v367 = vunpack.c.l.b16 %v145
    %v368 = vunpack.c.h.b16 %v145
    %v369 = vunpack.c.l.b16 %v146
    %v370 = vunpack.c.h.b16 %v146
    %v371 = vunpack.c.l.b16 %v147
    %v372 = vunpack.c.h.b16 %v147
    %v373 = vunpack.c.l.b16 %v148
    %v374 = vunpack.c.h.b16 %v148
    %v375 = vunpack.c.l.b16 %v149
    %v376 = vunpack.c.h.b16 %v149
    %v377 = vunpack.c.l.b16 %v150
    %v378 = vunpack.c.h.b16 %v150
    %v379 = vunpack.c.l.b16 %v151
    %v380 = vunpack.c.h.b16 %v151
    %v381 = vunpack.c.l.b16 %v152
    %v382 = vunpack.c.h.b16 %v152
    %v383 = vunpack.c.l.b16 %v153
    %v384 = vunpack.c.h.b16 %v153
    %v385 = vunpack.c.l.b16 %v154
    %v386 = vunpack.c.h.b16 %v154
    %v387 = vunpack.c.l.b16 %v155
    %v388 = vunpack.c.h.b16 %v155
    %v389 = vunpack.c.l.b16 %v156
    %v390 = vunpack.c.h.b16 %v156
    %v391 = vpack.c.b16 %v271, %v263
    %v392 = vpack.c.b16 %v272, %v264
    %v393 = vpack.c.b16 %v273, %v265
    %v394 = vpack.c.b16 %v274, %v266
    %v395 = vpack.c.b16 %v275, %v267
    %v396 = vpack.c.b16 %v276, %v268
    %v397 = vpack.c.b16 %v277, %v269
    %v398 = vpack.c.b16 %v278, %v270
    %v399 = vpack.c.b16 %v287, %v279
    %v400 = vpack.c.b16 %v288, %v280
    %v401 = vpack.c.b16 %v289, %v281
    %v402 = vpack.c.b16 %v290, %v282
    %v403 = vpack.c.b16 %v291, %v283
    %v404 = vpack.c.b16 %v292, %v284
    %v405 = vpack.c.b16 %v293, %v285
    %v406 = vpack.c.b16 %v294, %v286
    %v407 = vpack.c.b16 %v303, %v295
    %v408 = vpack.c.b16 %v304, %v296
    %v409 = vpack.c.b16 %v305, %v297
    %v410 = vpack.c.b16 %v306, %v298
    %v411 = vpack.c.b16 %v307, %v299
    %v412 = vpack.c.b16 %v308, %v300
    %v413 = vpack.c.b16 %v309, %v301
    %v414 = vpack.c.b16 %v310, %v302
    %v415 = vpack.c.b16 %v319, %v311
    %v416 = vpack.c.b16 %v320, %v312
    %v417 = vpack.c.b16 %v321, %v313
    %v418 = vpack.c.b16 %v322, %v314
    %v419 = vpack.c.b16 %v323, %v315
    %v420 = vpack.c.b16 %v324, %v316
    %v421 = vpack.c.b16 %v325, %v317
    %v422 = vpack.c.b16 %v326, %v318
    %v423 = vpack.c.b16 %v335, %v327
    %v424 = vpack.c.b16 %v336, %v328
    %v425 = vpack.c.b16 %v337, %v329
    %v426 = vpack.c.b16 %v338, %v330
    %v427 = vpack.c.b16 %v339, %v331
    %v428 = vpack.c.b16 %v340, %v332
    %v429 = vpack.c.b16 %v341, %v333
    %v430 = vpack.c.b16 %v342, %v334
    %v431 = vpack.c.b16 %v351, %v343
    %v432 = vpack.c.b16 %v352, %v344
    %v433 = vpack.c.b16 %v353, %v345
    %v434 = vpack.c.b16 %v354, %v346
    %v435 = vpack.c.b16 %v355, %v347
    %v436 = vpack.c.b16 %v356, %v348
    %v437 = vpack.c.b16 %v357, %v349
    %v438 = vpack.c.b16 %v358, %v350
    %v439 = vpack.c.b16 %v367, %v359
    %v440 = vpack.c.b16 %v368, %v360
    %v441 = vpack.c.b16 %v369, %v361
    %v442 = vpack.c.b16 %v370, %v362
    %v443 = vpack.c.b16 %v371, %v363
    %v444 = vpack.c.b16 %v372, %v364
    %v445 = vpack.c.b16 %v373, %v365
    %v446 = vpack.c.b16 %v374, %v366
    %v447 = vpack.c.b16 %v383, %v375
    %v448 = vpack.c.b16 %v384, %v376
    %v449 = vpack.c.b16 %v385, %v377
    %v450 = vpack.c.b16 %v386, %v378
    %v451 = vpack.c.b16 %v387, %v379
    %v452 = vpack.c.b16 %v388, %v380
    %v453 = vpack.c.b16 %v389, %v381
    %v454 = vpack.c.b16 %v390, %v382
    %519 = vmatprep.subr.bf16.mxu0 %v392
    %520 = vmatpush1.bf16.msra.mxu0 %v391
    %521 = vmatprep.subr.bf16.mxu0 %v400
    %522 = vmatpush1.bf16.msra.mxu0 %v399
    %523 = vmatprep.subr.bf16.mxu0 %v408
    %524 = vmatpush1.bf16.msra.mxu0 %v407
    %525 = vmatprep.subr.bf16.mxu0 %v416
    %526 = vmatpush1.bf16.msra.mxu0 %v415
    %527 = vmatprep.subr.bf16.mxu0 %v424
    %528 = vmatpush1.bf16.msra.mxu0 %v423
    %529 = vmatprep.subr.bf16.mxu0 %v432
    %530 = vmatpush1.bf16.msra.mxu0 %v431
    %531 = vmatprep.subr.bf16.mxu0 %v440
    %532 = vmatpush1.bf16.msra.mxu0 %v439
    %533 = vmatprep.subr.bf16.mxu0 %v448
    %534 = vmatpush1.bf16.msra.mxu0 %v447
    %535 = vmatprep.subr.bf16.mxu0 0
    %536 = vmatpush1.bf16.msra.mxu0 0
    %537 = vmatprep.subr.bf16.mxu0 0
    %538 = vmatpush1.bf16.msra.mxu0 0
    %539 = vmatprep.subr.bf16.mxu0 0
    %540 = vmatpush1.bf16.msra.mxu0 0
    %541 = vmatprep.subr.bf16.mxu0 0
    %542 = vmatpush1.bf16.msra.mxu0 0
    %543 = vmatprep.subr.bf16.mxu0 0
    %544 = vmatpush1.bf16.msra.mxu0 0
    %545 = vmatprep.subr.bf16.mxu0 0
    %546 = vmatpush1.bf16.msra.mxu0 0
    %547 = vmatprep.subr.bf16.mxu0 0
    %548 = vmatpush1.bf16.msra.mxu0 0
    %549 = vmatprep.subr.bf16.mxu0 0
    %550 = vmatpush1.bf16.msra.mxu0 0
    %551 = vmatprep.mubr.bf16.mxu0 0
    %552 = vmatmul.mubr.bf16.gmra.mrb[0].mxu0 %v92
    %v553 = vpop.f32.mrb[0].mxu0
    %v554 = vadd.f32 %v162, %v553
    %v555 = vpop.f32.mrb[0].mxu0
    %v556 = vadd.f32 %v166, %v555
    %v557 = vpop.f32.mrb[0].mxu0
    %v558 = vpop.f32.mrb[0].mxu0
    %559 = vdwg.mxu0
    %560 = vmatprep.subr.bf16.mxu0 %v394
    %561 = vmatpush1.bf16.msra.mxu0 %v393
    %562 = vmatprep.subr.bf16.mxu0 %v402
    %563 = vmatpush1.bf16.msra.mxu0 %v401
    %564 = vmatprep.subr.bf16.mxu0 %v410
    %565 = vmatpush1.bf16.msra.mxu0 %v409
    %566 = vmatprep.subr.bf16.mxu0 %v418
    %567 = vmatpush1.bf16.msra.mxu0 %v417
    %568 = vmatprep.subr.bf16.mxu0 %v426
    %569 = vmatpush1.bf16.msra.mxu0 %v425
    %570 = vmatprep.subr.bf16.mxu0 %v434
    %571 = vmatpush1.bf16.msra.mxu0 %v433
    %572 = vmatprep.subr.bf16.mxu0 %v442
    %573 = vmatpush1.bf16.msra.mxu0 %v441
    %574 = vmatprep.subr.bf16.mxu0 %v450
    %575 = vmatpush1.bf16.msra.mxu0 %v449
    %576 = vmatprep.subr.bf16.mxu0 0
    %577 = vmatpush1.bf16.msra.mxu0 0
    %578 = vmatprep.subr.bf16.mxu0 0
    %579 = vmatpush1.bf16.msra.mxu0 0
    %580 = vmatprep.subr.bf16.mxu0 0
    %581 = vmatpush1.bf16.msra.mxu0 0
    %582 = vmatprep.subr.bf16.mxu0 0
    %583 = vmatpush1.bf16.msra.mxu0 0
    %584 = vmatprep.subr.bf16.mxu0 0
    %585 = vmatpush1.bf16.msra.mxu0 0
    %586 = vmatprep.subr.bf16.mxu0 0
    %587 = vmatpush1.bf16.msra.mxu0 0
    %588 = vmatprep.subr.bf16.mxu0 0
    %589 = vmatpush1.bf16.msra.mxu0 0
    %590 = vmatprep.subr.bf16.mxu0 0
    %591 = vmatpush1.bf16.msra.mxu0 0
    %592 = vmatprep.mubr.bf16.mxu0 0
    %593 = vmatmul.mubr.bf16.gmra.mrb[0].mxu0 %v92
    %v594 = vpop.f32.mrb[0].mxu0
    %v595 = vadd.f32 %v170, %v594
    %v596 = vpop.f32.mrb[0].mxu0
    %v597 = vadd.f32 %v174, %v596
    %v598 = vpop.f32.mrb[0].mxu0
    %v599 = vpop.f32.mrb[0].mxu0
    %600 = vdwg.mxu0
    %601 = vmatprep.subr.bf16.mxu0 %v396
    %602 = vmatpush1.bf16.msra.mxu0 %v395
    %603 = vmatprep.subr.bf16.mxu0 %v404
    %604 = vmatpush1.bf16.msra.mxu0 %v403
    %605 = vmatprep.subr.bf16.mxu0 %v412
    %606 = vmatpush1.bf16.msra.mxu0 %v411
    %607 = vmatprep.subr.bf16.mxu0 %v420
    %608 = vmatpush1.bf16.msra.mxu0 %v419
    %609 = vmatprep.subr.bf16.mxu0 %v428
    %610 = vmatpush1.bf16.msra.mxu0 %v427
    %611 = vmatprep.subr.bf16.mxu0 %v436
    %612 = vmatpush1.bf16.msra.mxu0 %v435
    %613 = vmatprep.subr.bf16.mxu0 %v444
    %614 = vmatpush1.bf16.msra.mxu0 %v443
    %615 = vmatprep.subr.bf16.mxu0 %v452
    %616 = vmatpush1.bf16.msra.mxu0 %v451
    %617 = vmatprep.subr.bf16.mxu0 0
    %618 = vmatpush1.bf16.msra.mxu0 0
    %619 = vmatprep.subr.bf16.mxu0 0
    %620 = vmatpush1.bf16.msra.mxu0 0
    %621 = vmatprep.subr.bf16.mxu0 0
    %622 = vmatpush1.bf16.msra.mxu0 0
    %623 = vmatprep.subr.bf16.mxu0 0
    %624 = vmatpush1.bf16.msra.mxu0 0
    %625 = vmatprep.subr.bf16.mxu0 0
    %626 = vmatpush1.bf16.msra.mxu0 0
    %627 = vmatprep.subr.bf16.mxu0 0
    %628 = vmatpush1.bf16.msra.mxu0 0
    %629 = vmatprep.subr.bf16.mxu0 0
    %630 = vmatpush1.bf16.msra.mxu0 0
    %631 = vmatprep.subr.bf16.mxu0 0
    %632 = vmatpush1.bf16.msra.mxu0 0
    %633 = vmatprep.mubr.bf16.mxu0 0
    %634 = vmatmul.mubr.bf16.gmra.mrb[0].mxu0 %v92
    %v635 = vpop.f32.mrb[0].mxu0
    %v636 = vadd.f32 %v178, %v635
    %v637 = vpop.f32.mrb[0].mxu0
    %v638 = vadd.f32 %v182, %v637
    %v639 = vpop.f32.mrb[0].mxu0
    %v640 = vpop.f32.mrb[0].mxu0
    %641 = vdwg.mxu0
    %642 = vmatprep.subr.bf16.mxu0 %v398
    %643 = vmatpush1.bf16.msra.mxu0 %v397
    %644 = vmatprep.subr.bf16.mxu0 %v406
    %645 = vmatpush1.bf16.msra.mxu0 %v405
    %646 = vmatprep.subr.bf16.mxu0 %v414
    %647 = vmatpush1.bf16.msra.mxu0 %v413
    %648 = vmatprep.subr.bf16.mxu0 %v422
    %649 = vmatpush1.bf16.msra.mxu0 %v421
    %650 = vmatprep.subr.bf16.mxu0 %v430
    %651 = vmatpush1.bf16.msra.mxu0 %v429
    %652 = vmatprep.subr.bf16.mxu0 %v438
    %653 = vmatpush1.bf16.msra.mxu0 %v437
    %654 = vmatprep.subr.bf16.mxu0 %v446
    %655 = vmatpush1.bf16.msra.mxu0 %v445
    %656 = vmatprep.subr.bf16.mxu0 %v454
    %657 = vmatpush1.bf16.msra.mxu0 %v453
    %658 = vmatprep.subr.bf16.mxu0 0
    %659 = vmatpush1.bf16.msra.mxu0 0
    %660 = vmatprep.subr.bf16.mxu0 0
    %661 = vmatpush1.bf16.msra.mxu0 0
    %662 = vmatprep.subr.bf16.mxu0 0
    %663 = vmatpush1.bf16.msra.mxu0 0
    %664 = vmatprep.subr.bf16.mxu0 0
    %665 = vmatpush1.bf16.msra.mxu0 0
    %666 = vmatprep.subr.bf16.mxu0 0
    %667 = vmatpush1.bf16.msra.mxu0 0
    %668 = vmatprep.subr.bf16.mxu0 0
    %669 = vmatpush1.bf16.msra.mxu0 0
    %670 = vmatprep.subr.bf16.mxu0 0
    %671 = vmatpush1.bf16.msra.mxu0 0
    %672 = vmatprep.subr.bf16.mxu0 0
    %673 = vmatpush1.bf16.msra.mxu0 0
    %674 = vmatprep.mubr.bf16.mxu0 0
    %675 = vmatmul.mubr.bf16.gmra.mrb[0].mxu0 %v92
    %v676 = vpop.f32.mrb[0].mxu0
    %v677 = vadd.f32 %v186, %v676
    %v678 = vpop.f32.mrb[0].mxu0
    %v679 = vadd.f32 %v190, %v678
    %v680 = vpop.f32.mrb[0].mxu0
    %v681 = vpop.f32.mrb[0].mxu0
    %682 = vdwg.mxu0
    %v683 = vmax.f32 %v554, 0.0
    %v684 = vmax.f32 %v556, 0.0
    %v685 = vmax.f32 %v595, 0.0
    %v686 = vmax.f32 %v597, 0.0
    %v687 = vmax.f32 %v636, 0.0
    %v688 = vmax.f32 %v638, 0.0
    %v689 = vmax.f32 %v677, 0.0
    %v690 = vmax.f32 %v679, 0.0
    %v691 = vpack.c.bf16 %v683, %v683
    %v692 = vpack.c.bf16 %v684, %v684
    %v693 = vpack.c.bf16 %v685, %v685
    %v694 = vpack.c.bf16 %v686, %v686
    %v695 = vpack.c.bf16 %v687, %v687
    %v696 = vpack.c.bf16 %v688, %v688
    %v697 = vpack.c.bf16 %v689, %v689
    %v698 = vpack.c.bf16 %v690, %v690
    %v699 = vld [vmem:[#allocation8] sm:$0xff]
    %v700 = vld [vmem:[#allocation8 + $0x8] sm:$0xff]
    %v701 = vld [vmem:[#allocation8 + $0x10] sm:$0xff]
    %v702 = vld [vmem:[#allocation8 + $0x18] sm:$0xff]
    %v703 = vld [vmem:[#allocation8 + $0x20] sm:$0xff]
    %v704 = vld [vmem:[#allocation8 + $0x28] sm:$0xff]
    %v705 = vld [vmem:[#allocation8 + $0x30] sm:$0xff]
    %v706 = vld [vmem:[#allocation8 + $0x38] sm:$0xff]
    %v707 = vld [vmem:[#allocation8 + $0x40] sm:$0xff]
    %v708 = vld [vmem:[#allocation8 + $0x48] sm:$0xff]
    %v709 = vld [vmem:[#allocation8 + $0x50] sm:$0xff]
    %v710 = vld [vmem:[#allocation8 + $0x58] sm:$0xff]
    %v711 = vld [vmem:[#allocation8 + $0x60] sm:$0xff]
    %v712 = vld [vmem:[#allocation8 + $0x68] sm:$0xff]
    %v713 = vld [vmem:[#allocation8 + $0x70] sm:$0xff]
    %v714 = vld [vmem:[#allocation8 + $0x78] sm:$0xff]
    %v715 = vld [vmem:[#allocation8 + $0x80] sm:$0xff]
    %v716 = vld [vmem:[#allocation8 + $0x88] sm:$0xff]
    %v717 = vld [vmem:[#allocation8 + $0x90] sm:$0xff]
    %v718 = vld [vmem:[#allocation8 + $0x98] sm:$0xff]
    %v719 = vld [vmem:[#allocation8 + $0xa0] sm:$0xff]
    %v720 = vld [vmem:[#allocation8 + $0xa8] sm:$0xff]
    %v721 = vld [vmem:[#allocation8 + $0xb0] sm:$0xff]
    %v722 = vld [vmem:[#allocation8 + $0xb8] sm:$0xff]
    %v723 = vld [vmem:[#allocation8 + $0xc0] sm:$0xff]
    %v724 = vld [vmem:[#allocation8 + $0xc8] sm:$0xff]
    %v725 = vld [vmem:[#allocation8 + $0xd0] sm:$0xff]
    %v726 = vld [vmem:[#allocation8 + $0xd8] sm:$0xff]
    %v727 = vld [vmem:[#allocation8 + $0xe0] sm:$0xff]
    %v728 = vld [vmem:[#allocation8 + $0xe8] sm:$0xff]
    %v729 = vld [vmem:[#allocation8 + $0xf0] sm:$0xff]
    %v730 = vld [vmem:[#allocation8 + $0xf8] sm:$0xff]
    %v731 = vld [vmem:[#allocation8 + $0x100] sm:$0xff]
    %v732 = vld [vmem:[#allocation8 + $0x108] sm:$0xff]
    %v733 = vld [vmem:[#allocation8 + $0x110] sm:$0xff]
    %v734 = vld [vmem:[#allocation8 + $0x118] sm:$0xff]
    %v735 = vld [vmem:[#allocation8 + $0x120] sm:$0xff]
    %v736 = vld [vmem:[#allocation8 + $0x128] sm:$0xff]
    %v737 = vld [vmem:[#allocation8 + $0x130] sm:$0xff]
    %v738 = vld [vmem:[#allocation8 + $0x138] sm:$0xff]
    %v739 = vld [vmem:[#allocation8 + $0x140] sm:$0xff]
    %v740 = vld [vmem:[#allocation8 + $0x148] sm:$0xff]
    %v741 = vld [vmem:[#allocation8 + $0x150] sm:$0xff]
    %v742 = vld [vmem:[#allocation8 + $0x158] sm:$0xff]
    %v743 = vld [vmem:[#allocation8 + $0x160] sm:$0xff]
    %v744 = vld [vmem:[#allocation8 + $0x168] sm:$0xff]
    %v745 = vld [vmem:[#allocation8 + $0x170] sm:$0xff]
    %v746 = vld [vmem:[#allocation8 + $0x178] sm:$0xff]
    %v747 = vld [vmem:[#allocation8 + $0x180] sm:$0xff]
    %v748 = vld [vmem:[#allocation8 + $0x188] sm:$0xff]
    %v749 = vld [vmem:[#allocation8 + $0x190] sm:$0xff]
    %v750 = vld [vmem:[#allocation8 + $0x198] sm:$0xff]
    %v751 = vld [vmem:[#allocation8 + $0x1a0] sm:$0xff]
    %v752 = vld [vmem:[#allocation8 + $0x1a8] sm:$0xff]
    %v753 = vld [vmem:[#allocation8 + $0x1b0] sm:$0xff]
    %v754 = vld [vmem:[#allocation8 + $0x1b8] sm:$0xff]
    %v755 = vld [vmem:[#allocation8 + $0x1c0] sm:$0xff]
    %v756 = vld [vmem:[#allocation8 + $0x1c8] sm:$0xff]
    %v757 = vld [vmem:[#allocation8 + $0x1d0] sm:$0xff]
    %v758 = vld [vmem:[#allocation8 + $0x1d8] sm:$0xff]
    %v759 = vld [vmem:[#allocation8 + $0x1e0] sm:$0xff]
    %v760 = vld [vmem:[#allocation8 + $0x1e8] sm:$0xff]
    %v761 = vld [vmem:[#allocation8 + $0x1f0] sm:$0xff]
    %v762 = vld [vmem:[#allocation8 + $0x1f8] sm:$0xff]
    %v763 = vld [vmem:[#allocation8 + $0x200] sm:$0xff]
    %v764 = vld [vmem:[#allocation8 + $0x208] sm:$0xff]
    %v765 = vld [vmem:[#allocation8 + $0x210] sm:$0xff]
    %v766 = vld [vmem:[#allocation8 + $0x218] sm:$0xff]
    %v767 = vld [vmem:[#allocation8 + $0x220] sm:$0xff]
    %v768 = vld [vmem:[#allocation8 + $0x228] sm:$0xff]
    %v769 = vld [vmem:[#allocation8 + $0x230] sm:$0xff]
    %v770 = vld [vmem:[#allocation8 + $0x238] sm:$0xff]
    %v771 = vld [vmem:[#allocation8 + $0x240] sm:$0xff]
    %v772 = vld [vmem:[#allocation8 + $0x248] sm:$0xff]
    %v773 = vld [vmem:[#allocation8 + $0x250] sm:$0xff]
    %v774 = vld [vmem:[#allocation8 + $0x258] sm:$0xff]
    %v775 = vld [vmem:[#allocation8 + $0x260] sm:$0xff]
    %v776 = vld [vmem:[#allocation8 + $0x268] sm:$0xff]
    %v777 = vld [vmem:[#allocation8 + $0x270] sm:$0xff]
    %v778 = vld [vmem:[#allocation8 + $0x278] sm:$0xff]
    %v779 = vld [vmem:[#allocation8 + $0x280] sm:$0xff]
    %v780 = vld [vmem:[#allocation8 + $0x288] sm:$0xff]
    %v781 = vld [vmem:[#allocation8 + $0x290] sm:$0xff]
    %v782 = vld [vmem:[#allocation8 + $0x298] sm:$0xff]
    %v783 = vld [vmem:[#allocation8 + $0x2a0] sm:$0xff]
    %v784 = vld [vmem:[#allocation8 + $0x2a8] sm:$0xff]
    %v785 = vld [vmem:[#allocation8 + $0x2b0] sm:$0xff]
    %v786 = vld [vmem:[#allocation8 + $0x2b8] sm:$0xff]
    %v787 = vld [vmem:[#allocation8 + $0x2c0] sm:$0xff]
    %v788 = vld [vmem:[#allocation8 + $0x2c8] sm:$0xff]
    %v789 = vld [vmem:[#allocation8 + $0x2d0] sm:$0xff]
    %v790 = vld [vmem:[#allocation8 + $0x2d8] sm:$0xff]
    %v791 = vld [vmem:[#allocation8 + $0x2e0] sm:$0xff]
    %v792 = vld [vmem:[#allocation8 + $0x2e8] sm:$0xff]
    %v793 = vld [vmem:[#allocation8 + $0x2f0] sm:$0xff]
    %v794 = vld [vmem:[#allocation8 + $0x2f8] sm:$0xff]
    %v795 = vld [vmem:[#allocation8 + $0x300] sm:$0xff]
    %v796 = vld [vmem:[#allocation8 + $0x308] sm:$0xff]
    %v797 = vld [vmem:[#allocation8 + $0x310] sm:$0xff]
    %v798 = vld [vmem:[#allocation8 + $0x318] sm:$0xff]
    %v799 = vld [vmem:[#allocation8 + $0x320] sm:$0xff]
    %v800 = vld [vmem:[#allocation8 + $0x328] sm:$0xff]
    %v801 = vld [vmem:[#allocation8 + $0x330] sm:$0xff]
    %v802 = vld [vmem:[#allocation8 + $0x338] sm:$0xff]
    %v803 = vld [vmem:[#allocation8 + $0x340] sm:$0xff]
    %v804 = vld [vmem:[#allocation8 + $0x348] sm:$0xff]
    %v805 = vld [vmem:[#allocation8 + $0x350] sm:$0xff]
    %v806 = vld [vmem:[#allocation8 + $0x358] sm:$0xff]
    %v807 = vld [vmem:[#allocation8 + $0x360] sm:$0xff]
    %v808 = vld [vmem:[#allocation8 + $0x368] sm:$0xff]
    %v809 = vld [vmem:[#allocation8 + $0x370] sm:$0xff]
    %v810 = vld [vmem:[#allocation8 + $0x378] sm:$0xff]
    %v811 = vld [vmem:[#allocation8 + $0x380] sm:$0xff]
    %v812 = vld [vmem:[#allocation8 + $0x388] sm:$0xff]
    %v813 = vld [vmem:[#allocation8 + $0x390] sm:$0xff]
    %v814 = vld [vmem:[#allocation8 + $0x398] sm:$0xff]
    %v815 = vld [vmem:[#allocation8 + $0x3a0] sm:$0xff]
    %v816 = vld [vmem:[#allocation8 + $0x3a8] sm:$0xff]
    %v817 = vld [vmem:[#allocation8 + $0x3b0] sm:$0xff]
    %v818 = vld [vmem:[#allocation8 + $0x3b8] sm:$0xff]
    %v819 = vld [vmem:[#allocation8 + $0x3c0] sm:$0xff]
    %v820 = vld [vmem:[#allocation8 + $0x3c8] sm:$0xff]
    %v821 = vld [vmem:[#allocation8 + $0x3d0] sm:$0xff]
    %v822 = vld [vmem:[#allocation8 + $0x3d8] sm:$0xff]
    %v823 = vld [vmem:[#allocation8 + $0x3e0] sm:$0xff]
    %v824 = vld [vmem:[#allocation8 + $0x3e8] sm:$0xff]
    %v825 = vld [vmem:[#allocation8 + $0x3f0] sm:$0xff]
    %v826 = vld [vmem:[#allocation8 + $0x3f8] sm:$0xff]
    %v827 = vld [vmem:[#allocation8 + $0x400] sm:$0xff]
    %v828 = vld [vmem:[#allocation8 + $0x408] sm:$0xff]
    %v829 = vld [vmem:[#allocation8 + $0x410] sm:$0xff]
    %v830 = vld [vmem:[#allocation8 + $0x418] sm:$0xff]
    %v831 = vld [vmem:[#allocation8 + $0x420] sm:$0xff]
    %v832 = vld [vmem:[#allocation8 + $0x428] sm:$0xff]
    %v833 = vld [vmem:[#allocation8 + $0x430] sm:$0xff]
    %v834 = vld [vmem:[#allocation8 + $0x438] sm:$0xff]
    %v835 = vld [vmem:[#allocation8 + $0x440] sm:$0xff]
    %v836 = vld [vmem:[#allocation8 + $0x448] sm:$0xff]
    %v837 = vld [vmem:[#allocation8 + $0x450] sm:$0xff]
    %v838 = vld [vmem:[#allocation8 + $0x458] sm:$0xff]
    %v839 = vld [vmem:[#allocation8 + $0x460] sm:$0xff]
    %v840 = vld [vmem:[#allocation8 + $0x468] sm:$0xff]
    %v841 = vld [vmem:[#allocation8 + $0x470] sm:$0xff]
    %v842 = vld [vmem:[#allocation8 + $0x478] sm:$0xff]
    %v843 = vld [vmem:[#allocation8 + $0x480] sm:$0xff]
    %v844 = vld [vmem:[#allocation8 + $0x488] sm:$0xff]
    %v845 = vld [vmem:[#allocation8 + $0x490] sm:$0xff]
    %v846 = vld [vmem:[#allocation8 + $0x498] sm:$0xff]
    %v847 = vld [vmem:[#allocation8 + $0x4a0] sm:$0xff]
    %v848 = vld [vmem:[#allocation8 + $0x4a8] sm:$0xff]
    %v849 = vld [vmem:[#allocation8 + $0x4b0] sm:$0xff]
    %v850 = vld [vmem:[#allocation8 + $0x4b8] sm:$0xff]
    %v851 = vld [vmem:[#allocation8 + $0x4c0] sm:$0xff]
    %v852 = vld [vmem:[#allocation8 + $0x4c8] sm:$0xff]
    %v853 = vld [vmem:[#allocation8 + $0x4d0] sm:$0xff]
    %v854 = vld [vmem:[#allocation8 + $0x4d8] sm:$0xff]
    %v855 = vld [vmem:[#allocation8 + $0x4e0] sm:$0xff]
    %v856 = vld [vmem:[#allocation8 + $0x4e8] sm:$0xff]
    %v857 = vld [vmem:[#allocation8 + $0x4f0] sm:$0xff]
    %v858 = vld [vmem:[#allocation8 + $0x4f8] sm:$0xff]
    %v859 = vld [vmem:[#allocation8 + $0x500] sm:$0xff]
    %v860 = vld [vmem:[#allocation8 + $0x508] sm:$0xff]
    %v861 = vld [vmem:[#allocation8 + $0x510] sm:$0xff]
    %v862 = vld [vmem:[#allocation8 + $0x518] sm:$0xff]
    %v863 = vld [vmem:[#allocation8 + $0x520] sm:$0xff]
    %v864 = vld [vmem:[#allocation8 + $0x528] sm:$0xff]
    %v865 = vld [vmem:[#allocation8 + $0x530] sm:$0xff]
    %v866 = vld [vmem:[#allocation8 + $0x538] sm:$0xff]
    %v867 = vld [vmem:[#allocation8 + $0x540] sm:$0xff]
    %v868 = vld [vmem:[#allocation8 + $0x548] sm:$0xff]
    %v869 = vld [vmem:[#allocation8 + $0x550] sm:$0xff]
    %v870 = vld [vmem:[#allocation8 + $0x558] sm:$0xff]
    %v871 = vld [vmem:[#allocation8 + $0x560] sm:$0xff]
    %v872 = vld [vmem:[#allocation8 + $0x568] sm:$0xff]
    %v873 = vld [vmem:[#allocation8 + $0x570] sm:$0xff]
    %v874 = vld [vmem:[#allocation8 + $0x578] sm:$0xff]
    %v875 = vld [vmem:[#allocation8 + $0x580] sm:$0xff]
    %v876 = vld [vmem:[#allocation8 + $0x588] sm:$0xff]
    %v877 = vld [vmem:[#allocation8 + $0x590] sm:$0xff]
    %v878 = vld [vmem:[#allocation8 + $0x598] sm:$0xff]
    %v879 = vld [vmem:[#allocation8 + $0x5a0] sm:$0xff]
    %v880 = vld [vmem:[#allocation8 + $0x5a8] sm:$0xff]
    %v881 = vld [vmem:[#allocation8 + $0x5b0] sm:$0xff]
    %v882 = vld [vmem:[#allocation8 + $0x5b8] sm:$0xff]
    %v883 = vld [vmem:[#allocation8 + $0x5c0] sm:$0xff]
    %v884 = vld [vmem:[#allocation8 + $0x5c8] sm:$0xff]
    %v885 = vld [vmem:[#allocation8 + $0x5d0] sm:$0xff]
    %v886 = vld [vmem:[#allocation8 + $0x5d8] sm:$0xff]
    %v887 = vld [vmem:[#allocation8 + $0x5e0] sm:$0xff]
    %v888 = vld [vmem:[#allocation8 + $0x5e8] sm:$0xff]
    %v889 = vld [vmem:[#allocation8 + $0x5f0] sm:$0xff]
    %v890 = vld [vmem:[#allocation8 + $0x5f8] sm:$0xff]
    %v891 = vld [vmem:[#allocation8 + $0x600] sm:$0xff]
    %v892 = vld [vmem:[#allocation8 + $0x608] sm:$0xff]
    %v893 = vld [vmem:[#allocation8 + $0x610] sm:$0xff]
    %v894 = vld [vmem:[#allocation8 + $0x618] sm:$0xff]
    %v895 = vld [vmem:[#allocation8 + $0x620] sm:$0xff]
    %v896 = vld [vmem:[#allocation8 + $0x628] sm:$0xff]
    %v897 = vld [vmem:[#allocation8 + $0x630] sm:$0xff]
    %v898 = vld [vmem:[#allocation8 + $0x638] sm:$0xff]
    %v899 = vld [vmem:[#allocation8 + $0x640] sm:$0xff]
    %v900 = vld [vmem:[#allocation8 + $0x648] sm:$0xff]
    %v901 = vld [vmem:[#allocation8 + $0x650] sm:$0xff]
    %v902 = vld [vmem:[#allocation8 + $0x658] sm:$0xff]
    %v903 = vld [vmem:[#allocation8 + $0x660] sm:$0xff]
    %v904 = vld [vmem:[#allocation8 + $0x668] sm:$0xff]
    %v905 = vld [vmem:[#allocation8 + $0x670] sm:$0xff]
    %v906 = vld [vmem:[#allocation8 + $0x678] sm:$0xff]
    %v907 = vld [vmem:[#allocation8 + $0x680] sm:$0xff]
    %v908 = vld [vmem:[#allocation8 + $0x688] sm:$0xff]
    %v909 = vld [vmem:[#allocation8 + $0x690] sm:$0xff]
    %v910 = vld [vmem:[#allocation8 + $0x698] sm:$0xff]
    %v911 = vld [vmem:[#allocation8 + $0x6a0] sm:$0xff]
    %v912 = vld [vmem:[#allocation8 + $0x6a8] sm:$0xff]
    %v913 = vld [vmem:[#allocation8 + $0x6b0] sm:$0xff]
    %v914 = vld [vmem:[#allocation8 + $0x6b8] sm:$0xff]
    %v915 = vld [vmem:[#allocation8 + $0x6c0] sm:$0xff]
    %v916 = vld [vmem:[#allocation8 + $0x6c8] sm:$0xff]
    %v917 = vld [vmem:[#allocation8 + $0x6d0] sm:$0xff]
    %v918 = vld [vmem:[#allocation8 + $0x6d8] sm:$0xff]
    %v919 = vld [vmem:[#allocation8 + $0x6e0] sm:$0xff]
    %v920 = vld [vmem:[#allocation8 + $0x6e8] sm:$0xff]
    %v921 = vld [vmem:[#allocation8 + $0x6f0] sm:$0xff]
    %v922 = vld [vmem:[#allocation8 + $0x6f8] sm:$0xff]
    %v923 = vld [vmem:[#allocation8 + $0x700] sm:$0xff]
    %v924 = vld [vmem:[#allocation8 + $0x708] sm:$0xff]
    %v925 = vld [vmem:[#allocation8 + $0x710] sm:$0xff]
    %v926 = vld [vmem:[#allocation8 + $0x718] sm:$0xff]
    %v927 = vld [vmem:[#allocation8 + $0x720] sm:$0xff]
    %v928 = vld [vmem:[#allocation8 + $0x728] sm:$0xff]
    %v929 = vld [vmem:[#allocation8 + $0x730] sm:$0xff]
    %v930 = vld [vmem:[#allocation8 + $0x738] sm:$0xff]
    %v931 = vld [vmem:[#allocation8 + $0x740] sm:$0xff]
    %v932 = vld [vmem:[#allocation8 + $0x748] sm:$0xff]
    %v933 = vld [vmem:[#allocation8 + $0x750] sm:$0xff]
    %v934 = vld [vmem:[#allocation8 + $0x758] sm:$0xff]
    %v935 = vld [vmem:[#allocation8 + $0x760] sm:$0xff]
    %v936 = vld [vmem:[#allocation8 + $0x768] sm:$0xff]
    %v937 = vld [vmem:[#allocation8 + $0x770] sm:$0xff]
    %v938 = vld [vmem:[#allocation8 + $0x778] sm:$0xff]
    %v939 = vld [vmem:[#allocation8 + $0x780] sm:$0xff]
    %v940 = vld [vmem:[#allocation8 + $0x788] sm:$0xff]
    %v941 = vld [vmem:[#allocation8 + $0x790] sm:$0xff]
    %v942 = vld [vmem:[#allocation8 + $0x798] sm:$0xff]
    %v943 = vld [vmem:[#allocation8 + $0x7a0] sm:$0xff]
    %v944 = vld [vmem:[#allocation8 + $0x7a8] sm:$0xff]
    %v945 = vld [vmem:[#allocation8 + $0x7b0] sm:$0xff]
    %v946 = vld [vmem:[#allocation8 + $0x7b8] sm:$0xff]
    %v947 = vld [vmem:[#allocation8 + $0x7c0] sm:$0xff]
    %v948 = vld [vmem:[#allocation8 + $0x7c8] sm:$0xff]
    %v949 = vld [vmem:[#allocation8 + $0x7d0] sm:$0xff]
    %v950 = vld [vmem:[#allocation8 + $0x7d8] sm:$0xff]
    %v951 = vld [vmem:[#allocation8 + $0x7e0] sm:$0xff]
    %v952 = vld [vmem:[#allocation8 + $0x7e8] sm:$0xff]
    %v953 = vld [vmem:[#allocation8 + $0x7f0] sm:$0xff]
    %v954 = vld [vmem:[#allocation8 + $0x7f8] sm:$0xff]
    %v955 = vld [vmem:[%s4] sm:$0xf]
    %v957 = vlaneseq
    %v958 = vshrl.u32 %v957, 7
    %v959 = vsub.s32 0, %v958
    %v960 = vrot.slane %v955, %v959
    %v961 = vlaneseq
    %v962 = vshrl.u32 %v961, 7
    %v963 = vsub.s32 1, %v962
    %v964 = vrot.slane %v955, %v963
    %v965 = vlaneseq
    %v966 = vshrl.u32 %v965, 7
    %v967 = vsub.s32 2, %v966
    %v968 = vrot.slane %v955, %v967
    %v969 = vlaneseq
    %v970 = vshrl.u32 %v969, 7
    %v971 = vsub.s32 3, %v970
    %v972 = vrot.slane %v955, %v971
    %v1233 = vunpack.c.l.b16 %v699
    %v1234 = vunpack.c.h.b16 %v699
    %v1235 = vunpack.c.l.b16 %v700
    %v1236 = vunpack.c.h.b16 %v700
    %v1237 = vunpack.c.l.b16 %v701
    %v1238 = vunpack.c.h.b16 %v701
    %v1239 = vunpack.c.l.b16 %v702
    %v1240 = vunpack.c.h.b16 %v702
    %v1241 = vunpack.c.l.b16 %v703
    %v1242 = vunpack.c.h.b16 %v703
    %v1243 = vunpack.c.l.b16 %v704
    %v1244 = vunpack.c.h.b16 %v704
    %v1245 = vunpack.c.l.b16 %v705
    %v1246 = vunpack.c.h.b16 %v705
    %v1247 = vunpack.c.l.b16 %v706
    %v1248 = vunpack.c.h.b16 %v706
    %v1249 = vunpack.c.l.b16 %v707
    %v1250 = vunpack.c.h.b16 %v707
    %v1251 = vunpack.c.l.b16 %v708
    %v1252 = vunpack.c.h.b16 %v708
    %v1253 = vunpack.c.l.b16 %v709
    %v1254 = vunpack.c.h.b16 %v709
    %v1255 = vunpack.c.l.b16 %v710
    %v1256 = vunpack.c.h.b16 %v710
    %v1257 = vunpack.c.l.b16 %v711
    %v1258 = vunpack.c.h.b16 %v711
    %v1259 = vunpack.c.l.b16 %v712
    %v1260 = vunpack.c.h.b16 %v712
    %v1261 = vunpack.c.l.b16 %v713
    %v1262 = vunpack.c.h.b16 %v713
    %v1263 = vunpack.c.l.b16 %v714
    %v1264 = vunpack.c.h.b16 %v714
    %v1265 = vunpack.c.l.b16 %v715
    %v1266 = vunpack.c.h.b16 %v715
    %v1267 = vunpack.c.l.b16 %v716
    %v1268 = vunpack.c.h.b16 %v716
    %v1269 = vunpack.c.l.b16 %v717
    %v1270 = vunpack.c.h.b16 %v717
    %v1271 = vunpack.c.l.b16 %v718
    %v1272 = vunpack.c.h.b16 %v718
    %v1273 = vunpack.c.l.b16 %v719
    %v1274 = vunpack.c.h.b16 %v719
    %v1275 = vunpack.c.l.b16 %v720
    %v1276 = vunpack.c.h.b16 %v720
    %v1277 = vunpack.c.l.b16 %v721
    %v1278 = vunpack.c.h.b16 %v721
    %v1279 = vunpack.c.l.b16 %v722
    %v1280 = vunpack.c.h.b16 %v722
    %v1281 = vunpack.c.l.b16 %v723
    %v1282 = vunpack.c.h.b16 %v723
    %v1283 = vunpack.c.l.b16 %v724
    %v1284 = vunpack.c.h.b16 %v724
    %v1285 = vunpack.c.l.b16 %v725
    %v1286 = vunpack.c.h.b16 %v725
    %v1287 = vunpack.c.l.b16 %v726
    %v1288 = vunpack.c.h.b16 %v726
    %v1289 = vunpack.c.l.b16 %v727
    %v1290 = vunpack.c.h.b16 %v727
    %v1291 = vunpack.c.l.b16 %v728
    %v1292 = vunpack.c.h.b16 %v728
    %v1293 = vunpack.c.l.b16 %v729
    %v1294 = vunpack.c.h.b16 %v729
    %v1295 = vunpack.c.l.b16 %v730
    %v1296 = vunpack.c.h.b16 %v730
    %v1297 = vunpack.c.l.b16 %v731
    %v1298 = vunpack.c.h.b16 %v731
    %v1299 = vunpack.c.l.b16 %v732
    %v1300 = vunpack.c.h.b16 %v732
    %v1301 = vunpack.c.l.b16 %v733
    %v1302 = vunpack.c.h.b16 %v733
    %v1303 = vunpack.c.l.b16 %v734
    %v1304 = vunpack.c.h.b16 %v734
    %v1305 = vunpack.c.l.b16 %v735
    %v1306 = vunpack.c.h.b16 %v735
    %v1307 = vunpack.c.l.b16 %v736
    %v1308 = vunpack.c.h.b16 %v736
    %v1309 = vunpack.c.l.b16 %v737
    %v1310 = vunpack.c.h.b16 %v737
    %v1311 = vunpack.c.l.b16 %v738
    %v1312 = vunpack.c.h.b16 %v738
    %v1313 = vunpack.c.l.b16 %v739
    %v1314 = vunpack.c.h.b16 %v739
    %v1315 = vunpack.c.l.b16 %v740
    %v1316 = vunpack.c.h.b16 %v740
    %v1317 = vunpack.c.l.b16 %v741
    %v1318 = vunpack.c.h.b16 %v741
    %v1319 = vunpack.c.l.b16 %v742
    %v1320 = vunpack.c.h.b16 %v742
    %v1321 = vunpack.c.l.b16 %v743
    %v1322 = vunpack.c.h.b16 %v743
    %v1323 = vunpack.c.l.b16 %v744
    %v1324 = vunpack.c.h.b16 %v744
    %v1325 = vunpack.c.l.b16 %v745
    %v1326 = vunpack.c.h.b16 %v745
    %v1327 = vunpack.c.l.b16 %v746
    %v1328 = vunpack.c.h.b16 %v746
    %v1329 = vunpack.c.l.b16 %v747
    %v1330 = vunpack.c.h.b16 %v747
    %v1331 = vunpack.c.l.b16 %v748
    %v1332 = vunpack.c.h.b16 %v748
    %v1333 = vunpack.c.l.b16 %v749
    %v1334 = vunpack.c.h.b16 %v749
    %v1335 = vunpack.c.l.b16 %v750
    %v1336 = vunpack.c.h.b16 %v750
    %v1337 = vunpack.c.l.b16 %v751
    %v1338 = vunpack.c.h.b16 %v751
    %v1339 = vunpack.c.l.b16 %v752
    %v1340 = vunpack.c.h.b16 %v752
    %v1341 = vunpack.c.l.b16 %v753
    %v1342 = vunpack.c.h.b16 %v753
    %v1343 = vunpack.c.l.b16 %v754
    %v1344 = vunpack.c.h.b16 %v754
    %v1345 = vunpack.c.l.b16 %v755
    %v1346 = vunpack.c.h.b16 %v755
    %v1347 = vunpack.c.l.b16 %v756
    %v1348 = vunpack.c.h.b16 %v756
    %v1349 = vunpack.c.l.b16 %v757
    %v1350 = vunpack.c.h.b16 %v757
    %v1351 = vunpack.c.l.b16 %v758
    %v1352 = vunpack.c.h.b16 %v758
    %v1353 = vunpack.c.l.b16 %v759
    %v1354 = vunpack.c.h.b16 %v759
    %v1355 = vunpack.c.l.b16 %v760
    %v1356 = vunpack.c.h.b16 %v760
    %v1357 = vunpack.c.l.b16 %v761
    %v1358 = vunpack.c.h.b16 %v761
    %v1359 = vunpack.c.l.b16 %v762
    %v1360 = vunpack.c.h.b16 %v762
    %v1361 = vunpack.c.l.b16 %v763
    %v1362 = vunpack.c.h.b16 %v763
    %v1363 = vunpack.c.l.b16 %v764
    %v1364 = vunpack.c.h.b16 %v764
    %v1365 = vunpack.c.l.b16 %v765
    %v1366 = vunpack.c.h.b16 %v765
    %v1367 = vunpack.c.l.b16 %v766
    %v1368 = vunpack.c.h.b16 %v766
    %v1369 = vunpack.c.l.b16 %v767
    %v1370 = vunpack.c.h.b16 %v767
    %v1371 = vunpack.c.l.b16 %v768
    %v1372 = vunpack.c.h.b16 %v768
    %v1373 = vunpack.c.l.b16 %v769
    %v1374 = vunpack.c.h.b16 %v769
    %v1375 = vunpack.c.l.b16 %v770
    %v1376 = vunpack.c.h.b16 %v770
    %v1377 = vunpack.c.l.b16 %v771
    %v1378 = vunpack.c.h.b16 %v771
    %v1379 = vunpack.c.l.b16 %v772
    %v1380 = vunpack.c.h.b16 %v772
    %v1381 = vunpack.c.l.b16 %v773
    %v1382 = vunpack.c.h.b16 %v773
    %v1383 = vunpack.c.l.b16 %v774
    %v1384 = vunpack.c.h.b16 %v774
    %v1385 = vunpack.c.l.b16 %v775
    %v1386 = vunpack.c.h.b16 %v775
    %v1387 = vunpack.c.l.b16 %v776
    %v1388 = vunpack.c.h.b16 %v776
    %v1389 = vunpack.c.l.b16 %v777
    %v1390 = vunpack.c.h.b16 %v777
    %v1391 = vunpack.c.l.b16 %v778
    %v1392 = vunpack.c.h.b16 %v778
    %v1393 = vunpack.c.l.b16 %v779
    %v1394 = vunpack.c.h.b16 %v779
    %v1395 = vunpack.c.l.b16 %v780
    %v1396 = vunpack.c.h.b16 %v780
    %v1397 = vunpack.c.l.b16 %v781
    %v1398 = vunpack.c.h.b16 %v781
    %v1399 = vunpack.c.l.b16 %v782
    %v1400 = vunpack.c.h.b16 %v782
    %v1401 = vunpack.c.l.b16 %v783
    %v1402 = vunpack.c.h.b16 %v783
    %v1403 = vunpack.c.l.b16 %v784
    %v1404 = vunpack.c.h.b16 %v784
    %v1405 = vunpack.c.l.b16 %v785
    %v1406 = vunpack.c.h.b16 %v785
    %v1407 = vunpack.c.l.b16 %v786
    %v1408 = vunpack.c.h.b16 %v786
    %v1409 = vunpack.c.l.b16 %v787
    %v1410 = vunpack.c.h.b16 %v787
    %v1411 = vunpack.c.l.b16 %v788
    %v1412 = vunpack.c.h.b16 %v788
    %v1413 = vunpack.c.l.b16 %v789
    %v1414 = vunpack.c.h.b16 %v789
    %v1415 = vunpack.c.l.b16 %v790
    %v1416 = vunpack.c.h.b16 %v790
    %v1417 = vunpack.c.l.b16 %v791
    %v1418 = vunpack.c.h.b16 %v791
    %v1419 = vunpack.c.l.b16 %v792
    %v1420 = vunpack.c.h.b16 %v792
    %v1421 = vunpack.c.l.b16 %v793
    %v1422 = vunpack.c.h.b16 %v793
    %v1423 = vunpack.c.l.b16 %v794
    %v1424 = vunpack.c.h.b16 %v794
    %v1425 = vunpack.c.l.b16 %v795
    %v1426 = vunpack.c.h.b16 %v795
    %v1427 = vunpack.c.l.b16 %v796
    %v1428 = vunpack.c.h.b16 %v796
    %v1429 = vunpack.c.l.b16 %v797
    %v1430 = vunpack.c.h.b16 %v797
    %v1431 = vunpack.c.l.b16 %v798
    %v1432 = vunpack.c.h.b16 %v798
    %v1433 = vunpack.c.l.b16 %v799
    %v1434 = vunpack.c.h.b16 %v799
    %v1435 = vunpack.c.l.b16 %v800
    %v1436 = vunpack.c.h.b16 %v800
    %v1437 = vunpack.c.l.b16 %v801
    %v1438 = vunpack.c.h.b16 %v801
    %v1439 = vunpack.c.l.b16 %v802
    %v1440 = vunpack.c.h.b16 %v802
    %v1441 = vunpack.c.l.b16 %v803
    %v1442 = vunpack.c.h.b16 %v803
    %v1443 = vunpack.c.l.b16 %v804
    %v1444 = vunpack.c.h.b16 %v804
    %v1445 = vunpack.c.l.b16 %v805
    %v1446 = vunpack.c.h.b16 %v805
    %v1447 = vunpack.c.l.b16 %v806
    %v1448 = vunpack.c.h.b16 %v806
    %v1449 = vunpack.c.l.b16 %v807
    %v1450 = vunpack.c.h.b16 %v807
    %v1451 = vunpack.c.l.b16 %v808
    %v1452 = vunpack.c.h.b16 %v808
    %v1453 = vunpack.c.l.b16 %v809
    %v1454 = vunpack.c.h.b16 %v809
    %v1455 = vunpack.c.l.b16 %v810
    %v1456 = vunpack.c.h.b16 %v810
    %v1457 = vunpack.c.l.b16 %v811
    %v1458 = vunpack.c.h.b16 %v811
    %v1459 = vunpack.c.l.b16 %v812
    %v1460 = vunpack.c.h.b16 %v812
    %v1461 = vunpack.c.l.b16 %v813
    %v1462 = vunpack.c.h.b16 %v813
    %v1463 = vunpack.c.l.b16 %v814
    %v1464 = vunpack.c.h.b16 %v814
    %v1465 = vunpack.c.l.b16 %v815
    %v1466 = vunpack.c.h.b16 %v815
    %v1467 = vunpack.c.l.b16 %v816
    %v1468 = vunpack.c.h.b16 %v816
    %v1469 = vunpack.c.l.b16 %v817
    %v1470 = vunpack.c.h.b16 %v817
    %v1471 = vunpack.c.l.b16 %v818
    %v1472 = vunpack.c.h.b16 %v818
    %v1473 = vunpack.c.l.b16 %v819
    %v1474 = vunpack.c.h.b16 %v819
    %v1475 = vunpack.c.l.b16 %v820
    %v1476 = vunpack.c.h.b16 %v820
    %v1477 = vunpack.c.l.b16 %v821
    %v1478 = vunpack.c.h.b16 %v821
    %v1479 = vunpack.c.l.b16 %v822
    %v1480 = vunpack.c.h.b16 %v822
    %v1481 = vunpack.c.l.b16 %v823
    %v1482 = vunpack.c.h.b16 %v823
    %v1483 = vunpack.c.l.b16 %v824
    %v1484 = vunpack.c.h.b16 %v824
    %v1485 = vunpack.c.l.b16 %v825
    %v1486 = vunpack.c.h.b16 %v825
    %v1487 = vunpack.c.l.b16 %v826
    %v1488 = vunpack.c.h.b16 %v826
    %v1489 = vunpack.c.l.b16 %v827
    %v1490 = vunpack.c.h.b16 %v827
    %v1491 = vunpack.c.l.b16 %v828
    %v1492 = vunpack.c.h.b16 %v828
    %v1493 = vunpack.c.l.b16 %v829
    %v1494 = vunpack.c.h.b16 %v829
    %v1495 = vunpack.c.l.b16 %v830
    %v1496 = vunpack.c.h.b16 %v830
    %v1497 = vunpack.c.l.b16 %v831
    %v1498 = vunpack.c.h.b16 %v831
    %v1499 = vunpack.c.l.b16 %v832
    %v1500 = vunpack.c.h.b16 %v832
    %v1501 = vunpack.c.l.b16 %v833
    %v1502 = vunpack.c.h.b16 %v833
    %v1503 = vunpack.c.l.b16 %v834
    %v1504 = vunpack.c.h.b16 %v834
    %v1505 = vunpack.c.l.b16 %v835
    %v1506 = vunpack.c.h.b16 %v835
    %v1507 = vunpack.c.l.b16 %v836
    %v1508 = vunpack.c.h.b16 %v836
    %v1509 = vunpack.c.l.b16 %v837
    %v1510 = vunpack.c.h.b16 %v837
    %v1511 = vunpack.c.l.b16 %v838
    %v1512 = vunpack.c.h.b16 %v838
    %v1513 = vunpack.c.l.b16 %v839
    %v1514 = vunpack.c.h.b16 %v839
    %v1515 = vunpack.c.l.b16 %v840
    %v1516 = vunpack.c.h.b16 %v840
    %v1517 = vunpack.c.l.b16 %v841
    %v1518 = vunpack.c.h.b16 %v841
    %v1519 = vunpack.c.l.b16 %v842
    %v1520 = vunpack.c.h.b16 %v842
    %v1521 = vunpack.c.l.b16 %v843
    %v1522 = vunpack.c.h.b16 %v843
    %v1523 = vunpack.c.l.b16 %v844
    %v1524 = vunpack.c.h.b16 %v844
    %v1525 = vunpack.c.l.b16 %v845
    %v1526 = vunpack.c.h.b16 %v845
    %v1527 = vunpack.c.l.b16 %v846
    %v1528 = vunpack.c.h.b16 %v846
    %v1529 = vunpack.c.l.b16 %v847
    %v1530 = vunpack.c.h.b16 %v847
    %v1531 = vunpack.c.l.b16 %v848
    %v1532 = vunpack.c.h.b16 %v848
    %v1533 = vunpack.c.l.b16 %v849
    %v1534 = vunpack.c.h.b16 %v849
    %v1535 = vunpack.c.l.b16 %v850
    %v1536 = vunpack.c.h.b16 %v850
    %v1537 = vunpack.c.l.b16 %v851
    %v1538 = vunpack.c.h.b16 %v851
    %v1539 = vunpack.c.l.b16 %v852
    %v1540 = vunpack.c.h.b16 %v852
    %v1541 = vunpack.c.l.b16 %v853
    %v1542 = vunpack.c.h.b16 %v853
    %v1543 = vunpack.c.l.b16 %v854
    %v1544 = vunpack.c.h.b16 %v854
    %v1545 = vunpack.c.l.b16 %v855
    %v1546 = vunpack.c.h.b16 %v855
    %v1547 = vunpack.c.l.b16 %v856
    %v1548 = vunpack.c.h.b16 %v856
    %v1549 = vunpack.c.l.b16 %v857
    %v1550 = vunpack.c.h.b16 %v857
    %v1551 = vunpack.c.l.b16 %v858
    %v1552 = vunpack.c.h.b16 %v858
    %v1553 = vunpack.c.l.b16 %v859
    %v1554 = vunpack.c.h.b16 %v859
    %v1555 = vunpack.c.l.b16 %v860
    %v1556 = vunpack.c.h.b16 %v860
    %v1557 = vunpack.c.l.b16 %v861
    %v1558 = vunpack.c.h.b16 %v861
    %v1559 = vunpack.c.l.b16 %v862
    %v1560 = vunpack.c.h.b16 %v862
    %v1561 = vunpack.c.l.b16 %v863
    %v1562 = vunpack.c.h.b16 %v863
    %v1563 = vunpack.c.l.b16 %v864
    %v1564 = vunpack.c.h.b16 %v864
    %v1565 = vunpack.c.l.b16 %v865
    %v1566 = vunpack.c.h.b16 %v865
    %v1567 = vunpack.c.l.b16 %v866
    %v1568 = vunpack.c.h.b16 %v866
    %v1569 = vunpack.c.l.b16 %v867
    %v1570 = vunpack.c.h.b16 %v867
    %v1571 = vunpack.c.l.b16 %v868
    %v1572 = vunpack.c.h.b16 %v868
    %v1573 = vunpack.c.l.b16 %v869
    %v1574 = vunpack.c.h.b16 %v869
    %v1575 = vunpack.c.l.b16 %v870
    %v1576 = vunpack.c.h.b16 %v870
    %v1577 = vunpack.c.l.b16 %v871
    %v1578 = vunpack.c.h.b16 %v871
    %v1579 = vunpack.c.l.b16 %v872
    %v1580 = vunpack.c.h.b16 %v872
    %v1581 = vunpack.c.l.b16 %v873
    %v1582 = vunpack.c.h.b16 %v873
    %v1583 = vunpack.c.l.b16 %v874
    %v1584 = vunpack.c.h.b16 %v874
    %v1585 = vunpack.c.l.b16 %v875
    %v1586 = vunpack.c.h.b16 %v875
    %v1587 = vunpack.c.l.b16 %v876
    %v1588 = vunpack.c.h.b16 %v876
    %v1589 = vunpack.c.l.b16 %v877
    %v1590 = vunpack.c.h.b16 %v877
    %v1591 = vunpack.c.l.b16 %v878
    %v1592 = vunpack.c.h.b16 %v878
    %v1593 = vunpack.c.l.b16 %v879
    %v1594 = vunpack.c.h.b16 %v879
    %v1595 = vunpack.c.l.b16 %v880
    %v1596 = vunpack.c.h.b16 %v880
    %v1597 = vunpack.c.l.b16 %v881
    %v1598 = vunpack.c.h.b16 %v881
    %v1599 = vunpack.c.l.b16 %v882
    %v1600 = vunpack.c.h.b16 %v882
    %v1601 = vunpack.c.l.b16 %v883
    %v1602 = vunpack.c.h.b16 %v883
    %v1603 = vunpack.c.l.b16 %v884
    %v1604 = vunpack.c.h.b16 %v884
    %v1605 = vunpack.c.l.b16 %v885
    %v1606 = vunpack.c.h.b16 %v885
    %v1607 = vunpack.c.l.b16 %v886
    %v1608 = vunpack.c.h.b16 %v886
    %v1609 = vunpack.c.l.b16 %v887
    %v1610 = vunpack.c.h.b16 %v887
    %v1611 = vunpack.c.l.b16 %v888
    %v1612 = vunpack.c.h.b16 %v888
    %v1613 = vunpack.c.l.b16 %v889
    %v1614 = vunpack.c.h.b16 %v889
    %v1615 = vunpack.c.l.b16 %v890
    %v1616 = vunpack.c.h.b16 %v890
    %v1617 = vunpack.c.l.b16 %v891
    %v1618 = vunpack.c.h.b16 %v891
    %v1619 = vunpack.c.l.b16 %v892
    %v1620 = vunpack.c.h.b16 %v892
    %v1621 = vunpack.c.l.b16 %v893
    %v1622 = vunpack.c.h.b16 %v893
    %v1623 = vunpack.c.l.b16 %v894
    %v1624 = vunpack.c.h.b16 %v894
    %v1625 = vunpack.c.l.b16 %v895
    %v1626 = vunpack.c.h.b16 %v895
    %v1627 = vunpack.c.l.b16 %v896
    %v1628 = vunpack.c.h.b16 %v896
    %v1629 = vunpack.c.l.b16 %v897
    %v1630 = vunpack.c.h.b16 %v897
    %v1631 = vunpack.c.l.b16 %v898
    %v1632 = vunpack.c.h.b16 %v898
    %v1633 = vunpack.c.l.b16 %v899
    %v1634 = vunpack.c.h.b16 %v899
    %v1635 = vunpack.c.l.b16 %v900
    %v1636 = vunpack.c.h.b16 %v900
    %v1637 = vunpack.c.l.b16 %v901
    %v1638 = vunpack.c.h.b16 %v901
    %v1639 = vunpack.c.l.b16 %v902
    %v1640 = vunpack.c.h.b16 %v902
    %v1641 = vunpack.c.l.b16 %v903
    %v1642 = vunpack.c.h.b16 %v903
    %v1643 = vunpack.c.l.b16 %v904
    %v1644 = vunpack.c.h.b16 %v904
    %v1645 = vunpack.c.l.b16 %v905
    %v1646 = vunpack.c.h.b16 %v905
    %v1647 = vunpack.c.l.b16 %v906
    %v1648 = vunpack.c.h.b16 %v906
    %v1649 = vunpack.c.l.b16 %v907
    %v1650 = vunpack.c.h.b16 %v907
    %v1651 = vunpack.c.l.b16 %v908
    %v1652 = vunpack.c.h.b16 %v908
    %v1653 = vunpack.c.l.b16 %v909
    %v1654 = vunpack.c.h.b16 %v909
    %v1655 = vunpack.c.l.b16 %v910
    %v1656 = vunpack.c.h.b16 %v910
    %v1657 = vunpack.c.l.b16 %v911
    %v1658 = vunpack.c.h.b16 %v911
    %v1659 = vunpack.c.l.b16 %v912
    %v1660 = vunpack.c.h.b16 %v912
    %v1661 = vunpack.c.l.b16 %v913
    %v1662 = vunpack.c.h.b16 %v913
    %v1663 = vunpack.c.l.b16 %v914
    %v1664 = vunpack.c.h.b16 %v914
    %v1665 = vunpack.c.l.b16 %v915
    %v1666 = vunpack.c.h.b16 %v915
    %v1667 = vunpack.c.l.b16 %v916
    %v1668 = vunpack.c.h.b16 %v916
    %v1669 = vunpack.c.l.b16 %v917
    %v1670 = vunpack.c.h.b16 %v917
    %v1671 = vunpack.c.l.b16 %v918
    %v1672 = vunpack.c.h.b16 %v918
    %v1673 = vunpack.c.l.b16 %v919
    %v1674 = vunpack.c.h.b16 %v919
    %v1675 = vunpack.c.l.b16 %v920
    %v1676 = vunpack.c.h.b16 %v920
    %v1677 = vunpack.c.l.b16 %v921
    %v1678 = vunpack.c.h.b16 %v921
    %v1679 = vunpack.c.l.b16 %v922
    %v1680 = vunpack.c.h.b16 %v922
    %v1681 = vunpack.c.l.b16 %v923
    %v1682 = vunpack.c.h.b16 %v923
    %v1683 = vunpack.c.l.b16 %v924
    %v1684 = vunpack.c.h.b16 %v924
    %v1685 = vunpack.c.l.b16 %v925
    %v1686 = vunpack.c.h.b16 %v925
    %v1687 = vunpack.c.l.b16 %v926
    %v1688 = vunpack.c.h.b16 %v926
    %v1689 = vunpack.c.l.b16 %v927
    %v1690 = vunpack.c.h.b16 %v927
    %v1691 = vunpack.c.l.b16 %v928
    %v1692 = vunpack.c.h.b16 %v928
    %v1693 = vunpack.c.l.b16 %v929
    %v1694 = vunpack.c.h.b16 %v929
    %v1695 = vunpack.c.l.b16 %v930
    %v1696 = vunpack.c.h.b16 %v930
    %v1697 = vunpack.c.l.b16 %v931
    %v1698 = vunpack.c.h.b16 %v931
    %v1699 = vunpack.c.l.b16 %v932
    %v1700 = vunpack.c.h.b16 %v932
    %v1701 = vunpack.c.l.b16 %v933
    %v1702 = vunpack.c.h.b16 %v933
    %v1703 = vunpack.c.l.b16 %v934
    %v1704 = vunpack.c.h.b16 %v934
    %v1705 = vunpack.c.l.b16 %v935
    %v1706 = vunpack.c.h.b16 %v935
    %v1707 = vunpack.c.l.b16 %v936
    %v1708 = vunpack.c.h.b16 %v936
    %v1709 = vunpack.c.l.b16 %v937
    %v1710 = vunpack.c.h.b16 %v937
    %v1711 = vunpack.c.l.b16 %v938
    %v1712 = vunpack.c.h.b16 %v938
    %v1713 = vunpack.c.l.b16 %v939
    %v1714 = vunpack.c.h.b16 %v939
    %v1715 = vunpack.c.l.b16 %v940
    %v1716 = vunpack.c.h.b16 %v940
    %v1717 = vunpack.c.l.b16 %v941
    %v1718 = vunpack.c.h.b16 %v941
    %v1719 = vunpack.c.l.b16 %v942
    %v1720 = vunpack.c.h.b16 %v942
    %v1721 = vunpack.c.l.b16 %v943
    %v1722 = vunpack.c.h.b16 %v943
    %v1723 = vunpack.c.l.b16 %v944
    %v1724 = vunpack.c.h.b16 %v944
    %v1725 = vunpack.c.l.b16 %v945
    %v1726 = vunpack.c.h.b16 %v945
    %v1727 = vunpack.c.l.b16 %v946
    %v1728 = vunpack.c.h.b16 %v946
    %v1729 = vunpack.c.l.b16 %v947
    %v1730 = vunpack.c.h.b16 %v947
    %v1731 = vunpack.c.l.b16 %v948
    %v1732 = vunpack.c.h.b16 %v948
    %v1733 = vunpack.c.l.b16 %v949
    %v1734 = vunpack.c.h.b16 %v949
    %v1735 = vunpack.c.l.b16 %v950
    %v1736 = vunpack.c.h.b16 %v950
    %v1737 = vunpack.c.l.b16 %v951
    %v1738 = vunpack.c.h.b16 %v951
    %v1739 = vunpack.c.l.b16 %v952
    %v1740 = vunpack.c.h.b16 %v952
    %v1741 = vunpack.c.l.b16 %v953
    %v1742 = vunpack.c.h.b16 %v953
    %v1743 = vunpack.c.l.b16 %v954
    %v1744 = vunpack.c.h.b16 %v954
    %v1745 = vpack.c.b16 %v1237, %v1233
    %v1746 = vpack.c.b16 %v1238, %v1234
    %v1747 = vpack.c.b16 %v1239, %v1235
    %v1748 = vpack.c.b16 %v1240, %v1236
    %v1749 = vpack.c.b16 %v1245, %v1241
    %v1750 = vpack.c.b16 %v1246, %v1242
    %v1751 = vpack.c.b16 %v1247, %v1243
    %v1752 = vpack.c.b16 %v1248, %v1244
    %v1753 = vpack.c.b16 %v1253, %v1249
    %v1754 = vpack.c.b16 %v1254, %v1250
    %v1755 = vpack.c.b16 %v1255, %v1251
    %v1756 = vpack.c.b16 %v1256, %v1252
    %v1757 = vpack.c.b16 %v1261, %v1257
    %v1758 = vpack.c.b16 %v1262, %v1258
    %v1759 = vpack.c.b16 %v1263, %v1259
    %v1760 = vpack.c.b16 %v1264, %v1260
    %v1761 = vpack.c.b16 %v1269, %v1265
    %v1762 = vpack.c.b16 %v1270, %v1266
    %v1763 = vpack.c.b16 %v1271, %v1267
    %v1764 = vpack.c.b16 %v1272, %v1268
    %v1765 = vpack.c.b16 %v1277, %v1273
    %v1766 = vpack.c.b16 %v1278, %v1274
    %v1767 = vpack.c.b16 %v1279, %v1275
    %v1768 = vpack.c.b16 %v1280, %v1276
    %v1769 = vpack.c.b16 %v1285, %v1281
    %v1770 = vpack.c.b16 %v1286, %v1282
    %v1771 = vpack.c.b16 %v1287, %v1283
    %v1772 = vpack.c.b16 %v1288, %v1284
    %v1773 = vpack.c.b16 %v1293, %v1289
    %v1774 = vpack.c.b16 %v1294, %v1290
    %v1775 = vpack.c.b16 %v1295, %v1291
    %v1776 = vpack.c.b16 %v1296, %v1292
    %v1777 = vpack.c.b16 %v1301, %v1297
    %v1778 = vpack.c.b16 %v1302, %v1298
    %v1779 = vpack.c.b16 %v1303, %v1299
    %v1780 = vpack.c.b16 %v1304, %v1300
    %v1781 = vpack.c.b16 %v1309, %v1305
    %v1782 = vpack.c.b16 %v1310, %v1306
    %v1783 = vpack.c.b16 %v1311, %v1307
    %v1784 = vpack.c.b16 %v1312, %v1308
    %v1785 = vpack.c.b16 %v1317, %v1313
    %v1786 = vpack.c.b16 %v1318, %v1314
    %v1787 = vpack.c.b16 %v1319, %v1315
    %v1788 = vpack.c.b16 %v1320, %v1316
    %v1789 = vpack.c.b16 %v1325, %v1321
    %v1790 = vpack.c.b16 %v1326, %v1322
    %v1791 = vpack.c.b16 %v1327, %v1323
    %v1792 = vpack.c.b16 %v1328, %v1324
    %v1793 = vpack.c.b16 %v1333, %v1329
    %v1794 = vpack.c.b16 %v1334, %v1330
    %v1795 = vpack.c.b16 %v1335, %v1331
    %v1796 = vpack.c.b16 %v1336, %v1332
    %v1797 = vpack.c.b16 %v1341, %v1337
    %v1798 = vpack.c.b16 %v1342, %v1338
    %v1799 = vpack.c.b16 %v1343, %v1339
    %v1800 = vpack.c.b16 %v1344, %v1340
    %v1801 = vpack.c.b16 %v1349, %v1345
    %v1802 = vpack.c.b16 %v1350, %v1346
    %v1803 = vpack.c.b16 %v1351, %v1347
    %v1804 = vpack.c.b16 %v1352, %v1348
    %v1805 = vpack.c.b16 %v1357, %v1353
    %v1806 = vpack.c.b16 %v1358, %v1354
    %v1807 = vpack.c.b16 %v1359, %v1355
    %v1808 = vpack.c.b16 %v1360, %v1356
    %v1809 = vpack.c.b16 %v1365, %v1361
    %v1810 = vpack.c.b16 %v1366, %v1362
    %v1811 = vpack.c.b16 %v1367, %v1363
    %v1812 = vpack.c.b16 %v1368, %v1364
    %v1813 = vpack.c.b16 %v1373, %v1369
    %v1814 = vpack.c.b16 %v1374, %v1370
    %v1815 = vpack.c.b16 %v1375, %v1371
    %v1816 = vpack.c.b16 %v1376, %v1372
    %v1817 = vpack.c.b16 %v1381, %v1377
    %v1818 = vpack.c.b16 %v1382, %v1378
    %v1819 = vpack.c.b16 %v1383, %v1379
    %v1820 = vpack.c.b16 %v1384, %v1380
    %v1821 = vpack.c.b16 %v1389, %v1385
    %v1822 = vpack.c.b16 %v1390, %v1386
    %v1823 = vpack.c.b16 %v1391, %v1387
    %v1824 = vpack.c.b16 %v1392, %v1388
    %v1825 = vpack.c.b16 %v1397, %v1393
    %v1826 = vpack.c.b16 %v1398, %v1394
    %v1827 = vpack.c.b16 %v1399, %v1395
    %v1828 = vpack.c.b16 %v1400, %v1396
    %v1829 = vpack.c.b16 %v1405, %v1401
    %v1830 = vpack.c.b16 %v1406, %v1402
    %v1831 = vpack.c.b16 %v1407, %v1403
    %v1832 = vpack.c.b16 %v1408, %v1404
    %v1833 = vpack.c.b16 %v1413, %v1409
    %v1834 = vpack.c.b16 %v1414, %v1410
    %v1835 = vpack.c.b16 %v1415, %v1411
    %v1836 = vpack.c.b16 %v1416, %v1412
    %v1837 = vpack.c.b16 %v1421, %v1417
    %v1838 = vpack.c.b16 %v1422, %v1418
    %v1839 = vpack.c.b16 %v1423, %v1419
    %v1840 = vpack.c.b16 %v1424, %v1420
    %v1841 = vpack.c.b16 %v1429, %v1425
    %v1842 = vpack.c.b16 %v1430, %v1426
    %v1843 = vpack.c.b16 %v1431, %v1427
    %v1844 = vpack.c.b16 %v1432, %v1428
    %v1845 = vpack.c.b16 %v1437, %v1433
    %v1846 = vpack.c.b16 %v1438, %v1434
    %v1847 = vpack.c.b16 %v1439, %v1435
    %v1848 = vpack.c.b16 %v1440, %v1436
    %v1849 = vpack.c.b16 %v1445, %v1441
    %v1850 = vpack.c.b16 %v1446, %v1442
    %v1851 = vpack.c.b16 %v1447, %v1443
    %v1852 = vpack.c.b16 %v1448, %v1444
    %v1853 = vpack.c.b16 %v1453, %v1449
    %v1854 = vpack.c.b16 %v1454, %v1450
    %v1855 = vpack.c.b16 %v1455, %v1451
    %v1856 = vpack.c.b16 %v1456, %v1452
    %v1857 = vpack.c.b16 %v1461, %v1457
    %v1858 = vpack.c.b16 %v1462, %v1458
    %v1859 = vpack.c.b16 %v1463, %v1459
    %v1860 = vpack.c.b16 %v1464, %v1460
    %v1861 = vpack.c.b16 %v1469, %v1465
    %v1862 = vpack.c.b16 %v1470, %v1466
    %v1863 = vpack.c.b16 %v1471, %v1467
    %v1864 = vpack.c.b16 %v1472, %v1468
    %v1865 = vpack.c.b16 %v1477, %v1473
    %v1866 = vpack.c.b16 %v1478, %v1474
    %v1867 = vpack.c.b16 %v1479, %v1475
    %v1868 = vpack.c.b16 %v1480, %v1476
    %v1869 = vpack.c.b16 %v1485, %v1481
    %v1870 = vpack.c.b16 %v1486, %v1482
    %v1871 = vpack.c.b16 %v1487, %v1483
    %v1872 = vpack.c.b16 %v1488, %v1484
    %v1873 = vpack.c.b16 %v1493, %v1489
    %v1874 = vpack.c.b16 %v1494, %v1490
    %v1875 = vpack.c.b16 %v1495, %v1491
    %v1876 = vpack.c.b16 %v1496, %v1492
    %v1877 = vpack.c.b16 %v1501, %v1497
    %v1878 = vpack.c.b16 %v1502, %v1498
    %v1879 = vpack.c.b16 %v1503, %v1499
    %v1880 = vpack.c.b16 %v1504, %v1500
    %v1881 = vpack.c.b16 %v1509, %v1505
    %v1882 = vpack.c.b16 %v1510, %v1506
    %v1883 = vpack.c.b16 %v1511, %v1507
    %v1884 = vpack.c.b16 %v1512, %v1508
    %v1885 = vpack.c.b16 %v1517, %v1513
    %v1886 = vpack.c.b16 %v1518, %v1514
    %v1887 = vpack.c.b16 %v1519, %v1515
    %v1888 = vpack.c.b16 %v1520, %v1516
    %v1889 = vpack.c.b16 %v1525, %v1521
    %v1890 = vpack.c.b16 %v1526, %v1522
    %v1891 = vpack.c.b16 %v1527, %v1523
    %v1892 = vpack.c.b16 %v1528, %v1524
    %v1893 = vpack.c.b16 %v1533, %v1529
    %v1894 = vpack.c.b16 %v1534, %v1530
    %v1895 = vpack.c.b16 %v1535, %v1531
    %v1896 = vpack.c.b16 %v1536, %v1532
    %v1897 = vpack.c.b16 %v1541, %v1537
    %v1898 = vpack.c.b16 %v1542, %v1538
    %v1899 = vpack.c.b16 %v1543, %v1539
    %v1900 = vpack.c.b16 %v1544, %v1540
    %v1901 = vpack.c.b16 %v1549, %v1545
    %v1902 = vpack.c.b16 %v1550, %v1546
    %v1903 = vpack.c.b16 %v1551, %v1547
    %v1904 = vpack.c.b16 %v1552, %v1548
    %v1905 = vpack.c.b16 %v1557, %v1553
    %v1906 = vpack.c.b16 %v1558, %v1554
    %v1907 = vpack.c.b16 %v1559, %v1555
    %v1908 = vpack.c.b16 %v1560, %v1556
    %v1909 = vpack.c.b16 %v1565, %v1561
    %v1910 = vpack.c.b16 %v1566, %v1562
    %v1911 = vpack.c.b16 %v1567, %v1563
    %v1912 = vpack.c.b16 %v1568, %v1564
    %v1913 = vpack.c.b16 %v1573, %v1569
    %v1914 = vpack.c.b16 %v1574, %v1570
    %v1915 = vpack.c.b16 %v1575, %v1571
    %v1916 = vpack.c.b16 %v1576, %v1572
    %v1917 = vpack.c.b16 %v1581, %v1577
    %v1918 = vpack.c.b16 %v1582, %v1578
    %v1919 = vpack.c.b16 %v1583, %v1579
    %v1920 = vpack.c.b16 %v1584, %v1580
    %v1921 = vpack.c.b16 %v1589, %v1585
    %v1922 = vpack.c.b16 %v1590, %v1586
    %v1923 = vpack.c.b16 %v1591, %v1587
    %v1924 = vpack.c.b16 %v1592, %v1588
    %v1925 = vpack.c.b16 %v1597, %v1593
    %v1926 = vpack.c.b16 %v1598, %v1594
    %v1927 = vpack.c.b16 %v1599, %v1595
    %v1928 = vpack.c.b16 %v1600, %v1596
    %v1929 = vpack.c.b16 %v1605, %v1601
    %v1930 = vpack.c.b16 %v1606, %v1602
    %v1931 = vpack.c.b16 %v1607, %v1603
    %v1932 = vpack.c.b16 %v1608, %v1604
    %v1933 = vpack.c.b16 %v1613, %v1609
    %v1934 = vpack.c.b16 %v1614, %v1610
    %v1935 = vpack.c.b16 %v1615, %v1611
    %v1936 = vpack.c.b16 %v1616, %v1612
    %v1937 = vpack.c.b16 %v1621, %v1617
    %v1938 = vpack.c.b16 %v1622, %v1618
    %v1939 = vpack.c.b16 %v1623, %v1619
    %v1940 = vpack.c.b16 %v1624, %v1620
    %v1941 = vpack.c.b16 %v1629, %v1625
    %v1942 = vpack.c.b16 %v1630, %v1626
    %v1943 = vpack.c.b16 %v1631, %v1627
    %v1944 = vpack.c.b16 %v1632, %v1628
    %v1945 = vpack.c.b16 %v1637, %v1633
    %v1946 = vpack.c.b16 %v1638, %v1634
    %v1947 = vpack.c.b16 %v1639, %v1635
    %v1948 = vpack.c.b16 %v1640, %v1636
    %v1949 = vpack.c.b16 %v1645, %v1641
    %v1950 = vpack.c.b16 %v1646, %v1642
    %v1951 = vpack.c.b16 %v1647, %v1643
    %v1952 = vpack.c.b16 %v1648, %v1644
    %v1953 = vpack.c.b16 %v1653, %v1649
    %v1954 = vpack.c.b16 %v1654, %v1650
    %v1955 = vpack.c.b16 %v1655, %v1651
    %v1956 = vpack.c.b16 %v1656, %v1652
    %v1957 = vpack.c.b16 %v1661, %v1657
    %v1958 = vpack.c.b16 %v1662, %v1658
    %v1959 = vpack.c.b16 %v1663, %v1659
    %v1960 = vpack.c.b16 %v1664, %v1660
    %v1961 = vpack.c.b16 %v1669, %v1665
    %v1962 = vpack.c.b16 %v1670, %v1666
    %v1963 = vpack.c.b16 %v1671, %v1667
    %v1964 = vpack.c.b16 %v1672, %v1668
    %v1965 = vpack.c.b16 %v1677, %v1673
    %v1966 = vpack.c.b16 %v1678, %v1674
    %v1967 = vpack.c.b16 %v1679, %v1675
    %v1968 = vpack.c.b16 %v1680, %v1676
    %v1969 = vpack.c.b16 %v1685, %v1681
    %v1970 = vpack.c.b16 %v1686, %v1682
    %v1971 = vpack.c.b16 %v1687, %v1683
    %v1972 = vpack.c.b16 %v1688, %v1684
    %v1973 = vpack.c.b16 %v1693, %v1689
    %v1974 = vpack.c.b16 %v1694, %v1690
    %v1975 = vpack.c.b16 %v1695, %v1691
    %v1976 = vpack.c.b16 %v1696, %v1692
    %v1977 = vpack.c.b16 %v1701, %v1697
    %v1978 = vpack.c.b16 %v1702, %v1698
    %v1979 = vpack.c.b16 %v1703, %v1699
    %v1980 = vpack.c.b16 %v1704, %v1700
    %v1981 = vpack.c.b16 %v1709, %v1705
    %v1982 = vpack.c.b16 %v1710, %v1706
    %v1983 = vpack.c.b16 %v1711, %v1707
    %v1984 = vpack.c.b16 %v1712, %v1708
    %v1985 = vpack.c.b16 %v1717, %v1713
    %v1986 = vpack.c.b16 %v1718, %v1714
    %v1987 = vpack.c.b16 %v1719, %v1715
    %v1988 = vpack.c.b16 %v1720, %v1716
    %v1989 = vpack.c.b16 %v1725, %v1721
    %v1990 = vpack.c.b16 %v1726, %v1722
    %v1991 = vpack.c.b16 %v1727, %v1723
    %v1992 = vpack.c.b16 %v1728, %v1724
    %v1993 = vpack.c.b16 %v1733, %v1729
    %v1994 = vpack.c.b16 %v1734, %v1730
    %v1995 = vpack.c.b16 %v1735, %v1731
    %v1996 = vpack.c.b16 %v1736, %v1732
    %v1997 = vpack.c.b16 %v1741, %v1737
    %v1998 = vpack.c.b16 %v1742, %v1738
    %v1999 = vpack.c.b16 %v1743, %v1739
    %v2000 = vpack.c.b16 %v1744, %v1740
    %2257 = vmatprep.subr.bf16.mxu0 %v1746
    %2258 = vmatpush1.bf16.msra.mxu0 %v1745
    %2259 = vmatprep.subr.bf16.mxu0 %v1750
    %2260 = vmatpush1.bf16.msra.mxu0 %v1749
    %2261 = vmatprep.subr.bf16.mxu0 %v1754
    %2262 = vmatpush1.bf16.msra.mxu0 %v1753
    %2263 = vmatprep.subr.bf16.mxu0 %v1758
    %2264 = vmatpush1.bf16.msra.mxu0 %v1757
    %2265 = vmatprep.subr.bf16.mxu0 %v1762
    %2266 = vmatpush1.bf16.msra.mxu0 %v1761
    %2267 = vmatprep.subr.bf16.mxu0 %v1766
    %2268 = vmatpush1.bf16.msra.mxu0 %v1765
    %2269 = vmatprep.subr.bf16.mxu0 %v1770
    %2270 = vmatpush1.bf16.msra.mxu0 %v1769
    %2271 = vmatprep.subr.bf16.mxu0 %v1774
    %2272 = vmatpush1.bf16.msra.mxu0 %v1773
    %2273 = vmatprep.subr.bf16.mxu0 %v1778
    %2274 = vmatpush1.bf16.msra.mxu0 %v1777
    %2275 = vmatprep.subr.bf16.mxu0 %v1782
    %2276 = vmatpush1.bf16.msra.mxu0 %v1781
    %2277 = vmatprep.subr.bf16.mxu0 %v1786
    %2278 = vmatpush1.bf16.msra.mxu0 %v1785
    %2279 = vmatprep.subr.bf16.mxu0 %v1790
    %2280 = vmatpush1.bf16.msra.mxu0 %v1789
    %2281 = vmatprep.subr.bf16.mxu0 %v1794
    %2282 = vmatpush1.bf16.msra.mxu0 %v1793
    %2283 = vmatprep.subr.bf16.mxu0 %v1798
    %2284 = vmatpush1.bf16.msra.mxu0 %v1797
    %2285 = vmatprep.subr.bf16.mxu0 %v1802
    %2286 = vmatpush1.bf16.msra.mxu0 %v1801
    %2287 = vmatprep.subr.bf16.mxu0 %v1806
    %2288 = vmatpush1.bf16.msra.mxu0 %v1805
    %2289 = vmatprep.mubr.bf16.mxu0 %v692
    %2290 = vmatmul.mubr.bf16.gmra.mrb[0].mxu0 %v691
    %v2291 = vpop.f32.mrb[0].mxu0
    %v2292 = vadd.f32 %v960, %v2291
    %v2293 = vpop.f32.mrb[0].mxu0
    %v2294 = vadd.f32 %v964, %v2293
    %v2295 = vpop.f32.mrb[0].mxu0
    %v2296 = vpop.f32.mrb[0].mxu0
    %2297 = vdwg.mxu0
    %2298 = vmatprep.subr.bf16.mxu0 %v1810
    %2299 = vmatpush1.bf16.msra.mxu0 %v1809
    %2300 = vmatprep.subr.bf16.mxu0 %v1814
    %2301 = vmatpush1.bf16.msra.mxu0 %v1813
    %2302 = vmatprep.subr.bf16.mxu0 %v1818
    %2303 = vmatpush1.bf16.msra.mxu0 %v1817
    %2304 = vmatprep.subr.bf16.mxu0 %v1822
    %2305 = vmatpush1.bf16.msra.mxu0 %v1821
    %2306 = vmatprep.subr.bf16.mxu0 %v1826
    %2307 = vmatpush1.bf16.msra.mxu0 %v1825
    %2308 = vmatprep.subr.bf16.mxu0 %v1830
    %2309 = vmatpush1.bf16.msra.mxu0 %v1829
    %2310 = vmatprep.subr.bf16.mxu0 %v1834
    %2311 = vmatpush1.bf16.msra.mxu0 %v1833
    %2312 = vmatprep.subr.bf16.mxu0 %v1838
    %2313 = vmatpush1.bf16.msra.mxu0 %v1837
    %2314 = vmatprep.subr.bf16.mxu0 %v1842
    %2315 = vmatpush1.bf16.msra.mxu0 %v1841
    %2316 = vmatprep.subr.bf16.mxu0 %v1846
    %2317 = vmatpush1.bf16.msra.mxu0 %v1845
    %2318 = vmatprep.subr.bf16.mxu0 %v1850
    %2319 = vmatpush1.bf16.msra.mxu0 %v1849
    %2320 = vmatprep.subr.bf16.mxu0 %v1854
    %2321 = vmatpush1.bf16.msra.mxu0 %v1853
    %2322 = vmatprep.subr.bf16.mxu0 %v1858
    %2323 = vmatpush1.bf16.msra.mxu0 %v1857
    %2324 = vmatprep.subr.bf16.mxu0 %v1862
    %2325 = vmatpush1.bf16.msra.mxu0 %v1861
    %2326 = vmatprep.subr.bf16.mxu0 %v1866
    %2327 = vmatpush1.bf16.msra.mxu0 %v1865
    %2328 = vmatprep.subr.bf16.mxu0 %v1870
    %2329 = vmatpush1.bf16.msra.mxu0 %v1869
    %2330 = vmatprep.mubr.bf16.mxu0 %v694
    %2331 = vmatmul.mubr.bf16.gmra.mrb[0].mxu0 %v693
    %v2332 = vpop.f32.mrb[0].mxu0
    %v2333 = vadd.f32 %v2292, %v2332
    %v2334 = vpop.f32.mrb[0].mxu0
    %v2335 = vadd.f32 %v2294, %v2334
    %v2336 = vpop.f32.mrb[0].mxu0
    %v2337 = vpop.f32.mrb[0].mxu0
    %2338 = vdwg.mxu0
    %2339 = vmatprep.subr.bf16.mxu0 %v1874
    %2340 = vmatpush1.bf16.msra.mxu0 %v1873
    %2341 = vmatprep.subr.bf16.mxu0 %v1878
    %2342 = vmatpush1.bf16.msra.mxu0 %v1877
    %2343 = vmatprep.subr.bf16.mxu0 %v1882
    %2344 = vmatpush1.bf16.msra.mxu0 %v1881
    %2345 = vmatprep.subr.bf16.mxu0 %v1886
    %2346 = vmatpush1.bf16.msra.mxu0 %v1885
    %2347 = vmatprep.subr.bf16.mxu0 %v1890
    %2348 = vmatpush1.bf16.msra.mxu0 %v1889
    %2349 = vmatprep.subr.bf16.mxu0 %v1894
    %2350 = vmatpush1.bf16.msra.mxu0 %v1893
    %2351 = vmatprep.subr.bf16.mxu0 %v1898
    %2352 = vmatpush1.bf16.msra.mxu0 %v1897
    %2353 = vmatprep.subr.bf16.mxu0 %v1902
    %2354 = vmatpush1.bf16.msra.mxu0 %v1901
    %2355 = vmatprep.subr.bf16.mxu0 %v1906
    %2356 = vmatpush1.bf16.msra.mxu0 %v1905
    %2357 = vmatprep.subr.bf16.mxu0 %v1910
    %2358 = vmatpush1.bf16.msra.mxu0 %v1909
    %2359 = vmatprep.subr.bf16.mxu0 %v1914
    %2360 = vmatpush1.bf16.msra.mxu0 %v1913
    %2361 = vmatprep.subr.bf16.mxu0 %v1918
    %2362 = vmatpush1.bf16.msra.mxu0 %v1917
    %2363 = vmatprep.subr.bf16.mxu0 %v1922
    %2364 = vmatpush1.bf16.msra.mxu0 %v1921
    %2365 = vmatprep.subr.bf16.mxu0 %v1926
    %2366 = vmatpush1.bf16.msra.mxu0 %v1925
    %2367 = vmatprep.subr.bf16.mxu0 %v1930
    %2368 = vmatpush1.bf16.msra.mxu0 %v1929
    %2369 = vmatprep.subr.bf16.mxu0 %v1934
    %2370 = vmatpush1.bf16.msra.mxu0 %v1933
    %2371 = vmatprep.mubr.bf16.mxu0 %v696
    %2372 = vmatmul.mubr.bf16.gmra.mrb[0].mxu0 %v695
    %v2373 = vpop.f32.mrb[0].mxu0
    %v2374 = vadd.f32 %v2333, %v2373
    %v2375 = vpop.f32.mrb[0].mxu0
    %v2376 = vadd.f32 %v2335, %v2375
    %v2377 = vpop.f32.mrb[0].mxu0
    %v2378 = vpop.f32.mrb[0].mxu0
    %2379 = vdwg.mxu0
    %2380 = vmatprep.subr.bf16.mxu0 %v1938
    %2381 = vmatpush1.bf16.msra.mxu0 %v1937
    %2382 = vmatprep.subr.bf16.mxu0 %v1942
    %2383 = vmatpush1.bf16.msra.mxu0 %v1941
    %2384 = vmatprep.subr.bf16.mxu0 %v1946
    %2385 = vmatpush1.bf16.msra.mxu0 %v1945
    %2386 = vmatprep.subr.bf16.mxu0 %v1950
    %2387 = vmatpush1.bf16.msra.mxu0 %v1949
    %2388 = vmatprep.subr.bf16.mxu0 %v1954
    %2389 = vmatpush1.bf16.msra.mxu0 %v1953
    %2390 = vmatprep.subr.bf16.mxu0 %v1958
    %2391 = vmatpush1.bf16.msra.mxu0 %v1957
    %2392 = vmatprep.subr.bf16.mxu0 %v1962
    %2393 = vmatpush1.bf16.msra.mxu0 %v1961
    %2394 = vmatprep.subr.bf16.mxu0 %v1966
    %2395 = vmatpush1.bf16.msra.mxu0 %v1965
    %2396 = vmatprep.subr.bf16.mxu0 %v1970
    %2397 = vmatpush1.bf16.msra.mxu0 %v1969
    %2398 = vmatprep.subr.bf16.mxu0 %v1974
    %2399 = vmatpush1.bf16.msra.mxu0 %v1973
    %2400 = vmatprep.subr.bf16.mxu0 %v1978
    %2401 = vmatpush1.bf16.msra.mxu0 %v1977
    %2402 = vmatprep.subr.bf16.mxu0 %v1982
    %2403 = vmatpush1.bf16.msra.mxu0 %v1981
    %2404 = vmatprep.subr.bf16.mxu0 %v1986
    %2405 = vmatpush1.bf16.msra.mxu0 %v1985
    %2406 = vmatprep.subr.bf16.mxu0 %v1990
    %2407 = vmatpush1.bf16.msra.mxu0 %v1989
    %2408 = vmatprep.subr.bf16.mxu0 %v1994
    %2409 = vmatpush1.bf16.msra.mxu0 %v1993
    %2410 = vmatprep.subr.bf16.mxu0 %v1998
    %2411 = vmatpush1.bf16.msra.mxu0 %v1997
    %2412 = vmatprep.mubr.bf16.mxu0 %v698
    %2413 = vmatmul.mubr.bf16.gmra.mrb[0].mxu0 %v697
    %v2414 = vpop.f32.mrb[0].mxu0
    %v2415 = vadd.f32 %v2374, %v2414
    %v2416 = vpop.f32.mrb[0].mxu0
    %v2417 = vadd.f32 %v2376, %v2416
    %v2418 = vpop.f32.mrb[0].mxu0
    %v2419 = vpop.f32.mrb[0].mxu0
    %2420 = vdwg.mxu0
    %2421 = vmatprep.subr.bf16.mxu0 %v1748
    %2422 = vmatpush1.bf16.msra.mxu0 %v1747
    %2423 = vmatprep.subr.bf16.mxu0 %v1752
    %2424 = vmatpush1.bf16.msra.mxu0 %v1751
    %2425 = vmatprep.subr.bf16.mxu0 %v1756
    %2426 = vmatpush1.bf16.msra.mxu0 %v1755
    %2427 = vmatprep.subr.bf16.mxu0 %v1760
    %2428 = vmatpush1.bf16.msra.mxu0 %v1759
    %2429 = vmatprep.subr.bf16.mxu0 %v1764
    %2430 = vmatpush1.bf16.msra.mxu0 %v1763
    %2431 = vmatprep.subr.bf16.mxu0 %v1768
    %2432 = vmatpush1.bf16.msra.mxu0 %v1767
    %2433 = vmatprep.subr.bf16.mxu0 %v1772
    %2434 = vmatpush1.bf16.msra.mxu0 %v1771
    %2435 = vmatprep.subr.bf16.mxu0 %v1776
    %2436 = vmatpush1.bf16.msra.mxu0 %v1775
    %2437 = vmatprep.subr.bf16.mxu0 %v1780
    %2438 = vmatpush1.bf16.msra.mxu0 %v1779
    %2439 = vmatprep.subr.bf16.mxu0 %v1784
    %2440 = vmatpush1.bf16.msra.mxu0 %v1783
    %2441 = vmatprep.subr.bf16.mxu0 %v1788
    %2442 = vmatpush1.bf16.msra.mxu0 %v1787
    %2443 = vmatprep.subr.bf16.mxu0 %v1792
    %2444 = vmatpush1.bf16.msra.mxu0 %v1791
    %2445 = vmatprep.subr.bf16.mxu0 %v1796
    %2446 = vmatpush1.bf16.msra.mxu0 %v1795
    %2447 = vmatprep.subr.bf16.mxu0 %v1800
    %2448 = vmatpush1.bf16.msra.mxu0 %v1799
    %2449 = vmatprep.subr.bf16.mxu0 %v1804
    %2450 = vmatpush1.bf16.msra.mxu0 %v1803
    %2451 = vmatprep.subr.bf16.mxu0 %v1808
    %2452 = vmatpush1.bf16.msra.mxu0 %v1807
    %2453 = vmatprep.mubr.bf16.mxu0 %v692
    %2454 = vmatmul.mubr.bf16.gmra.mrb[0].mxu0 %v691
    %v2455 = vpop.f32.mrb[0].mxu0
    %v2456 = vadd.f32 %v968, %v2455
    %v2457 = vpop.f32.mrb[0].mxu0
    %v2458 = vadd.f32 %v972, %v2457
    %v2459 = vpop.f32.mrb[0].mxu0
    %v2460 = vpop.f32.mrb[0].mxu0
    %2461 = vdwg.mxu0
    %2462 = vmatprep.subr.bf16.mxu0 %v1812
    %2463 = vmatpush1.bf16.msra.mxu0 %v1811
    %2464 = vmatprep.subr.bf16.mxu0 %v1816
    %2465 = vmatpush1.bf16.msra.mxu0 %v1815
    %2466 = vmatprep.subr.bf16.mxu0 %v1820
    %2467 = vmatpush1.bf16.msra.mxu0 %v1819
    %2468 = vmatprep.subr.bf16.mxu0 %v1824
    %2469 = vmatpush1.bf16.msra.mxu0 %v1823
    %2470 = vmatprep.subr.bf16.mxu0 %v1828
    %2471 = vmatpush1.bf16.msra.mxu0 %v1827
    %2472 = vmatprep.subr.bf16.mxu0 %v1832
    %2473 = vmatpush1.bf16.msra.mxu0 %v1831
    %2474 = vmatprep.subr.bf16.mxu0 %v1836
    %2475 = vmatpush1.bf16.msra.mxu0 %v1835
    %2476 = vmatprep.subr.bf16.mxu0 %v1840
    %2477 = vmatpush1.bf16.msra.mxu0 %v1839
    %2478 = vmatprep.subr.bf16.mxu0 %v1844
    %2479 = vmatpush1.bf16.msra.mxu0 %v1843
    %2480 = vmatprep.subr.bf16.mxu0 %v1848
    %2481 = vmatpush1.bf16.msra.mxu0 %v1847
    %2482 = vmatprep.subr.bf16.mxu0 %v1852
    %2483 = vmatpush1.bf16.msra.mxu0 %v1851
    %2484 = vmatprep.subr.bf16.mxu0 %v1856
    %2485 = vmatpush1.bf16.msra.mxu0 %v1855
    %2486 = vmatprep.subr.bf16.mxu0 %v1860
    %2487 = vmatpush1.bf16.msra.mxu0 %v1859
    %2488 = vmatprep.subr.bf16.mxu0 %v1864
    %2489 = vmatpush1.bf16.msra.mxu0 %v1863
    %2490 = vmatprep.subr.bf16.mxu0 %v1868
    %2491 = vmatpush1.bf16.msra.mxu0 %v1867
    %2492 = vmatprep.subr.bf16.mxu0 %v1872
    %2493 = vmatpush1.bf16.msra.mxu0 %v1871
    %2494 = vmatprep.mubr.bf16.mxu0 %v694
    %2495 = vmatmul.mubr.bf16.gmra.mrb[0].mxu0 %v693
    %v2496 = vpop.f32.mrb[0].mxu0
    %v2497 = vadd.f32 %v2456, %v2496
    %v2498 = vpop.f32.mrb[0].mxu0
    %v2499 = vadd.f32 %v2458, %v2498
    %v2500 = vpop.f32.mrb[0].mxu0
    %v2501 = vpop.f32.mrb[0].mxu0
    %2502 = vdwg.mxu0
    %2503 = vmatprep.subr.bf16.mxu0 %v1876
    %2504 = vmatpush1.bf16.msra.mxu0 %v1875
    %2505 = vmatprep.subr.bf16.mxu0 %v1880
    %2506 = vmatpush1.bf16.msra.mxu0 %v1879
    %2507 = vmatprep.subr.bf16.mxu0 %v1884
    %2508 = vmatpush1.bf16.msra.mxu0 %v1883
    %2509 = vmatprep.subr.bf16.mxu0 %v1888
    %2510 = vmatpush1.bf16.msra.mxu0 %v1887
    %2511 = vmatprep.subr.bf16.mxu0 %v1892
    %2512 = vmatpush1.bf16.msra.mxu0 %v1891
    %2513 = vmatprep.subr.bf16.mxu0 %v1896
    %2514 = vmatpush1.bf16.msra.mxu0 %v1895
    %2515 = vmatprep.subr.bf16.mxu0 %v1900
    %2516 = vmatpush1.bf16.msra.mxu0 %v1899
    %2517 = vmatprep.subr.bf16.mxu0 %v1904
    %2518 = vmatpush1.bf16.msra.mxu0 %v1903
    %2519 = vmatprep.subr.bf16.mxu0 %v1908
    %2520 = vmatpush1.bf16.msra.mxu0 %v1907
    %2521 = vmatprep.subr.bf16.mxu0 %v1912
    %2522 = vmatpush1.bf16.msra.mxu0 %v1911
    %2523 = vmatprep.subr.bf16.mxu0 %v1916
    %2524 = vmatpush1.bf16.msra.mxu0 %v1915
    %2525 = vmatprep.subr.bf16.mxu0 %v1920
    %2526 = vmatpush1.bf16.msra.mxu0 %v1919
    %2527 = vmatprep.subr.bf16.mxu0 %v1924
    %2528 = vmatpush1.bf16.msra.mxu0 %v1923
    %2529 = vmatprep.subr.bf16.mxu0 %v1928
    %2530 = vmatpush1.bf16.msra.mxu0 %v1927
    %2531 = vmatprep.subr.bf16.mxu0 %v1932
    %2532 = vmatpush1.bf16.msra.mxu0 %v1931
    %2533 = vmatprep.subr.bf16.mxu0 %v1936
    %2534 = vmatpush1.bf16.msra.mxu0 %v1935
    %2535 = vmatprep.mubr.bf16.mxu0 %v696
    %2536 = vmatmul.mubr.bf16.gmra.mrb[0].mxu0 %v695
    %v2537 = vpop.f32.mrb[0].mxu0
    %v2538 = vadd.f32 %v2497, %v2537
    %v2539 = vpop.f32.mrb[0].mxu0
    %v2540 = vadd.f32 %v2499, %v2539
    %v2541 = vpop.f32.mrb[0].mxu0
    %v2542 = vpop.f32.mrb[0].mxu0
    %2543 = vdwg.mxu0
    %2544 = vmatprep.subr.bf16.mxu0 %v1940
    %2545 = vmatpush1.bf16.msra.mxu0 %v1939
    %2546 = vmatprep.subr.bf16.mxu0 %v1944
    %2547 = vmatpush1.bf16.msra.mxu0 %v1943
    %2548 = vmatprep.subr.bf16.mxu0 %v1948
    %2549 = vmatpush1.bf16.msra.mxu0 %v1947
    %2550 = vmatprep.subr.bf16.mxu0 %v1952
    %2551 = vmatpush1.bf16.msra.mxu0 %v1951
    %2552 = vmatprep.subr.bf16.mxu0 %v1956
    %2553 = vmatpush1.bf16.msra.mxu0 %v1955
    %2554 = vmatprep.subr.bf16.mxu0 %v1960
    %2555 = vmatpush1.bf16.msra.mxu0 %v1959
    %2556 = vmatprep.subr.bf16.mxu0 %v1964
    %2557 = vmatpush1.bf16.msra.mxu0 %v1963
    %2558 = vmatprep.subr.bf16.mxu0 %v1968
    %2559 = vmatpush1.bf16.msra.mxu0 %v1967
    %2560 = vmatprep.subr.bf16.mxu0 %v1972
    %2561 = vmatpush1.bf16.msra.mxu0 %v1971
    %2562 = vmatprep.subr.bf16.mxu0 %v1976
    %2563 = vmatpush1.bf16.msra.mxu0 %v1975
    %2564 = vmatprep.subr.bf16.mxu0 %v1980
    %2565 = vmatpush1.bf16.msra.mxu0 %v1979
    %2566 = vmatprep.subr.bf16.mxu0 %v1984
    %2567 = vmatpush1.bf16.msra.mxu0 %v1983
    %2568 = vmatprep.subr.bf16.mxu0 %v1988
    %2569 = vmatpush1.bf16.msra.mxu0 %v1987
    %2570 = vmatprep.subr.bf16.mxu0 %v1992
    %2571 = vmatpush1.bf16.msra.mxu0 %v1991
    %2572 = vmatprep.subr.bf16.mxu0 %v1996
    %2573 = vmatpush1.bf16.msra.mxu0 %v1995
    %2574 = vmatprep.subr.bf16.mxu0 %v2000
    %2575 = vmatpush1.bf16.msra.mxu0 %v1999
    %2576 = vmatprep.mubr.bf16.mxu0 %v698
    %2577 = vmatmul.mubr.bf16.gmra.mrb[0].mxu0 %v697
    %v2578 = vpop.f32.mrb[0].mxu0
    %v2579 = vadd.f32 %v2538, %v2578
    %v2580 = vpop.f32.mrb[0].mxu0
    %v2581 = vadd.f32 %v2540, %v2580
    %v2582 = vpop.f32.mrb[0].mxu0
    %v2583 = vpop.f32.mrb[0].mxu0
    %2584 = vdwg.mxu0
    %v2585 = vmax.f32 %v2415, 0.0
    %v2586 = vmax.f32 %v2417, 0.0
    %v2587 = vmax.f32 %v2579, 0.0
    %v2588 = vmax.f32 %v2581, 0.0
    %v2589 = vpack.c.bf16 %v2585, %v2585
    %v2590 = vpack.c.bf16 %v2586, %v2586
    %v2591 = vpack.c.bf16 %v2587, %v2587
    %v2592 = vpack.c.bf16 %v2588, %v2588
    %v2593 = vld [vmem:[#allocation10] sm:$0xf]
    %v2594 = vld [vmem:[#allocation10 + $0x4] sm:$0xf]
    %v2595 = vld [vmem:[#allocation10 + $0x8] sm:$0xf]
    %v2596 = vld [vmem:[#allocation10 + $0xc] sm:$0xf]
    %v2597 = vld [vmem:[#allocation10 + $0x10] sm:$0xf]
    %v2598 = vld [vmem:[#allocation10 + $0x14] sm:$0xf]
    %v2599 = vld [vmem:[#allocation10 + $0x18] sm:$0xf]
    %v2600 = vld [vmem:[#allocation10 + $0x1c] sm:$0xf]
    %v2601 = vld [vmem:[#allocation10 + $0x20] sm:$0xf]
    %v2602 = vld [vmem:[#allocation10 + $0x24] sm:$0xf]
    %v2603 = vld [vmem:[#allocation10 + $0x28] sm:$0xf]
    %v2604 = vld [vmem:[#allocation10 + $0x2c] sm:$0xf]
    %v2605 = vld [vmem:[#allocation10 + $0x30] sm:$0xf]
    %v2606 = vld [vmem:[#allocation10 + $0x34] sm:$0xf]
    %v2607 = vld [vmem:[#allocation10 + $0x38] sm:$0xf]
    %v2608 = vld [vmem:[#allocation10 + $0x3c] sm:$0xf]
    %v2609 = vld [vmem:[#allocation10 + $0x40] sm:$0xf]
    %v2610 = vld [vmem:[#allocation10 + $0x44] sm:$0xf]
    %v2611 = vld [vmem:[#allocation10 + $0x48] sm:$0xf]
    %v2612 = vld [vmem:[#allocation10 + $0x4c] sm:$0xf]
    %v2613 = vld [vmem:[#allocation10 + $0x50] sm:$0xf]
    %v2614 = vld [vmem:[#allocation10 + $0x54] sm:$0xf]
    %v2615 = vld [vmem:[#allocation10 + $0x58] sm:$0xf]
    %v2616 = vld [vmem:[#allocation10 + $0x5c] sm:$0xf]
    %v2617 = vld [vmem:[#allocation10 + $0x60] sm:$0xf]
    %v2618 = vld [vmem:[#allocation10 + $0x64] sm:$0xf]
    %v2619 = vld [vmem:[#allocation10 + $0x68] sm:$0xf]
    %v2620 = vld [vmem:[#allocation10 + $0x6c] sm:$0xf]
    %v2621 = vld [vmem:[#allocation10 + $0x70] sm:$0xf]
    %v2622 = vld [vmem:[#allocation10 + $0x74] sm:$0xf]
    %v2623 = vld [vmem:[#allocation10 + $0x78] sm:$0xf]
    %v2624 = vld [vmem:[#allocation10 + $0x7c] sm:$0xf]
    %v2625 = vld [vmem:[#allocation10 + $0x80] sm:$0xf]
    %v2626 = vld [vmem:[#allocation10 + $0x84] sm:$0xf]
    %v2627 = vld [vmem:[#allocation10 + $0x88] sm:$0xf]
    %v2628 = vld [vmem:[#allocation10 + $0x8c] sm:$0xf]
    %v2629 = vld [vmem:[#allocation10 + $0x90] sm:$0xf]
    %v2630 = vld [vmem:[#allocation10 + $0x94] sm:$0xf]
    %v2631 = vld [vmem:[#allocation10 + $0x98] sm:$0xf]
    %v2632 = vld [vmem:[#allocation10 + $0x9c] sm:$0xf]
    %v2633 = vld [vmem:[#allocation10 + $0xa0] sm:$0xf]
    %v2634 = vld [vmem:[#allocation10 + $0xa4] sm:$0xf]
    %v2635 = vld [vmem:[#allocation10 + $0xa8] sm:$0xf]
    %v2636 = vld [vmem:[#allocation10 + $0xac] sm:$0xf]
    %v2637 = vld [vmem:[#allocation10 + $0xb0] sm:$0xf]
    %v2638 = vld [vmem:[#allocation10 + $0xb4] sm:$0xf]
    %v2639 = vld [vmem:[#allocation10 + $0xb8] sm:$0xf]
    %v2640 = vld [vmem:[#allocation10 + $0xbc] sm:$0xf]
    %v2641 = vld [vmem:[#allocation10 + $0xc0] sm:$0xf]
    %v2642 = vld [vmem:[#allocation10 + $0xc4] sm:$0xf]
    %v2643 = vld [vmem:[#allocation10 + $0xc8] sm:$0xf]
    %v2644 = vld [vmem:[#allocation10 + $0xcc] sm:$0xf]
    %v2645 = vld [vmem:[#allocation10 + $0xd0] sm:$0xf]
    %v2646 = vld [vmem:[#allocation10 + $0xd4] sm:$0xf]
    %v2647 = vld [vmem:[#allocation10 + $0xd8] sm:$0xf]
    %v2648 = vld [vmem:[#allocation10 + $0xdc] sm:$0xf]
    %v2649 = vld [vmem:[#allocation10 + $0xe0] sm:$0xf]
    %v2650 = vld [vmem:[#allocation10 + $0xe4] sm:$0xf]
    %v2651 = vld [vmem:[#allocation10 + $0xe8] sm:$0xf]
    %v2652 = vld [vmem:[#allocation10 + $0xec] sm:$0xf]
    %v2653 = vld [vmem:[#allocation10 + $0xf0] sm:$0xf]
    %v2654 = vld [vmem:[#allocation10 + $0xf4] sm:$0xf]
    %v2655 = vld [vmem:[#allocation10 + $0xf8] sm:$0xf]
    %v2656 = vld [vmem:[#allocation10 + $0xfc] sm:$0xf]
    %v2657 = vld [vmem:[%s6] sm:$0x1]
    %v2659 = vlaneseq
    %v2660 = vshrl.u32 %v2659, 7
    %v2661 = vsub.s32 0, %v2660
    %v2662 = vrot.slane %v2657, %v2661
    %v2728 = vunpack.c.l.b16 %v2593
    %v2729 = vunpack.c.l.b16 %v2594
    %v2730 = vunpack.c.l.b16 %v2595
    %v2731 = vunpack.c.l.b16 %v2596
    %v2732 = vunpack.c.l.b16 %v2597
    %v2733 = vunpack.c.l.b16 %v2598
    %v2734 = vunpack.c.l.b16 %v2599
    %v2735 = vunpack.c.l.b16 %v2600
    %v2736 = vunpack.c.l.b16 %v2601
    %v2737 = vunpack.c.l.b16 %v2602
    %v2738 = vunpack.c.l.b16 %v2603
    %v2739 = vunpack.c.l.b16 %v2604
    %v2740 = vunpack.c.l.b16 %v2605
    %v2741 = vunpack.c.l.b16 %v2606
    %v2742 = vunpack.c.l.b16 %v2607
    %v2743 = vunpack.c.l.b16 %v2608
    %v2744 = vunpack.c.l.b16 %v2609
    %v2745 = vunpack.c.l.b16 %v2610
    %v2746 = vunpack.c.l.b16 %v2611
    %v2747 = vunpack.c.l.b16 %v2612
    %v2748 = vunpack.c.l.b16 %v2613
    %v2749 = vunpack.c.l.b16 %v2614
    %v2750 = vunpack.c.l.b16 %v2615
    %v2751 = vunpack.c.l.b16 %v2616
    %v2752 = vunpack.c.l.b16 %v2617
    %v2753 = vunpack.c.l.b16 %v2618
    %v2754 = vunpack.c.l.b16 %v2619
    %v2755 = vunpack.c.l.b16 %v2620
    %v2756 = vunpack.c.l.b16 %v2621
    %v2757 = vunpack.c.l.b16 %v2622
    %v2758 = vunpack.c.l.b16 %v2623
    %v2759 = vunpack.c.l.b16 %v2624
    %v2760 = vunpack.c.l.b16 %v2625
    %v2761 = vunpack.c.l.b16 %v2626
    %v2762 = vunpack.c.l.b16 %v2627
    %v2763 = vunpack.c.l.b16 %v2628
    %v2764 = vunpack.c.l.b16 %v2629
    %v2765 = vunpack.c.l.b16 %v2630
    %v2766 = vunpack.c.l.b16 %v2631
    %v2767 = vunpack.c.l.b16 %v2632
    %v2768 = vunpack.c.l.b16 %v2633
    %v2769 = vunpack.c.l.b16 %v2634
    %v2770 = vunpack.c.l.b16 %v2635
    %v2771 = vunpack.c.l.b16 %v2636
    %v2772 = vunpack.c.l.b16 %v2637
    %v2773 = vunpack.c.l.b16 %v2638
    %v2774 = vunpack.c.l.b16 %v2639
    %v2775 = vunpack.c.l.b16 %v2640
    %v2776 = vunpack.c.l.b16 %v2641
    %v2777 = vunpack.c.l.b16 %v2642
    %v2778 = vunpack.c.l.b16 %v2643
    %v2779 = vunpack.c.l.b16 %v2644
    %v2780 = vunpack.c.l.b16 %v2645
    %v2781 = vunpack.c.l.b16 %v2646
    %v2782 = vunpack.c.l.b16 %v2647
    %v2783 = vunpack.c.l.b16 %v2648
    %v2784 = vunpack.c.l.b16 %v2649
    %v2785 = vunpack.c.l.b16 %v2650
    %v2786 = vunpack.c.l.b16 %v2651
    %v2787 = vunpack.c.l.b16 %v2652
    %v2788 = vunpack.c.l.b16 %v2653
    %v2789 = vunpack.c.l.b16 %v2654
    %v2790 = vunpack.c.l.b16 %v2655
    %v2791 = vunpack.c.l.b16 %v2656
    %v2792 = vpack.c.b16 %v2729, %v2728
    %v2793 = vpack.c.b16 %v2731, %v2730
    %v2794 = vpack.c.b16 %v2733, %v2732
    %v2795 = vpack.c.b16 %v2735, %v2734
    %v2796 = vpack.c.b16 %v2737, %v2736
    %v2797 = vpack.c.b16 %v2739, %v2738
    %v2798 = vpack.c.b16 %v2741, %v2740
    %v2799 = vpack.c.b16 %v2743, %v2742
    %v2800 = vpack.c.b16 %v2745, %v2744
    %v2801 = vpack.c.b16 %v2747, %v2746
    %v2802 = vpack.c.b16 %v2749, %v2748
    %v2803 = vpack.c.b16 %v2751, %v2750
    %v2804 = vpack.c.b16 %v2753, %v2752
    %v2805 = vpack.c.b16 %v2755, %v2754
    %v2806 = vpack.c.b16 %v2757, %v2756
    %v2807 = vpack.c.b16 %v2759, %v2758
    %v2808 = vpack.c.b16 %v2761, %v2760
    %v2809 = vpack.c.b16 %v2763, %v2762
    %v2810 = vpack.c.b16 %v2765, %v2764
    %v2811 = vpack.c.b16 %v2767, %v2766
    %v2812 = vpack.c.b16 %v2769, %v2768
    %v2813 = vpack.c.b16 %v2771, %v2770
    %v2814 = vpack.c.b16 %v2773, %v2772
    %v2815 = vpack.c.b16 %v2775, %v2774
    %v2816 = vpack.c.b16 %v2777, %v2776
    %v2817 = vpack.c.b16 %v2779, %v2778
    %v2818 = vpack.c.b16 %v2781, %v2780
    %v2819 = vpack.c.b16 %v2783, %v2782
    %v2820 = vpack.c.b16 %v2785, %v2784
    %v2821 = vpack.c.b16 %v2787, %v2786
    %v2822 = vpack.c.b16 %v2789, %v2788
    %v2823 = vpack.c.b16 %v2791, %v2790
    %2856 = vmatprep.subr.bf16.mxu0 0
    %2857 = vmatpush1.bf16.msra.mxu0 %v2792
    %2858 = vmatprep.subr.bf16.mxu0 0
    %2859 = vmatpush1.bf16.msra.mxu0 %v2793
    %2860 = vmatprep.subr.bf16.mxu0 0
    %2861 = vmatpush1.bf16.msra.mxu0 %v2794
    %2862 = vmatprep.subr.bf16.mxu0 0
    %2863 = vmatpush1.bf16.msra.mxu0 %v2795
    %2864 = vmatprep.subr.bf16.mxu0 0
    %2865 = vmatpush1.bf16.msra.mxu0 %v2796
    %2866 = vmatprep.subr.bf16.mxu0 0
    %2867 = vmatpush1.bf16.msra.mxu0 %v2797
    %2868 = vmatprep.subr.bf16.mxu0 0
    %2869 = vmatpush1.bf16.msra.mxu0 %v2798
    %2870 = vmatprep.subr.bf16.mxu0 0
    %2871 = vmatpush1.bf16.msra.mxu0 %v2799
    %2872 = vmatprep.subr.bf16.mxu0 0
    %2873 = vmatpush1.bf16.msra.mxu0 %v2800
    %2874 = vmatprep.subr.bf16.mxu0 0
    %2875 = vmatpush1.bf16.msra.mxu0 %v2801
    %2876 = vmatprep.subr.bf16.mxu0 0
    %2877 = vmatpush1.bf16.msra.mxu0 %v2802
    %2878 = vmatprep.subr.bf16.mxu0 0
    %2879 = vmatpush1.bf16.msra.mxu0 %v2803
    %2880 = vmatprep.subr.bf16.mxu0 0
    %2881 = vmatpush1.bf16.msra.mxu0 %v2804
    %2882 = vmatprep.subr.bf16.mxu0 0
    %2883 = vmatpush1.bf16.msra.mxu0 %v2805
    %2884 = vmatprep.subr.bf16.mxu0 0
    %2885 = vmatpush1.bf16.msra.mxu0 %v2806
    %2886 = vmatprep.subr.bf16.mxu0 0
    %2887 = vmatpush1.bf16.msra.mxu0 %v2807
    %2888 = vmatprep.mubr.bf16.mxu0 %v2590
    %2889 = vmatmul.mubr.bf16.gmra.mrb[0].mxu0 %v2589
    %v2890 = vpop.f32.mrb[0].mxu0
    %v2891 = vadd.f32 %v2662, %v2890
    %v2892 = vpop.f32.mrb[0].mxu0
    %v2893 = vpop.f32.mrb[0].mxu0
    %v2894 = vpop.f32.mrb[0].mxu0
    %2895 = vdwg.mxu0
    %2896 = vmatprep.subr.bf16.mxu0 0
    %2897 = vmatpush1.bf16.msra.mxu0 %v2808
    %2898 = vmatprep.subr.bf16.mxu0 0
    %2899 = vmatpush1.bf16.msra.mxu0 %v2809
    %2900 = vmatprep.subr.bf16.mxu0 0
    %2901 = vmatpush1.bf16.msra.mxu0 %v2810
    %2902 = vmatprep.subr.bf16.mxu0 0
    %2903 = vmatpush1.bf16.msra.mxu0 %v2811
    %2904 = vmatprep.subr.bf16.mxu0 0
    %2905 = vmatpush1.bf16.msra.mxu0 %v2812
    %2906 = vmatprep.subr.bf16.mxu0 0
    %2907 = vmatpush1.bf16.msra.mxu0 %v2813
    %2908 = vmatprep.subr.bf16.mxu0 0
    %2909 = vmatpush1.bf16.msra.mxu0 %v2814
    %2910 = vmatprep.subr.bf16.mxu0 0
    %2911 = vmatpush1.bf16.msra.mxu0 %v2815
    %2912 = vmatprep.subr.bf16.mxu0 0
    %2913 = vmatpush1.bf16.msra.mxu0 %v2816
    %2914 = vmatprep.subr.bf16.mxu0 0
    %2915 = vmatpush1.bf16.msra.mxu0 %v2817
    %2916 = vmatprep.subr.bf16.mxu0 0
    %2917 = vmatpush1.bf16.msra.mxu0 %v2818
    %2918 = vmatprep.subr.bf16.mxu0 0
    %2919 = vmatpush1.bf16.msra.mxu0 %v2819
    %2920 = vmatprep.subr.bf16.mxu0 0
    %2921 = vmatpush1.bf16.msra.mxu0 %v2820
    %2922 = vmatprep.subr.bf16.mxu0 0
    %2923 = vmatpush1.bf16.msra.mxu0 %v2821
    %2924 = vmatprep.subr.bf16.mxu0 0
    %2925 = vmatpush1.bf16.msra.mxu0 %v2822
    %2926 = vmatprep.subr.bf16.mxu0 0
    %2927 = vmatpush1.bf16.msra.mxu0 %v2823
    %2928 = vmatprep.mubr.bf16.mxu0 %v2592
    %2929 = vmatmul.mubr.bf16.gmra.mrb[0].mxu0 %v2591
    %v2930 = vpop.f32.mrb[0].mxu0
    %v2931 = vadd.f32 %v2891, %v2930
    %v2932 = vpop.f32.mrb[0].mxu0
    %v2933 = vpop.f32.mrb[0].mxu0
    %v2934 = vpop.f32.mrb[0].mxu0
    %2935 = vdwg.mxu0
    %2936 = vmax.xlane.f32.xlu0 %v2931
    %v2937 = vpop.xlane.xlu0 %2936
    %v2938 = vsub.f32 %v2931, %v2937
    %v2939 = vmul.f32 %v2938, 1.442695
    %v2940 = vpow.pop %v2939
    %2941 = vadd.xlane.f32.xlu0 %v2940
    %v2942 = vpop.xlane.xlu0 %2941
    %v2943 = vrcp.pop %v2942
    %v2944 = vmul.f32 %v2940, %v2943
    %2945 = vst [vmem:[#allocation11] sm:$0xff] %v2944
    // Predicated region
    $region50: #{tpu_custom_call.1} parent=1 // pred_check
      _
    $region51: #{tpu_custom_call.1} parent=1 // pred_check_branch
      %2947 = sbr.rel (0) target = $region53
    $region52: #{tpu_custom_call.1} parent=1 // pred_region
      %s2949 = ssub.s32 128, 128
      %2950 = vsyncadd [#allocation4], %s2949
      %s2952 = sshll.u32 [#allocation11], 4
      %s2953 = int_to_ptr.vmem [resolvable:$true] %s2952
      %2955 = dma.vmem_to_hbm [thread:$0]  %s2953, 128, %s7, [#allocation4]
    $region53: #{tpu_custom_call.1} parent=1 // pred_fallthru
      _
    // Predicated region
    $region54: #{tpu_custom_call.1} parent=1 // pred_check
      _
    $region55: #{tpu_custom_call.1} parent=1 // pred_check_branch
      %2957 = sbr.rel (0) target = $region57
    $region56: #{tpu_custom_call.1} parent=1 // pred_region
      %2958 = dma.done [#allocation4], 128
    $region57: #{tpu_custom_call.1} parent=1 // pred_fallthru
      _
    %2959 = vsyncpa [#allocation3], 1
    %2960 = vsyncpa [#allocation6], 1
    %2961 = vsyncpa [#allocation9], 1
    %2962 = vsyncpa [#allocation4], 1

// kernel: tpu_custom_call.1
$region0: #{tpu_custom_call.1}
  #allocation0 [shape = 'u32[]', space=smem, size = 0x4, offset = 0x4, fixed_abs, tag = 'smem constant byte address 0x4 - core index']
  #allocation1 [shape = 'u32[144,128]{1,0:T(1,128)}', space=vmem, size = 0x12000, scoped, tag = 'internal scratch']
  %s0 = inlined_call_operand.hbm [shape: bf16[8,128], index: 0, kind: input, shape index: {}]
  %s1 = inlined_call_operand.hbm [shape: bf16[128,1024], index: 1, kind: input, shape index: {}]
  %s2 = inlined_call_operand.hbm [shape: f32[1,1024], index: 2, kind: input, shape index: {}]
  %s3 = inlined_call_operand.hbm [shape: bf16[1024,512], index: 3, kind: input, shape index: {}]
  %s4 = inlined_call_operand.vmem [shape: f32[1,512], index: 4, kind: input, shape index: {}]
  %s5 = inlined_call_operand.hbm [shape: bf16[512,128], index: 5, kind: input, shape index: {}]
  %s6 = inlined_call_operand.vmem [shape: f32[1,128], index: 6, kind: input, shape index: {}]
  %s7 = inlined_call_operand.hbm [shape: f32[8,128], index: 7, kind: output, shape index: {}]
  %s8 = sld [smem:[#allocation0]]
  $region58: #{tpu_custom_call.1} parent=0
    _
  %s10 = ssub.s32 1, %s8
  %s11 = scalar_select 0, %s10, %s8
  $region1: #{tpu_custom_call.1} parent=0
    #allocation2 [shape = 'u8[2048]{0}', space=vmem, size = 0x800, scoped, tag = 'input window, operand 0, single buffered']
    #allocation3 [shape = 's32[1]{0}', space=sflag, size = 0x4, scoped, tag = 'scoped memory for tpu_custom_call.1']
    #allocation4 [shape = 's32[1]{0}', space=sflag, size = 0x4, scoped, tag = 'scoped memory for tpu_custom_call.1']
    #allocation5 [shape = 'u8[262144]{0}', space=vmem, size = 0x40000, scoped, tag = 'input window, operand 1, single buffered']
    #allocation6 [shape = 's32[1]{0}', space=sflag, size = 0x4, scoped, tag = 'scoped memory for tpu_custom_call.1']
    #allocation7 [shape = 'u8[4096]{0}', space=vmem, size = 0x1000, scoped, tag = 'input window, operand 2, single buffered']
    #allocation8 [shape = 'u8[1048576]{0}', space=vmem, size = 0x100000, scoped, tag = 'input window, operand 3, single buffered']
    #allocation9 [shape = 's32[1]{0}', space=sflag, size = 0x4, scoped, tag = 'scoped memory for tpu_custom_call.1']
    #allocation10 [shape = 'u8[131072]{0}', space=vmem, size = 0x20000, scoped, tag = 'input window, operand 5, single buffered']
    #allocation11 [shape = 'u8[4096]{0}', space=vmem, size = 0x1000, scoped, tag = 'output window, operand 0, single buffered']
    %12 = vsyncpa [#allocation3], 0
    %13 = vsyncpa [#allocation6], 0
    %14 = vsyncpa [#allocation9], 0
    %15 = vsyncpa [#allocation4], 0
    // Predicated region
    $region2: #{tpu_custom_call.1} parent=1 // pred_check
      _
    $region3: #{tpu_custom_call.1} parent=1 // pred_check_branch
      %17 = sbr.rel (0) target = $region5
    $region4: #{tpu_custom_call.1} parent=1 // pred_region
      %s19 = ssub.s32 64, 64
      %20 = vsyncadd [#allocation3], %s19
      %s22 = sshll.u32 [#allocation2], 4
      %s23 = int_to_ptr.vmem [resolvable:$true] %s22
      %25 = dma.hbm_to_vmem [thread:$0]  %s0, 64, %s23, [#allocation3]
    $region5: #{tpu_custom_call.1} parent=1 // pred_fallthru
      _
    // Predicated region
    $region6: #{tpu_custom_call.1} parent=1 // pred_check
      _
    $region7: #{tpu_custom_call.1} parent=1 // pred_check_branch
      %27 = sbr.rel (0) target = $region9
    $region8: #{tpu_custom_call.1} parent=1 // pred_region
      %s29 = ssub.s32 8192, 8192
      %30 = vsyncadd [#allocation6], %s29
      %s31 = sshll.u32 [#allocation5], 4
      %s32 = int_to_ptr.vmem [resolvable:$true] %s31
      %37 = dma.hbm_to_vmem [thread:$0]  %s1, 8192, %s32, [#allocation6], 512, 512, 32
    $region9: #{tpu_custom_call.1} parent=1 // pred_fallthru
      _
    // Predicated region
    $region10: #{tpu_custom_call.1} parent=1 // pred_check
      _
    $region11: #{tpu_custom_call.1} parent=1 // pred_check_branch
      %39 = sbr.rel (0) target = $region13
    $region12: #{tpu_custom_call.1} parent=1 // pred_region
      %s41 = ssub.s32 128, 128
      %42 = vsyncadd [#allocation6], %s41
      %s44 = sshll.u32 [#allocation7], 4
      %s45 = int_to_ptr.vmem [resolvable:$true] %s44
      %47 = dma.hbm_to_vmem [thread:$0]  %s2, 128, %s45, [#allocation6]
    $region13: #{tpu_custom_call.1} parent=1 // pred_fallthru
      _
    // Predicated region
    $region14: #{tpu_custom_call.1} parent=1 // pred_check
      _
    $region15: #{tpu_custom_call.1} parent=1 // pred_check_branch
      %49 = sbr.rel (0) target = $region17
    $region16: #{tpu_custom_call.1} parent=1 // pred_region
      %s51 = ssub.s32 32768, 32768
      %52 = vsyncadd [#allocation9], %s51
      %s53 = sshll.u32 [#allocation8], 4
      %s54 = int_to_ptr.vmem [resolvable:$true] %s53
      %59 = dma.hbm_to_vmem [thread:$0]  %s3, 32768, %s54, [#allocation9], 256, 256, 16
    $region17: #{tpu_custom_call.1} parent=1 // pred_fallthru
      _
    // Predicated region
    $region18: #{tpu_custom_call.1} parent=1 // pred_check
      _
    $region19: #{tpu_custom_call.1} parent=1 // pred_check_branch
      %61 = sbr.rel (0) target = $region21
    $region20: #{tpu_custom_call.1} parent=1 // pred_region
      _
    $region21: #{tpu_custom_call.1} parent=1 // pred_fallthru
      _
    // Predicated region
    $region22: #{tpu_custom_call.1} parent=1 // pred_check
      _
    $region23: #{tpu_custom_call.1} parent=1 // pred_check_branch
      %63 = sbr.rel (0) target = $region25
    $region24: #{tpu_custom_call.1} parent=1 // pred_region
      %s65 = ssub.s32 4096, 4096
      %66 = vsyncadd [#allocation9], %s65
      %s67 = sshll.u32 [#allocation10], 4
      %s68 = int_to_ptr.vmem [resolvable:$true] %s67
      %73 = dma.hbm_to_vmem [thread:$0]  %s5, 4096, %s68, [#allocation9], 64, 64, 4
    $region25: #{tpu_custom_call.1} parent=1 // pred_fallthru
      _
    // Predicated region
    $region26: #{tpu_custom_call.1} parent=1 // pred_check
      _
    $region27: #{tpu_custom_call.1} parent=1 // pred_check_branch
      %75 = sbr.rel (0) target = $region29
    $region28: #{tpu_custom_call.1} parent=1 // pred_region
      _
    $region29: #{tpu_custom_call.1} parent=1 // pred_fallthru
      _
    // Predicated region
    $region30: #{tpu_custom_call.1} parent=1 // pred_check
      _
    $region31: #{tpu_custom_call.1} parent=1 // pred_check_branch
      %77 = sbr.rel (0) target = $region33
    $region32: #{tpu_custom_call.1} parent=1 // pred_region
      %78 = dma.done [#allocation3], 64
    $region33: #{tpu_custom_call.1} parent=1 // pred_fallthru
      _
    // Predicated region
    $region34: #{tpu_custom_call.1} parent=1 // pred_check
      _
    $region35: #{tpu_custom_call.1} parent=1 // pred_check_branch
      %80 = sbr.rel (0) target = $region37
    $region36: #{tpu_custom_call.1} parent=1 // pred_region
      %81 = dma.done [#allocation6], 8192
    $region37: #{tpu_custom_call.1} parent=1 // pred_fallthru
      _
    // Predicated region
    $region38: #{tpu_custom_call.1} parent=1 // pred_check
      _
    $region39: #{tpu_custom_call.1} parent=1 // pred_check_branch
      %83 = sbr.rel (0) target = $region41
    $region40: #{tpu_custom_call.1} parent=1 // pred_region
      %84 = dma.done [#allocation6], 128
    $region41: #{tpu_custom_call.1} parent=1 // pred_fallthru
      _
    // Predicated region
    $region42: #{tpu_custom_call.1} parent=1 // pred_check
      _
    $region43: #{tpu_custom_call.1} parent=1 // pred_check_branch
      %86 = sbr.rel (0) target = $region45
    $region44: #{tpu_custom_call.1} parent=1 // pred_region
      %87 = dma.done [#allocation9], 32768
    $region45: #{tpu_custom_call.1} parent=1 // pred_fallthru
      _
    // Predicated region
    $region46: #{tpu_custom_call.1} parent=1 // pred_check
      _
    $region47: #{tpu_custom_call.1} parent=1 // pred_check_branch
      %89 = sbr.rel (0) target = $region49
    $region48: #{tpu_custom_call.1} parent=1 // pred_region
      %90 = dma.done [#allocation9], 4096
    $region49: #{tpu_custom_call.1} parent=1 // pred_fallthru
      _
    %v92 = vld [vmem:[#allocation2] sm:$0xf]
    %v93 = vld [vmem:[#allocation5] sm:$0xff]
    %v94 = vld [vmem:[#allocation5 + $0x8] sm:$0xff]
    %v95 = vld [vmem:[#allocation5 + $0x10] sm:$0xff]
    %v96 = vld [vmem:[#allocation5 + $0x18] sm:$0xff]
    %v97 = vld [vmem:[#allocation5 + $0x20] sm:$0xff]
    %v98 = vld [vmem:[#allocation5 + $0x28] sm:$0xff]
    %v99 = vld [vmem:[#allocation5 + $0x30] sm:$0xff]
    %v100 = vld [vmem:[#allocation5 + $0x38] sm:$0xff]
    %v101 = vld [vmem:[#allocation5 + $0x40] sm:$0xff]
    %v102 = vld [vmem:[#allocation5 + $0x48] sm:$0xff]
    %v103 = vld [vmem:[#allocation5 + $0x50] sm:$0xff]
    %v104 = vld [vmem:[#allocation5 + $0x58] sm:$0xff]
    %v105 = vld [vmem:[#allocation5 + $0x60] sm:$0xff]
    %v106 = vld [vmem:[#allocation5 + $0x68] sm:$0xff]
    %v107 = vld [vmem:[#allocation5 + $0x70] sm:$0xff]
    %v108 = vld [vmem:[#allocation5 + $0x78] sm:$0xff]
    %v109 = vld [vmem:[#allocation5 + $0x80] sm:$0xff]
    %v110 = vld [vmem:[#allocation5 + $0x88] sm:$0xff]
    %v111 = vld [vmem:[#allocation5 + $0x90] sm:$0xff]
    %v112 = vld [vmem:[#allocation5 + $0x98] sm:$0xff]
    %v113 = vld [vmem:[#allocation5 + $0xa0] sm:$0xff]
    %v114 = vld [vmem:[#allocation5 + $0xa8] sm:$0xff]
    %v115 = vld [vmem:[#allocation5 + $0xb0] sm:$0xff]
    %v116 = vld [vmem:[#allocation5 + $0xb8] sm:$0xff]
    %v117 = vld [vmem:[#allocation5 + $0xc0] sm:$0xff]
    %v118 = vld [vmem:[#allocation5 + $0xc8] sm:$0xff]
    %v119 = vld [vmem:[#allocation5 + $0xd0] sm:$0xff]
    %v120 = vld [vmem:[#allocation5 + $0xd8] sm:$0xff]
    %v121 = vld [vmem:[#allocation5 + $0xe0] sm:$0xff]
    %v122 = vld [vmem:[#allocation5 + $0xe8] sm:$0xff]
    %v123 = vld [vmem:[#allocation5 + $0xf0] sm:$0xff]
    %v124 = vld [vmem:[#allocation5 + $0xf8] sm:$0xff]
    %v125 = vld [vmem:[#allocation5 + $0x100] sm:$0xff]
    %v126 = vld [vmem:[#allocation5 + $0x108] sm:$0xff]
    %v127 = vld [vmem:[#allocation5 + $0x110] sm:$0xff]
    %v128 = vld [vmem:[#allocation5 + $0x118] sm:$0xff]
    %v129 = vld [vmem:[#allocation5 + $0x120] sm:$0xff]
    %v130 = vld [vmem:[#allocation5 + $0x128] sm:$0xff]
    %v131 = vld [vmem:[#allocation5 + $0x130] sm:$0xff]
    %v132 = vld [vmem:[#allocation5 + $0x138] sm:$0xff]
    %v133 = vld [vmem:[#allocation5 + $0x140] sm:$0xff]
    %v134 = vld [vmem:[#allocation5 + $0x148] sm:$0xff]
    %v135 = vld [vmem:[#allocation5 + $0x150] sm:$0xff]
    %v136 = vld [vmem:[#allocation5 + $0x158] sm:$0xff]
    %v137 = vld [vmem:[#allocation5 + $0x160] sm:$0xff]
    %v138 = vld [vmem:[#allocation5 + $0x168] sm:$0xff]
    %v139 = vld [vmem:[#allocation5 + $0x170] sm:$0xff]
    %v140 = vld [vmem:[#allocation5 + $0x178] sm:$0xff]
    %v141 = vld [vmem:[#allocation5 + $0x180] sm:$0xff]
    %v142 = vld [vmem:[#allocation5 + $0x188] sm:$0xff]
    %v143 = vld [vmem:[#allocation5 + $0x190] sm:$0xff]
    %v144 = vld [vmem:[#allocation5 + $0x198] sm:$0xff]
    %v145 = vld [vmem:[#allocation5 + $0x1a0] sm:$0xff]
    %v146 = vld [vmem:[#allocation5 + $0x1a8] sm:$0xff]
    %v147 = vld [vmem:[#allocation5 + $0x1b0] sm:$0xff]
    %v148 = vld [vmem:[#allocation5 + $0x1b8] sm:$0xff]
    %v149 = vld [vmem:[#allocation5 + $0x1c0] sm:$0xff]
    %v150 = vld [vmem:[#allocation5 + $0x1c8] sm:$0xff]
    %v151 = vld [vmem:[#allocation5 + $0x1d0] sm:$0xff]
    %v152 = vld [vmem:[#allocation5 + $0x1d8] sm:$0xff]
    %v153 = vld [vmem:[#allocation5 + $0x1e0] sm:$0xff]
    %v154 = vld [vmem:[#allocation5 + $0x1e8] sm:$0xff]
    %v155 = vld [vmem:[#allocation5 + $0x1f0] sm:$0xff]
    %v156 = vld [vmem:[#allocation5 + $0x1f8] sm:$0xff]
    %v157 = vld [vmem:[#allocation7] sm:$0xff]
    %v159 = vlaneseq
    %v160 = vshrl.u32 %v159, 7
    %v161 = vsub.s32 0, %v160
    %v162 = vrot.slane %v157, %v161
    %v163 = vlaneseq
    %v164 = vshrl.u32 %v163, 7
    %v165 = vsub.s32 1, %v164
    %v166 = vrot.slane %v157, %v165
    %v167 = vlaneseq
    %v168 = vshrl.u32 %v167, 7
    %v169 = vsub.s32 2, %v168
    %v170 = vrot.slane %v157, %v169
    %v171 = vlaneseq
    %v172 = vshrl.u32 %v171, 7
    %v173 = vsub.s32 3, %v172
    %v174 = vrot.slane %v157, %v173
    %v175 = vlaneseq
    %v176 = vshrl.u32 %v175, 7
    %v177 = vsub.s32 4, %v176
    %v178 = vrot.slane %v157, %v177
    %v179 = vlaneseq
    %v180 = vshrl.u32 %v179, 7
    %v181 = vsub.s32 5, %v180
    %v182 = vrot.slane %v157, %v181
    %v183 = vlaneseq
    %v184 = vshrl.u32 %v183, 7
    %v185 = vsub.s32 6, %v184
    %v186 = vrot.slane %v157, %v185
    %v187 = vlaneseq
    %v188 = vshrl.u32 %v187, 7
    %v189 = vsub.s32 7, %v188
    %v190 = vrot.slane %v157, %v189
    %v263 = vunpack.c.l.b16 %v93
    %v264 = vunpack.c.h.b16 %v93
    %v265 = vunpack.c.l.b16 %v94
    %v266 = vunpack.c.h.b16 %v94
    %v267 = vunpack.c.l.b16 %v95
    %v268 = vunpack.c.h.b16 %v95
    %v269 = vunpack.c.l.b16 %v96
    %v270 = vunpack.c.h.b16 %v96
    %v271 = vunpack.c.l.b16 %v97
    %v272 = vunpack.c.h.b16 %v97
    %v273 = vunpack.c.l.b16 %v98
    %v274 = vunpack.c.h.b16 %v98
    %v275 = vunpack.c.l.b16 %v99
    %v276 = vunpack.c.h.b16 %v99
    %v277 = vunpack.c.l.b16 %v100
    %v278 = vunpack.c.h.b16 %v100
    %v279 = vunpack.c.l.b16 %v101
    %v280 = vunpack.c.h.b16 %v101
    %v281 = vunpack.c.l.b16 %v102
    %v282 = vunpack.c.h.b16 %v102
    %v283 = vunpack.c.l.b16 %v103
    %v284 = vunpack.c.h.b16 %v103
    %v285 = vunpack.c.l.b16 %v104
    %v286 = vunpack.c.h.b16 %v104
    %v287 = vunpack.c.l.b16 %v105
    %v288 = vunpack.c.h.b16 %v105
    %v289 = vunpack.c.l.b16 %v106
    %v290 = vunpack.c.h.b16 %v106
    %v291 = vunpack.c.l.b16 %v107
    %v292 = vunpack.c.h.b16 %v107
    %v293 = vunpack.c.l.b16 %v108
    %v294 = vunpack.c.h.b16 %v108
    %v295 = vunpack.c.l.b16 %v109
    %v296 = vunpack.c.h.b16 %v109
    %v297 = vunpack.c.l.b16 %v110
    %v298 = vunpack.c.h.b16 %v110
    %v299 = vunpack.c.l.b16 %v111
    %v300 = vunpack.c.h.b16 %v111
    %v301 = vunpack.c.l.b16 %v112
    %v302 = vunpack.c.h.b16 %v112
    %v303 = vunpack.c.l.b16 %v113
    %v304 = vunpack.c.h.b16 %v113
    %v305 = vunpack.c.l.b16 %v114
    %v306 = vunpack.c.h.b16 %v114
    %v307 = vunpack.c.l.b16 %v115
    %v308 = vunpack.c.h.b16 %v115
    %v309 = vunpack.c.l.b16 %v116
    %v310 = vunpack.c.h.b16 %v116
    %v311 = vunpack.c.l.b16 %v117
    %v312 = vunpack.c.h.b16 %v117
    %v313 = vunpack.c.l.b16 %v118
    %v314 = vunpack.c.h.b16 %v118
    %v315 = vunpack.c.l.b16 %v119
    %v316 = vunpack.c.h.b16 %v119
    %v317 = vunpack.c.l.b16 %v120
    %v318 = vunpack.c.h.b16 %v120
    %v319 = vunpack.c.l.b16 %v121
    %v320 = vunpack.c.h.b16 %v121
    %v321 = vunpack.c.l.b16 %v122
    %v322 = vunpack.c.h.b16 %v122
    %v323 = vunpack.c.l.b16 %v123
    %v324 = vunpack.c.h.b16 %v123
    %v325 = vunpack.c.l.b16 %v124
    %v326 = vunpack.c.h.b16 %v124
    %v327 = vunpack.c.l.b16 %v125
    %v328 = vunpack.c.h.b16 %v125
    %v329 = vunpack.c.l.b16 %v126
    %v330 = vunpack.c.h.b16 %v126
    %v331 = vunpack.c.l.b16 %v127
    %v332 = vunpack.c.h.b16 %v127
    %v333 = vunpack.c.l.b16 %v128
    %v334 = vunpack.c.h.b16 %v128
    %v335 = vunpack.c.l.b16 %v129
    %v336 = vunpack.c.h.b16 %v129
    %v337 = vunpack.c.l.b16 %v130
    %v338 = vunpack.c.h.b16 %v130
    %v339 = vunpack.c.l.b16 %v131
    %v340 = vunpack.c.h.b16 %v131
    %v341 = vunpack.c.l.b16 %v132
    %v342 = vunpack.c.h.b16 %v132
    %v343 = vunpack.c.l.b16 %v133
    %v344 = vunpack.c.h.b16 %v133
    %v345 = vunpack.c.l.b16 %v134
    %v346 = vunpack.c.h.b16 %v134
    %v347 = vunpack.c.l.b16 %v135
    %v348 = vunpack.c.h.b16 %v135
    %v349 = vunpack.c.l.b16 %v136
    %v350 = vunpack.c.h.b16 %v136
    %v351 = vunpack.c.l.b16 %v137
    %v352 = vunpack.c.h.b16 %v137
    %v353 = vunpack.c.l.b16 %v138
    %v354 = vunpack.c.h.b16 %v138
    %v355 = vunpack.c.l.b16 %v139
    %v356 = vunpack.c.h.b16 %v139
    %v357 = vunpack.c.l.b16 %v140
    %v358 = vunpack.c.h.b16 %v140
    %v359 = vunpack.c.l.b16 %v141
    %v360 = vunpack.c.h.b16 %v141
    %v361 = vunpack.c.l.b16 %v142
    %v362 = vunpack.c.h.b16 %v142
    %v363 = vunpack.c.l.b16 %v143
    %v364 = vunpack.c.h.b16 %v143
    %v365 = vunpack.c.l.b16 %v144
    %v366 = vunpack.c.h.b16 %v144
    %v367 = vunpack.c.l.b16 %v145
    %v368 = vunpack.c.h.b16 %v145
    %v369 = vunpack.c.l.b16 %v146
    %v370 = vunpack.c.h.b16 %v146
    %v371 = vunpack.c.l.b16 %v147
    %v372 = vunpack.c.h.b16 %v147
    %v373 = vunpack.c.l.b16 %v148
    %v374 = vunpack.c.h.b16 %v148
    %v375 = vunpack.c.l.b16 %v149
    %v376 = vunpack.c.h.b16 %v149
    %v377 = vunpack.c.l.b16 %v150
    %v378 = vunpack.c.h.b16 %v150
    %v379 = vunpack.c.l.b16 %v151
    %v380 = vunpack.c.h.b16 %v151
    %v381 = vunpack.c.l.b16 %v152
    %v382 = vunpack.c.h.b16 %v152
    %v383 = vunpack.c.l.b16 %v153
    %v384 = vunpack.c.h.b16 %v153
    %v385 = vunpack.c.l.b16 %v154
    %v386 = vunpack.c.h.b16 %v154
    %v387 = vunpack.c.l.b16 %v155
    %v388 = vunpack.c.h.b16 %v155
    %v389 = vunpack.c.l.b16 %v156
    %v390 = vunpack.c.h.b16 %v156
    %v391 = vpack.c.b16 %v271, %v263
    %v392 = vpack.c.b16 %v272, %v264
    %v393 = vpack.c.b16 %v273, %v265
    %v394 = vpack.c.b16 %v274, %v266
    %v395 = vpack.c.b16 %v275, %v267
    %v396 = vpack.c.b16 %v276, %v268
    %v397 = vpack.c.b16 %v277, %v269
    %v398 = vpack.c.b16 %v278, %v270
    %v399 = vpack.c.b16 %v287, %v279
    %v400 = vpack.c.b16 %v288, %v280
    %v401 = vpack.c.b16 %v289, %v281
    %v402 = vpack.c.b16 %v290, %v282
    %v403 = vpack.c.b16 %v291, %v283
    %v404 = vpack.c.b16 %v292, %v284
    %v405 = vpack.c.b16 %v293, %v285
    %v406 = vpack.c.b16 %v294, %v286
    %v407 = vpack.c.b16 %v303, %v295
    %v408 = vpack.c.b16 %v304, %v296
    %v409 = vpack.c.b16 %v305, %v297
    %v410 = vpack.c.b16 %v306, %v298
    %v411 = vpack.c.b16 %v307, %v299
    %v412 = vpack.c.b16 %v308, %v300
    %v413 = vpack.c.b16 %v309, %v301
    %v414 = vpack.c.b16 %v310, %v302
    %v415 = vpack.c.b16 %v319, %v311
    %v416 = vpack.c.b16 %v320, %v312
    %v417 = vpack.c.b16 %v321, %v313
    %v418 = vpack.c.b16 %v322, %v314
    %v419 = vpack.c.b16 %v323, %v315
    %v420 = vpack.c.b16 %v324, %v316
    %v421 = vpack.c.b16 %v325, %v317
    %v422 = vpack.c.b16 %v326, %v318
    %v423 = vpack.c.b16 %v335, %v327
    %v424 = vpack.c.b16 %v336, %v328
    %v425 = vpack.c.b16 %v337, %v329
    %v426 = vpack.c.b16 %v338, %v330
    %v427 = vpack.c.b16 %v339, %v331
    %v428 = vpack.c.b16 %v340, %v332
    %v429 = vpack.c.b16 %v341, %v333
    %v430 = vpack.c.b16 %v342, %v334
    %v431 = vpack.c.b16 %v351, %v343
    %v432 = vpack.c.b16 %v352, %v344
    %v433 = vpack.c.b16 %v353, %v345
    %v434 = vpack.c.b16 %v354, %v346
    %v435 = vpack.c.b16 %v355, %v347
    %v436 = vpack.c.b16 %v356, %v348
    %v437 = vpack.c.b16 %v357, %v349
    %v438 = vpack.c.b16 %v358, %v350
    %v439 = vpack.c.b16 %v367, %v359
    %v440 = vpack.c.b16 %v368, %v360
    %v441 = vpack.c.b16 %v369, %v361
    %v442 = vpack.c.b16 %v370, %v362
    %v443 = vpack.c.b16 %v371, %v363
    %v444 = vpack.c.b16 %v372, %v364
    %v445 = vpack.c.b16 %v373, %v365
    %v446 = vpack.c.b16 %v374, %v366
    %v447 = vpack.c.b16 %v383, %v375
    %v448 = vpack.c.b16 %v384, %v376
    %v449 = vpack.c.b16 %v385, %v377
    %v450 = vpack.c.b16 %v386, %v378
    %v451 = vpack.c.b16 %v387, %v379
    %v452 = vpack.c.b16 %v388, %v380
    %v453 = vpack.c.b16 %v389, %v381
    %v454 = vpack.c.b16 %v390, %v382
    %519 = vmatprep.subr.bf16.mxu0 %v392
    %520 = vmatpush1.bf16.msra.mxu0 %v391
    %521 = vmatprep.subr.bf16.mxu0 %v400
    %522 = vmatpush1.bf16.msra.mxu0 %v399
    %523 = vmatprep.subr.bf16.mxu0 %v408
    %524 = vmatpush1.bf16.msra.mxu0 %v407
    %525 = vmatprep.subr.bf16.mxu0 %v416
    %526 = vmatpush1.bf16.msra.mxu0 %v415
    %527 = vmatprep.subr.bf16.mxu0 %v424
    %528 = vmatpush1.bf16.msra.mxu0 %v423
    %529 = vmatprep.subr.bf16.mxu0 %v432
    %530 = vmatpush1.bf16.msra.mxu0 %v431
    %531 = vmatprep.subr.bf16.mxu0 %v440
    %532 = vmatpush1.bf16.msra.mxu0 %v439
    %533 = vmatprep.subr.bf16.mxu0 %v448
    %534 = vmatpush1.bf16.msra.mxu0 %v447
    %535 = vmatprep.subr.bf16.mxu0 0
    %536 = vmatpush1.bf16.msra.mxu0 0
    %537 = vmatprep.subr.bf16.mxu0 0
    %538 = vmatpush1.bf16.msra.mxu0 0
    %539 = vmatprep.subr.bf16.mxu0 0
    %540 = vmatpush1.bf16.msra.mxu0 0
    %541 = vmatprep.subr.bf16.mxu0 0
    %542 = vmatpush1.bf16.msra.mxu0 0
    %543 = vmatprep.subr.bf16.mxu0 0
    %544 = vmatpush1.bf16.msra.mxu0 0
    %545 = vmatprep.subr.bf16.mxu0 0
    %546 = vmatpush1.bf16.msra.mxu0 0
    %547 = vmatprep.subr.bf16.mxu0 0
    %548 = vmatpush1.bf16.msra.mxu0 0
    %549 = vmatprep.subr.bf16.mxu0 0
    %550 = vmatpush1.bf16.msra.mxu0 0
    %551 = vmatprep.mubr.bf16.mxu0 0
    %552 = vmatmul.mubr.bf16.gmra.mrb[0].mxu0 %v92
    %v553 = vpop.f32.mrb[0].mxu0
    %v554 = vadd.f32 %v162, %v553
    %v555 = vpop.f32.mrb[0].mxu0
    %v556 = vadd.f32 %v166, %v555
    %v557 = vpop.f32.mrb[0].mxu0
    %v558 = vpop.f32.mrb[0].mxu0
    %559 = vdwg.mxu0
    %560 = vmatprep.subr.bf16.mxu0 %v394
    %561 = vmatpush1.bf16.msra.mxu0 %v393
    %562 = vmatprep.subr.bf16.mxu0 %v402
    %563 = vmatpush1.bf16.msra.mxu0 %v401
    %564 = vmatprep.subr.bf16.mxu0 %v410
    %565 = vmatpush1.bf16.msra.mxu0 %v409
    %566 = vmatprep.subr.bf16.mxu0 %v418
    %567 = vmatpush1.bf16.msra.mxu0 %v417
    %568 = vmatprep.subr.bf16.mxu0 %v426
    %569 = vmatpush1.bf16.msra.mxu0 %v425
    %570 = vmatprep.subr.bf16.mxu0 %v434
    %571 = vmatpush1.bf16.msra.mxu0 %v433
    %572 = vmatprep.subr.bf16.mxu0 %v442
    %573 = vmatpush1.bf16.msra.mxu0 %v441
    %574 = vmatprep.subr.bf16.mxu0 %v450
    %575 = vmatpush1.bf16.msra.mxu0 %v449
    %576 = vmatprep.subr.bf16.mxu0 0
    %577 = vmatpush1.bf16.msra.mxu0 0
    %578 = vmatprep.subr.bf16.mxu0 0
    %579 = vmatpush1.bf16.msra.mxu0 0
    %580 = vmatprep.subr.bf16.mxu0 0
    %581 = vmatpush1.bf16.msra.mxu0 0
    %582 = vmatprep.subr.bf16.mxu0 0
    %583 = vmatpush1.bf16.msra.mxu0 0
    %584 = vmatprep.subr.bf16.mxu0 0
    %585 = vmatpush1.bf16.msra.mxu0 0
    %586 = vmatprep.subr.bf16.mxu0 0
    %587 = vmatpush1.bf16.msra.mxu0 0
    %588 = vmatprep.subr.bf16.mxu0 0
    %589 = vmatpush1.bf16.msra.mxu0 0
    %590 = vmatprep.subr.bf16.mxu0 0
    %591 = vmatpush1.bf16.msra.mxu0 0
    %592 = vmatprep.mubr.bf16.mxu0 0
    %593 = vmatmul.mubr.bf16.gmra.mrb[0].mxu0 %v92
    %v594 = vpop.f32.mrb[0].mxu0
    %v595 = vadd.f32 %v170, %v594
    %v596 = vpop.f32.mrb[0].mxu0
    %v597 = vadd.f32 %v174, %v596
    %v598 = vpop.f32.mrb[0].mxu0
    %v599 = vpop.f32.mrb[0].mxu0
    %600 = vdwg.mxu0
    %601 = vmatprep.subr.bf16.mxu0 %v396
    %602 = vmatpush1.bf16.msra.mxu0 %v395
    %603 = vmatprep.subr.bf16.mxu0 %v404
    %604 = vmatpush1.bf16.msra.mxu0 %v403
    %605 = vmatprep.subr.bf16.mxu0 %v412
    %606 = vmatpush1.bf16.msra.mxu0 %v411
    %607 = vmatprep.subr.bf16.mxu0 %v420
    %608 = vmatpush1.bf16.msra.mxu0 %v419
    %609 = vmatprep.subr.bf16.mxu0 %v428
    %610 = vmatpush1.bf16.msra.mxu0 %v427
    %611 = vmatprep.subr.bf16.mxu0 %v436
    %612 = vmatpush1.bf16.msra.mxu0 %v435
    %613 = vmatprep.subr.bf16.mxu0 %v444
    %614 = vmatpush1.bf16.msra.mxu0 %v443
    %615 = vmatprep.subr.bf16.mxu0 %v452
    %616 = vmatpush1.bf16.msra.mxu0 %v451
    %617 = vmatprep.subr.bf16.mxu0 0
    %618 = vmatpush1.bf16.msra.mxu0 0
    %619 = vmatprep.subr.bf16.mxu0 0
    %620 = vmatpush1.bf16.msra.mxu0 0
    %621 = vmatprep.subr.bf16.mxu0 0
    %622 = vmatpush1.bf16.msra.mxu0 0
    %623 = vmatprep.subr.bf16.mxu0 0
    %624 = vmatpush1.bf16.msra.mxu0 0
    %625 = vmatprep.subr.bf16.mxu0 0
    %626 = vmatpush1.bf16.msra.mxu0 0
    %627 = vmatprep.subr.bf16.mxu0 0
    %628 = vmatpush1.bf16.msra.mxu0 0
    %629 = vmatprep.subr.bf16.mxu0 0
    %630 = vmatpush1.bf16.msra.mxu0 0
    %631 = vmatprep.subr.bf16.mxu0 0
    %632 = vmatpush1.bf16.msra.mxu0 0
    %633 = vmatprep.mubr.bf16.mxu0 0
    %634 = vmatmul.mubr.bf16.gmra.mrb[0].mxu0 %v92
    %v635 = vpop.f32.mrb[0].mxu0
    %v636 = vadd.f32 %v178, %v635
    %v637 = vpop.f32.mrb[0].mxu0
    %v638 = vadd.f32 %v182, %v637
    %v639 = vpop.f32.mrb[0].mxu0
    %v640 = vpop.f32.mrb[0].mxu0
    %641 = vdwg.mxu0
    %642 = vmatprep.subr.bf16.mxu0 %v398
    %643 = vmatpush1.bf16.msra.mxu0 %v397
    %644 = vmatprep.subr.bf16.mxu0 %v406
    %645 = vmatpush1.bf16.msra.mxu0 %v405
    %646 = vmatprep.subr.bf16.mxu0 %v414
    %647 = vmatpush1.bf16.msra.mxu0 %v413
    %648 = vmatprep.subr.bf16.mxu0 %v422
    %649 = vmatpush1.bf16.msra.mxu0 %v421
    %650 = vmatprep.subr.bf16.mxu0 %v430
    %651 = vmatpush1.bf16.msra.mxu0 %v429
    %652 = vmatprep.subr.bf16.mxu0 %v438
    %653 = vmatpush1.bf16.msra.mxu0 %v437
    %654 = vmatprep.subr.bf16.mxu0 %v446
    %655 = vmatpush1.bf16.msra.mxu0 %v445
    %656 = vmatprep.subr.bf16.mxu0 %v454
    %657 = vmatpush1.bf16.msra.mxu0 %v453
    %658 = vmatprep.subr.bf16.mxu0 0
    %659 = vmatpush1.bf16.msra.mxu0 0
    %660 = vmatprep.subr.bf16.mxu0 0
    %661 = vmatpush1.bf16.msra.mxu0 0
    %662 = vmatprep.subr.bf16.mxu0 0
    %663 = vmatpush1.bf16.msra.mxu0 0
    %664 = vmatprep.subr.bf16.mxu0 0
    %665 = vmatpush1.bf16.msra.mxu0 0
    %666 = vmatprep.subr.bf16.mxu0 0
    %667 = vmatpush1.bf16.msra.mxu0 0
    %668 = vmatprep.subr.bf16.mxu0 0
    %669 = vmatpush1.bf16.msra.mxu0 0
    %670 = vmatprep.subr.bf16.mxu0 0
    %671 = vmatpush1.bf16.msra.mxu0 0
    %672 = vmatprep.subr.bf16.mxu0 0
    %673 = vmatpush1.bf16.msra.mxu0 0
    %674 = vmatprep.mubr.bf16.mxu0 0
    %675 = vmatmul.mubr.bf16.gmra.mrb[0].mxu0 %v92
    %v676 = vpop.f32.mrb[0].mxu0
    %v677 = vadd.f32 %v186, %v676
    %v678 = vpop.f32.mrb[0].mxu0
    %v679 = vadd.f32 %v190, %v678
    %v680 = vpop.f32.mrb[0].mxu0
    %v681 = vpop.f32.mrb[0].mxu0
    %682 = vdwg.mxu0
    %v683 = vmax.f32 %v554, 0.0
    %v684 = vmax.f32 %v556, 0.0
    %v685 = vmax.f32 %v595, 0.0
    %v686 = vmax.f32 %v597, 0.0
    %v687 = vmax.f32 %v636, 0.0
    %v688 = vmax.f32 %v638, 0.0
    %v689 = vmax.f32 %v677, 0.0
    %v690 = vmax.f32 %v679, 0.0
    %v691 = vpack.c.bf16 %v683, %v683
    %v692 = vpack.c.bf16 %v684, %v684
    %v693 = vpack.c.bf16 %v685, %v685
    %v694 = vpack.c.bf16 %v686, %v686
    %v695 = vpack.c.bf16 %v687, %v687
    %v696 = vpack.c.bf16 %v688, %v688
    %v697 = vpack.c.bf16 %v689, %v689
    %v698 = vpack.c.bf16 %v690, %v690
    %v699 = vld [vmem:[#allocation8] sm:$0xff]
    %v700 = vld [vmem:[#allocation8 + $0x8] sm:$0xff]
    %v701 = vld [vmem:[#allocation8 + $0x10] sm:$0xff]
    %v702 = vld [vmem:[#allocation8 + $0x18] sm:$0xff]
    %v703 = vld [vmem:[#allocation8 + $0x20] sm:$0xff]
    %v704 = vld [vmem:[#allocation8 + $0x28] sm:$0xff]
    %v705 = vld [vmem:[#allocation8 + $0x30] sm:$0xff]
    %v706 = vld [vmem:[#allocation8 + $0x38] sm:$0xff]
    %v707 = vld [vmem:[#allocation8 + $0x40] sm:$0xff]
    %v708 = vld [vmem:[#allocation8 + $0x48] sm:$0xff]
    %v709 = vld [vmem:[#allocation8 + $0x50] sm:$0xff]
    %v710 = vld [vmem:[#allocation8 + $0x58] sm:$0xff]
    %v711 = vld [vmem:[#allocation8 + $0x60] sm:$0xff]
    %v712 = vld [vmem:[#allocation8 + $0x68] sm:$0xff]
    %v713 = vld [vmem:[#allocation8 + $0x70] sm:$0xff]
    %v714 = vld [vmem:[#allocation8 + $0x78] sm:$0xff]
    %v715 = vld [vmem:[#allocation8 + $0x80] sm:$0xff]
    %v716 = vld [vmem:[#allocation8 + $0x88] sm:$0xff]
    %v717 = vld [vmem:[#allocation8 + $0x90] sm:$0xff]
    %v718 = vld [vmem:[#allocation8 + $0x98] sm:$0xff]
    %v719 = vld [vmem:[#allocation8 + $0xa0] sm:$0xff]
    %v720 = vld [vmem:[#allocation8 + $0xa8] sm:$0xff]
    %v721 = vld [vmem:[#allocation8 + $0xb0] sm:$0xff]
    %v722 = vld [vmem:[#allocation8 + $0xb8] sm:$0xff]
    %v723 = vld [vmem:[#allocation8 + $0xc0] sm:$0xff]
    %v724 = vld [vmem:[#allocation8 + $0xc8] sm:$0xff]
    %v725 = vld [vmem:[#allocation8 + $0xd0] sm:$0xff]
    %v726 = vld [vmem:[#allocation8 + $0xd8] sm:$0xff]
    %v727 = vld [vmem:[#allocation8 + $0xe0] sm:$0xff]
    %v728 = vld [vmem:[#allocation8 + $0xe8] sm:$0xff]
    %v729 = vld [vmem:[#allocation8 + $0xf0] sm:$0xff]
    %v730 = vld [vmem:[#allocation8 + $0xf8] sm:$0xff]
    %v731 = vld [vmem:[#allocation8 + $0x100] sm:$0xff]
    %v732 = vld [vmem:[#allocation8 + $0x108] sm:$0xff]
    %v733 = vld [vmem:[#allocation8 + $0x110] sm:$0xff]
    %v734 = vld [vmem:[#allocation8 + $0x118] sm:$0xff]
    %v735 = vld [vmem:[#allocation8 + $0x120] sm:$0xff]
    %v736 = vld [vmem:[#allocation8 + $0x128] sm:$0xff]
    %v737 = vld [vmem:[#allocation8 + $0x130] sm:$0xff]
    %v738 = vld [vmem:[#allocation8 + $0x138] sm:$0xff]
    %v739 = vld [vmem:[#allocation8 + $0x140] sm:$0xff]
    %v740 = vld [vmem:[#allocation8 + $0x148] sm:$0xff]
    %v741 = vld [vmem:[#allocation8 + $0x150] sm:$0xff]
    %v742 = vld [vmem:[#allocation8 + $0x158] sm:$0xff]
    %v743 = vld [vmem:[#allocation8 + $0x160] sm:$0xff]
    %v744 = vld [vmem:[#allocation8 + $0x168] sm:$0xff]
    %v745 = vld [vmem:[#allocation8 + $0x170] sm:$0xff]
    %v746 = vld [vmem:[#allocation8 + $0x178] sm:$0xff]
    %v747 = vld [vmem:[#allocation8 + $0x180] sm:$0xff]
    %v748 = vld [vmem:[#allocation8 + $0x188] sm:$0xff]
    %v749 = vld [vmem:[#allocation8 + $0x190] sm:$0xff]
    %v750 = vld [vmem:[#allocation8 + $0x198] sm:$0xff]
    %v751 = vld [vmem:[#allocation8 + $0x1a0] sm:$0xff]
    %v752 = vld [vmem:[#allocation8 + $0x1a8] sm:$0xff]
    %v753 = vld [vmem:[#allocation8 + $0x1b0] sm:$0xff]
    %v754 = vld [vmem:[#allocation8 + $0x1b8] sm:$0xff]
    %v755 = vld [vmem:[#allocation8 + $0x1c0] sm:$0xff]
    %v756 = vld [vmem:[#allocation8 + $0x1c8] sm:$0xff]
    %v757 = vld [vmem:[#allocation8 + $0x1d0] sm:$0xff]
    %v758 = vld [vmem:[#allocation8 + $0x1d8] sm:$0xff]
    %v759 = vld [vmem:[#allocation8 + $0x1e0] sm:$0xff]
    %v760 = vld [vmem:[#allocation8 + $0x1e8] sm:$0xff]
    %v761 = vld [vmem:[#allocation8 + $0x1f0] sm:$0xff]
    %v762 = vld [vmem:[#allocation8 + $0x1f8] sm:$0xff]
    %v763 = vld [vmem:[#allocation8 + $0x200] sm:$0xff]
    %v764 = vld [vmem:[#allocation8 + $0x208] sm:$0xff]
    %v765 = vld [vmem:[#allocation8 + $0x210] sm:$0xff]
    %v766 = vld [vmem:[#allocation8 + $0x218] sm:$0xff]
    %v767 = vld [vmem:[#allocation8 + $0x220] sm:$0xff]
    %v768 = vld [vmem:[#allocation8 + $0x228] sm:$0xff]
    %v769 = vld [vmem:[#allocation8 + $0x230] sm:$0xff]
    %v770 = vld [vmem:[#allocation8 + $0x238] sm:$0xff]
    %v771 = vld [vmem:[#allocation8 + $0x240] sm:$0xff]
    %v772 = vld [vmem:[#allocation8 + $0x248] sm:$0xff]
    %v773 = vld [vmem:[#allocation8 + $0x250] sm:$0xff]
    %v774 = vld [vmem:[#allocation8 + $0x258] sm:$0xff]
    %v775 = vld [vmem:[#allocation8 + $0x260] sm:$0xff]
    %v776 = vld [vmem:[#allocation8 + $0x268] sm:$0xff]
    %v777 = vld [vmem:[#allocation8 + $0x270] sm:$0xff]
    %v778 = vld [vmem:[#allocation8 + $0x278] sm:$0xff]
    %v779 = vld [vmem:[#allocation8 + $0x280] sm:$0xff]
    %v780 = vld [vmem:[#allocation8 + $0x288] sm:$0xff]
    %v781 = vld [vmem:[#allocation8 + $0x290] sm:$0xff]
    %v782 = vld [vmem:[#allocation8 + $0x298] sm:$0xff]
    %v783 = vld [vmem:[#allocation8 + $0x2a0] sm:$0xff]
    %v784 = vld [vmem:[#allocation8 + $0x2a8] sm:$0xff]
    %v785 = vld [vmem:[#allocation8 + $0x2b0] sm:$0xff]
    %v786 = vld [vmem:[#allocation8 + $0x2b8] sm:$0xff]
    %v787 = vld [vmem:[#allocation8 + $0x2c0] sm:$0xff]
    %v788 = vld [vmem:[#allocation8 + $0x2c8] sm:$0xff]
    %v789 = vld [vmem:[#allocation8 + $0x2d0] sm:$0xff]
    %v790 = vld [vmem:[#allocation8 + $0x2d8] sm:$0xff]
    %v791 = vld [vmem:[#allocation8 + $0x2e0] sm:$0xff]
    %v792 = vld [vmem:[#allocation8 + $0x2e8] sm:$0xff]
    %v793 = vld [vmem:[#allocation8 + $0x2f0] sm:$0xff]
    %v794 = vld [vmem:[#allocation8 + $0x2f8] sm:$0xff]
    %v795 = vld [vmem:[#allocation8 + $0x300] sm:$0xff]
    %v796 = vld [vmem:[#allocation8 + $0x308] sm:$0xff]
    %v797 = vld [vmem:[#allocation8 + $0x310] sm:$0xff]
    %v798 = vld [vmem:[#allocation8 + $0x318] sm:$0xff]
    %v799 = vld [vmem:[#allocation8 + $0x320] sm:$0xff]
    %v800 = vld [vmem:[#allocation8 + $0x328] sm:$0xff]
    %v801 = vld [vmem:[#allocation8 + $0x330] sm:$0xff]
    %v802 = vld [vmem:[#allocation8 + $0x338] sm:$0xff]
    %v803 = vld [vmem:[#allocation8 + $0x340] sm:$0xff]
    %v804 = vld [vmem:[#allocation8 + $0x348] sm:$0xff]
    %v805 = vld [vmem:[#allocation8 + $0x350] sm:$0xff]
    %v806 = vld [vmem:[#allocation8 + $0x358] sm:$0xff]
    %v807 = vld [vmem:[#allocation8 + $0x360] sm:$0xff]
    %v808 = vld [vmem:[#allocation8 + $0x368] sm:$0xff]
    %v809 = vld [vmem:[#allocation8 + $0x370] sm:$0xff]
    %v810 = vld [vmem:[#allocation8 + $0x378] sm:$0xff]
    %v811 = vld [vmem:[#allocation8 + $0x380] sm:$0xff]
    %v812 = vld [vmem:[#allocation8 + $0x388] sm:$0xff]
    %v813 = vld [vmem:[#allocation8 + $0x390] sm:$0xff]
    %v814 = vld [vmem:[#allocation8 + $0x398] sm:$0xff]
    %v815 = vld [vmem:[#allocation8 + $0x3a0] sm:$0xff]
    %v816 = vld [vmem:[#allocation8 + $0x3a8] sm:$0xff]
    %v817 = vld [vmem:[#allocation8 + $0x3b0] sm:$0xff]
    %v818 = vld [vmem:[#allocation8 + $0x3b8] sm:$0xff]
    %v819 = vld [vmem:[#allocation8 + $0x3c0] sm:$0xff]
    %v820 = vld [vmem:[#allocation8 + $0x3c8] sm:$0xff]
    %v821 = vld [vmem:[#allocation8 + $0x3d0] sm:$0xff]
    %v822 = vld [vmem:[#allocation8 + $0x3d8] sm:$0xff]
    %v823 = vld [vmem:[#allocation8 + $0x3e0] sm:$0xff]
    %v824 = vld [vmem:[#allocation8 + $0x3e8] sm:$0xff]
    %v825 = vld [vmem:[#allocation8 + $0x3f0] sm:$0xff]
    %v826 = vld [vmem:[#allocation8 + $0x3f8] sm:$0xff]
    %v827 = vld [vmem:[#allocation8 + $0x400] sm:$0xff]
    %v828 = vld [vmem:[#allocation8 + $0x408] sm:$0xff]
    %v829 = vld [vmem:[#allocation8 + $0x410] sm:$0xff]
    %v830 = vld [vmem:[#allocation8 + $0x418] sm:$0xff]
    %v831 = vld [vmem:[#allocation8 + $0x420] sm:$0xff]
    %v832 = vld [vmem:[#allocation8 + $0x428] sm:$0xff]
    %v833 = vld [vmem:[#allocation8 + $0x430] sm:$0xff]
    %v834 = vld [vmem:[#allocation8 + $0x438] sm:$0xff]
    %v835 = vld [vmem:[#allocation8 + $0x440] sm:$0xff]
    %v836 = vld [vmem:[#allocation8 + $0x448] sm:$0xff]
    %v837 = vld [vmem:[#allocation8 + $0x450] sm:$0xff]
    %v838 = vld [vmem:[#allocation8 + $0x458] sm:$0xff]
    %v839 = vld [vmem:[#allocation8 + $0x460] sm:$0xff]
    %v840 = vld [vmem:[#allocation8 + $0x468] sm:$0xff]
    %v841 = vld [vmem:[#allocation8 + $0x470] sm:$0xff]
    %v842 = vld [vmem:[#allocation8 + $0x478] sm:$0xff]
    %v843 = vld [vmem:[#allocation8 + $0x480] sm:$0xff]
    %v844 = vld [vmem:[#allocation8 + $0x488] sm:$0xff]
    %v845 = vld [vmem:[#allocation8 + $0x490] sm:$0xff]
    %v846 = vld [vmem:[#allocation8 + $0x498] sm:$0xff]
    %v847 = vld [vmem:[#allocation8 + $0x4a0] sm:$0xff]
    %v848 = vld [vmem:[#allocation8 + $0x4a8] sm:$0xff]
    %v849 = vld [vmem:[#allocation8 + $0x4b0] sm:$0xff]
    %v850 = vld [vmem:[#allocation8 + $0x4b8] sm:$0xff]
    %v851 = vld [vmem:[#allocation8 + $0x4c0] sm:$0xff]
    %v852 = vld [vmem:[#allocation8 + $0x4c8] sm:$0xff]
    %v853 = vld [vmem:[#allocation8 + $0x4d0] sm:$0xff]
    %v854 = vld [vmem:[#allocation8 + $0x4d8] sm:$0xff]
    %v855 = vld [vmem:[#allocation8 + $0x4e0] sm:$0xff]
    %v856 = vld [vmem:[#allocation8 + $0x4e8] sm:$0xff]
    %v857 = vld [vmem:[#allocation8 + $0x4f0] sm:$0xff]
    %v858 = vld [vmem:[#allocation8 + $0x4f8] sm:$0xff]
    %v859 = vld [vmem:[#allocation8 + $0x500] sm:$0xff]
    %v860 = vld [vmem:[#allocation8 + $0x508] sm:$0xff]
    %v861 = vld [vmem:[#allocation8 + $0x510] sm:$0xff]
    %v862 = vld [vmem:[#allocation8 + $0x518] sm:$0xff]
    %v863 = vld [vmem:[#allocation8 + $0x520] sm:$0xff]
    %v864 = vld [vmem:[#allocation8 + $0x528] sm:$0xff]
    %v865 = vld [vmem:[#allocation8 + $0x530] sm:$0xff]
    %v866 = vld [vmem:[#allocation8 + $0x538] sm:$0xff]
    %v867 = vld [vmem:[#allocation8 + $0x540] sm:$0xff]
    %v868 = vld [vmem:[#allocation8 + $0x548] sm:$0xff]
    %v869 = vld [vmem:[#allocation8 + $0x550] sm:$0xff]
    %v870 = vld [vmem:[#allocation8 + $0x558] sm:$0xff]
    %v871 = vld [vmem:[#allocation8 + $0x560] sm:$0xff]
    %v872 = vld [vmem:[#allocation8 + $0x568] sm:$0xff]
    %v873 = vld [vmem:[#allocation8 + $0x570] sm:$0xff]
    %v874 = vld [vmem:[#allocation8 + $0x578] sm:$0xff]
    %v875 = vld [vmem:[#allocation8 + $0x580] sm:$0xff]
    %v876 = vld [vmem:[#allocation8 + $0x588] sm:$0xff]
    %v877 = vld [vmem:[#allocation8 + $0x590] sm:$0xff]
    %v878 = vld [vmem:[#allocation8 + $0x598] sm:$0xff]
    %v879 = vld [vmem:[#allocation8 + $0x5a0] sm:$0xff]
    %v880 = vld [vmem:[#allocation8 + $0x5a8] sm:$0xff]
    %v881 = vld [vmem:[#allocation8 + $0x5b0] sm:$0xff]
    %v882 = vld [vmem:[#allocation8 + $0x5b8] sm:$0xff]
    %v883 = vld [vmem:[#allocation8 + $0x5c0] sm:$0xff]
    %v884 = vld [vmem:[#allocation8 + $0x5c8] sm:$0xff]
    %v885 = vld [vmem:[#allocation8 + $0x5d0] sm:$0xff]
    %v886 = vld [vmem:[#allocation8 + $0x5d8] sm:$0xff]
    %v887 = vld [vmem:[#allocation8 + $0x5e0] sm:$0xff]
    %v888 = vld [vmem:[#allocation8 + $0x5e8] sm:$0xff]
    %v889 = vld [vmem:[#allocation8 + $0x5f0] sm:$0xff]
    %v890 = vld [vmem:[#allocation8 + $0x5f8] sm:$0xff]
    %v891 = vld [vmem:[#allocation8 + $0x600] sm:$0xff]
    %v892 = vld [vmem:[#allocation8 + $0x608] sm:$0xff]
    %v893 = vld [vmem:[#allocation8 + $0x610] sm:$0xff]
    %v894 = vld [vmem:[#allocation8 + $0x618] sm:$0xff]
    %v895 = vld [vmem:[#allocation8 + $0x620] sm:$0xff]
    %v896 = vld [vmem:[#allocation8 + $0x628] sm:$0xff]
    %v897 = vld [vmem:[#allocation8 + $0x630] sm:$0xff]
    %v898 = vld [vmem:[#allocation8 + $0x638] sm:$0xff]
    %v899 = vld [vmem:[#allocation8 + $0x640] sm:$0xff]
    %v900 = vld [vmem:[#allocation8 + $0x648] sm:$0xff]
    %v901 = vld [vmem:[#allocation8 + $0x650] sm:$0xff]
    %v902 = vld [vmem:[#allocation8 + $0x658] sm:$0xff]
    %v903 = vld [vmem:[#allocation8 + $0x660] sm:$0xff]
    %v904 = vld [vmem:[#allocation8 + $0x668] sm:$0xff]
    %v905 = vld [vmem:[#allocation8 + $0x670] sm:$0xff]
    %v906 = vld [vmem:[#allocation8 + $0x678] sm:$0xff]
    %v907 = vld [vmem:[#allocation8 + $0x680] sm:$0xff]
    %v908 = vld [vmem:[#allocation8 + $0x688] sm:$0xff]
    %v909 = vld [vmem:[#allocation8 + $0x690] sm:$0xff]
    %v910 = vld [vmem:[#allocation8 + $0x698] sm:$0xff]
    %v911 = vld [vmem:[#allocation8 + $0x6a0] sm:$0xff]
    %v912 = vld [vmem:[#allocation8 + $0x6a8] sm:$0xff]
    %v913 = vld [vmem:[#allocation8 + $0x6b0] sm:$0xff]
    %v914 = vld [vmem:[#allocation8 + $0x6b8] sm:$0xff]
    %v915 = vld [vmem:[#allocation8 + $0x6c0] sm:$0xff]
    %v916 = vld [vmem:[#allocation8 + $0x6c8] sm:$0xff]
    %v917 = vld [vmem:[#allocation8 + $0x6d0] sm:$0xff]
    %v918 = vld [vmem:[#allocation8 + $0x6d8] sm:$0xff]
    %v919 = vld [vmem:[#allocation8 + $0x6e0] sm:$0xff]
    %v920 = vld [vmem:[#allocation8 + $0x6e8] sm:$0xff]
    %v921 = vld [vmem:[#allocation8 + $0x6f0] sm:$0xff]
    %v922 = vld [vmem:[#allocation8 + $0x6f8] sm:$0xff]
    %v923 = vld [vmem:[#allocation8 + $0x700] sm:$0xff]
    %v924 = vld [vmem:[#allocation8 + $0x708] sm:$0xff]
    %v925 = vld [vmem:[#allocation8 + $0x710] sm:$0xff]
    %v926 = vld [vmem:[#allocation8 + $0x718] sm:$0xff]
    %v927 = vld [vmem:[#allocation8 + $0x720] sm:$0xff]
    %v928 = vld [vmem:[#allocation8 + $0x728] sm:$0xff]
    %v929 = vld [vmem:[#allocation8 + $0x730] sm:$0xff]
    %v930 = vld [vmem:[#allocation8 + $0x738] sm:$0xff]
    %v931 = vld [vmem:[#allocation8 + $0x740] sm:$0xff]
    %v932 = vld [vmem:[#allocation8 + $0x748] sm:$0xff]
    %v933 = vld [vmem:[#allocation8 + $0x750] sm:$0xff]
    %v934 = vld [vmem:[#allocation8 + $0x758] sm:$0xff]
    %v935 = vld [vmem:[#allocation8 + $0x760] sm:$0xff]
    %v936 = vld [vmem:[#allocation8 + $0x768] sm:$0xff]
    %v937 = vld [vmem:[#allocation8 + $0x770] sm:$0xff]
    %v938 = vld [vmem:[#allocation8 + $0x778] sm:$0xff]
    %v939 = vld [vmem:[#allocation8 + $0x780] sm:$0xff]
    %v940 = vld [vmem:[#allocation8 + $0x788] sm:$0xff]
    %v941 = vld [vmem:[#allocation8 + $0x790] sm:$0xff]
    %v942 = vld [vmem:[#allocation8 + $0x798] sm:$0xff]
    %v943 = vld [vmem:[#allocation8 + $0x7a0] sm:$0xff]
    %v944 = vld [vmem:[#allocation8 + $0x7a8] sm:$0xff]
    %v945 = vld [vmem:[#allocation8 + $0x7b0] sm:$0xff]
    %v946 = vld [vmem:[#allocation8 + $0x7b8] sm:$0xff]
    %v947 = vld [vmem:[#allocation8 + $0x7c0] sm:$0xff]
    %v948 = vld [vmem:[#allocation8 + $0x7c8] sm:$0xff]
    %v949 = vld [vmem:[#allocation8 + $0x7d0] sm:$0xff]
    %v950 = vld [vmem:[#allocation8 + $0x7d8] sm:$0xff]
    %v951 = vld [vmem:[#allocation8 + $0x7e0] sm:$0xff]
    %v952 = vld [vmem:[#allocation8 + $0x7e8] sm:$0xff]
    %v953 = vld [vmem:[#allocation8 + $0x7f0] sm:$0xff]
    %v954 = vld [vmem:[#allocation8 + $0x7f8] sm:$0xff]
    %v955 = vld [vmem:[%s4] sm:$0xf]
    %v957 = vlaneseq
    %v958 = vshrl.u32 %v957, 7
    %v959 = vsub.s32 0, %v958
    %v960 = vrot.slane %v955, %v959
    %v961 = vlaneseq
    %v962 = vshrl.u32 %v961, 7
    %v963 = vsub.s32 1, %v962
    %v964 = vrot.slane %v955, %v963
    %v965 = vlaneseq
    %v966 = vshrl.u32 %v965, 7
    %v967 = vsub.s32 2, %v966
    %v968 = vrot.slane %v955, %v967
    %v969 = vlaneseq
    %v970 = vshrl.u32 %v969, 7
    %v971 = vsub.s32 3, %v970
    %v972 = vrot.slane %v955, %v971
    %v1233 = vunpack.c.l.b16 %v699
    %v1234 = vunpack.c.h.b16 %v699
    %v1235 = vunpack.c.l.b16 %v700
    %v1236 = vunpack.c.h.b16 %v700
    %v1237 = vunpack.c.l.b16 %v701
    %v1238 = vunpack.c.h.b16 %v701
    %v1239 = vunpack.c.l.b16 %v702
    %v1240 = vunpack.c.h.b16 %v702
    %v1241 = vunpack.c.l.b16 %v703
    %v1242 = vunpack.c.h.b16 %v703
    %v1243 = vunpack.c.l.b16 %v704
    %v1244 = vunpack.c.h.b16 %v704
    %v1245 = vunpack.c.l.b16 %v705
    %v1246 = vunpack.c.h.b16 %v705
    %v1247 = vunpack.c.l.b16 %v706
    %v1248 = vunpack.c.h.b16 %v706
    %v1249 = vunpack.c.l.b16 %v707
    %v1250 = vunpack.c.h.b16 %v707
    %v1251 = vunpack.c.l.b16 %v708
    %v1252 = vunpack.c.h.b16 %v708
    %v1253 = vunpack.c.l.b16 %v709
    %v1254 = vunpack.c.h.b16 %v709
    %v1255 = vunpack.c.l.b16 %v710
    %v1256 = vunpack.c.h.b16 %v710
    %v1257 = vunpack.c.l.b16 %v711
    %v1258 = vunpack.c.h.b16 %v711
    %v1259 = vunpack.c.l.b16 %v712
    %v1260 = vunpack.c.h.b16 %v712
    %v1261 = vunpack.c.l.b16 %v713
    %v1262 = vunpack.c.h.b16 %v713
    %v1263 = vunpack.c.l.b16 %v714
    %v1264 = vunpack.c.h.b16 %v714
    %v1265 = vunpack.c.l.b16 %v715
    %v1266 = vunpack.c.h.b16 %v715
    %v1267 = vunpack.c.l.b16 %v716
    %v1268 = vunpack.c.h.b16 %v716
    %v1269 = vunpack.c.l.b16 %v717
    %v1270 = vunpack.c.h.b16 %v717
    %v1271 = vunpack.c.l.b16 %v718
    %v1272 = vunpack.c.h.b16 %v718
    %v1273 = vunpack.c.l.b16 %v719
    %v1274 = vunpack.c.h.b16 %v719
    %v1275 = vunpack.c.l.b16 %v720
    %v1276 = vunpack.c.h.b16 %v720
    %v1277 = vunpack.c.l.b16 %v721
    %v1278 = vunpack.c.h.b16 %v721
    %v1279 = vunpack.c.l.b16 %v722
    %v1280 = vunpack.c.h.b16 %v722
    %v1281 = vunpack.c.l.b16 %v723
    %v1282 = vunpack.c.h.b16 %v723
    %v1283 = vunpack.c.l.b16 %v724
    %v1284 = vunpack.c.h.b16 %v724
    %v1285 = vunpack.c.l.b16 %v725
    %v1286 = vunpack.c.h.b16 %v725
    %v1287 = vunpack.c.l.b16 %v726
    %v1288 = vunpack.c.h.b16 %v726
    %v1289 = vunpack.c.l.b16 %v727
    %v1290 = vunpack.c.h.b16 %v727
    %v1291 = vunpack.c.l.b16 %v728
    %v1292 = vunpack.c.h.b16 %v728
    %v1293 = vunpack.c.l.b16 %v729
    %v1294 = vunpack.c.h.b16 %v729
    %v1295 = vunpack.c.l.b16 %v730
    %v1296 = vunpack.c.h.b16 %v730
    %v1297 = vunpack.c.l.b16 %v731
    %v1298 = vunpack.c.h.b16 %v731
    %v1299 = vunpack.c.l.b16 %v732
    %v1300 = vunpack.c.h.b16 %v732
    %v1301 = vunpack.c.l.b16 %v733
    %v1302 = vunpack.c.h.b16 %v733
    %v1303 = vunpack.c.l.b16 %v734
    %v1304 = vunpack.c.h.b16 %v734
    %v1305 = vunpack.c.l.b16 %v735
    %v1306 = vunpack.c.h.b16 %v735
    %v1307 = vunpack.c.l.b16 %v736
    %v1308 = vunpack.c.h.b16 %v736
    %v1309 = vunpack.c.l.b16 %v737
    %v1310 = vunpack.c.h.b16 %v737
    %v1311 = vunpack.c.l.b16 %v738
    %v1312 = vunpack.c.h.b16 %v738
    %v1313 = vunpack.c.l.b16 %v739
    %v1314 = vunpack.c.h.b16 %v739
    %v1315 = vunpack.c.l.b16 %v740
    %v1316 = vunpack.c.h.b16 %v740
    %v1317 = vunpack.c.l.b16 %v741
    %v1318 = vunpack.c.h.b16 %v741
    %v1319 = vunpack.c.l.b16 %v742
    %v1320 = vunpack.c.h.b16 %v742
    %v1321 = vunpack.c.l.b16 %v743
    %v1322 = vunpack.c.h.b16 %v743
    %v1323 = vunpack.c.l.b16 %v744
    %v1324 = vunpack.c.h.b16 %v744
    %v1325 = vunpack.c.l.b16 %v745
    %v1326 = vunpack.c.h.b16 %v745
    %v1327 = vunpack.c.l.b16 %v746
    %v1328 = vunpack.c.h.b16 %v746
    %v1329 = vunpack.c.l.b16 %v747
    %v1330 = vunpack.c.h.b16 %v747
    %v1331 = vunpack.c.l.b16 %v748
    %v1332 = vunpack.c.h.b16 %v748
    %v1333 = vunpack.c.l.b16 %v749
    %v1334 = vunpack.c.h.b16 %v749
    %v1335 = vunpack.c.l.b16 %v750
    %v1336 = vunpack.c.h.b16 %v750
    %v1337 = vunpack.c.l.b16 %v751
    %v1338 = vunpack.c.h.b16 %v751
    %v1339 = vunpack.c.l.b16 %v752
    %v1340 = vunpack.c.h.b16 %v752
    %v1341 = vunpack.c.l.b16 %v753
    %v1342 = vunpack.c.h.b16 %v753
    %v1343 = vunpack.c.l.b16 %v754
    %v1344 = vunpack.c.h.b16 %v754
    %v1345 = vunpack.c.l.b16 %v755
    %v1346 = vunpack.c.h.b16 %v755
    %v1347 = vunpack.c.l.b16 %v756
    %v1348 = vunpack.c.h.b16 %v756
    %v1349 = vunpack.c.l.b16 %v757
    %v1350 = vunpack.c.h.b16 %v757
    %v1351 = vunpack.c.l.b16 %v758
    %v1352 = vunpack.c.h.b16 %v758
    %v1353 = vunpack.c.l.b16 %v759
    %v1354 = vunpack.c.h.b16 %v759
    %v1355 = vunpack.c.l.b16 %v760
    %v1356 = vunpack.c.h.b16 %v760
    %v1357 = vunpack.c.l.b16 %v761
    %v1358 = vunpack.c.h.b16 %v761
    %v1359 = vunpack.c.l.b16 %v762
    %v1360 = vunpack.c.h.b16 %v762
    %v1361 = vunpack.c.l.b16 %v763
    %v1362 = vunpack.c.h.b16 %v763
    %v1363 = vunpack.c.l.b16 %v764
    %v1364 = vunpack.c.h.b16 %v764
    %v1365 = vunpack.c.l.b16 %v765
    %v1366 = vunpack.c.h.b16 %v765
    %v1367 = vunpack.c.l.b16 %v766
    %v1368 = vunpack.c.h.b16 %v766
    %v1369 = vunpack.c.l.b16 %v767
    %v1370 = vunpack.c.h.b16 %v767
    %v1371 = vunpack.c.l.b16 %v768
    %v1372 = vunpack.c.h.b16 %v768
    %v1373 = vunpack.c.l.b16 %v769
    %v1374 = vunpack.c.h.b16 %v769
    %v1375 = vunpack.c.l.b16 %v770
    %v1376 = vunpack.c.h.b16 %v770
    %v1377 = vunpack.c.l.b16 %v771
    %v1378 = vunpack.c.h.b16 %v771
    %v1379 = vunpack.c.l.b16 %v772
    %v1380 = vunpack.c.h.b16 %v772
    %v1381 = vunpack.c.l.b16 %v773
    %v1382 = vunpack.c.h.b16 %v773
    %v1383 = vunpack.c.l.b16 %v774
    %v1384 = vunpack.c.h.b16 %v774
    %v1385 = vunpack.c.l.b16 %v775
    %v1386 = vunpack.c.h.b16 %v775
    %v1387 = vunpack.c.l.b16 %v776
    %v1388 = vunpack.c.h.b16 %v776
    %v1389 = vunpack.c.l.b16 %v777
    %v1390 = vunpack.c.h.b16 %v777
    %v1391 = vunpack.c.l.b16 %v778
    %v1392 = vunpack.c.h.b16 %v778
    %v1393 = vunpack.c.l.b16 %v779
    %v1394 = vunpack.c.h.b16 %v779
    %v1395 = vunpack.c.l.b16 %v780
    %v1396 = vunpack.c.h.b16 %v780
    %v1397 = vunpack.c.l.b16 %v781
    %v1398 = vunpack.c.h.b16 %v781
    %v1399 = vunpack.c.l.b16 %v782
    %v1400 = vunpack.c.h.b16 %v782
    %v1401 = vunpack.c.l.b16 %v783
    %v1402 = vunpack.c.h.b16 %v783
    %v1403 = vunpack.c.l.b16 %v784
    %v1404 = vunpack.c.h.b16 %v784
    %v1405 = vunpack.c.l.b16 %v785
    %v1406 = vunpack.c.h.b16 %v785
    %v1407 = vunpack.c.l.b16 %v786
    %v1408 = vunpack.c.h.b16 %v786
    %v1409 = vunpack.c.l.b16 %v787
    %v1410 = vunpack.c.h.b16 %v787
    %v1411 = vunpack.c.l.b16 %v788
    %v1412 = vunpack.c.h.b16 %v788
    %v1413 = vunpack.c.l.b16 %v789
    %v1414 = vunpack.c.h.b16 %v789
    %v1415 = vunpack.c.l.b16 %v790
    %v1416 = vunpack.c.h.b16 %v790
    %v1417 = vunpack.c.l.b16 %v791
    %v1418 = vunpack.c.h.b16 %v791
    %v1419 = vunpack.c.l.b16 %v792
    %v1420 = vunpack.c.h.b16 %v792
    %v1421 = vunpack.c.l.b16 %v793
    %v1422 = vunpack.c.h.b16 %v793
    %v1423 = vunpack.c.l.b16 %v794
    %v1424 = vunpack.c.h.b16 %v794
    %v1425 = vunpack.c.l.b16 %v795
    %v1426 = vunpack.c.h.b16 %v795
    %v1427 = vunpack.c.l.b16 %v796
    %v1428 = vunpack.c.h.b16 %v796
    %v1429 = vunpack.c.l.b16 %v797
    %v1430 = vunpack.c.h.b16 %v797
    %v1431 = vunpack.c.l.b16 %v798
    %v1432 = vunpack.c.h.b16 %v798
    %v1433 = vunpack.c.l.b16 %v799
    %v1434 = vunpack.c.h.b16 %v799
    %v1435 = vunpack.c.l.b16 %v800
    %v1436 = vunpack.c.h.b16 %v800
    %v1437 = vunpack.c.l.b16 %v801
    %v1438 = vunpack.c.h.b16 %v801
    %v1439 = vunpack.c.l.b16 %v802
    %v1440 = vunpack.c.h.b16 %v802
    %v1441 = vunpack.c.l.b16 %v803
    %v1442 = vunpack.c.h.b16 %v803
    %v1443 = vunpack.c.l.b16 %v804
    %v1444 = vunpack.c.h.b16 %v804
    %v1445 = vunpack.c.l.b16 %v805
    %v1446 = vunpack.c.h.b16 %v805
    %v1447 = vunpack.c.l.b16 %v806
    %v1448 = vunpack.c.h.b16 %v806
    %v1449 = vunpack.c.l.b16 %v807
    %v1450 = vunpack.c.h.b16 %v807
    %v1451 = vunpack.c.l.b16 %v808
    %v1452 = vunpack.c.h.b16 %v808
    %v1453 = vunpack.c.l.b16 %v809
    %v1454 = vunpack.c.h.b16 %v809
    %v1455 = vunpack.c.l.b16 %v810
    %v1456 = vunpack.c.h.b16 %v810
    %v1457 = vunpack.c.l.b16 %v811
    %v1458 = vunpack.c.h.b16 %v811
    %v1459 = vunpack.c.l.b16 %v812
    %v1460 = vunpack.c.h.b16 %v812
    %v1461 = vunpack.c.l.b16 %v813
    %v1462 = vunpack.c.h.b16 %v813
    %v1463 = vunpack.c.l.b16 %v814
    %v1464 = vunpack.c.h.b16 %v814
    %v1465 = vunpack.c.l.b16 %v815
    %v1466 = vunpack.c.h.b16 %v815
    %v1467 = vunpack.c.l.b16 %v816
    %v1468 = vunpack.c.h.b16 %v816
    %v1469 = vunpack.c.l.b16 %v817
    %v1470 = vunpack.c.h.b16 %v817
    %v1471 = vunpack.c.l.b16 %v818
    %v1472 = vunpack.c.h.b16 %v818
    %v1473 = vunpack.c.l.b16 %v819
    %v1474 = vunpack.c.h.b16 %v819
    %v1475 = vunpack.c.l.b16 %v820
    %v1476 = vunpack.c.h.b16 %v820
    %v1477 = vunpack.c.l.b16 %v821
    %v1478 = vunpack.c.h.b16 %v821
    %v1479 = vunpack.c.l.b16 %v822
    %v1480 = vunpack.c.h.b16 %v822
    %v1481 = vunpack.c.l.b16 %v823
    %v1482 = vunpack.c.h.b16 %v823
    %v1483 = vunpack.c.l.b16 %v824
    %v1484 = vunpack.c.h.b16 %v824
    %v1485 = vunpack.c.l.b16 %v825
    %v1486 = vunpack.c.h.b16 %v825
    %v1487 = vunpack.c.l.b16 %v826
    %v1488 = vunpack.c.h.b16 %v826
    %v1489 = vunpack.c.l.b16 %v827
    %v1490 = vunpack.c.h.b16 %v827
    %v1491 = vunpack.c.l.b16 %v828
    %v1492 = vunpack.c.h.b16 %v828
    %v1493 = vunpack.c.l.b16 %v829
    %v1494 = vunpack.c.h.b16 %v829
    %v1495 = vunpack.c.l.b16 %v830
    %v1496 = vunpack.c.h.b16 %v830
    %v1497 = vunpack.c.l.b16 %v831
    %v1498 = vunpack.c.h.b16 %v831
    %v1499 = vunpack.c.l.b16 %v832
    %v1500 = vunpack.c.h.b16 %v832
    %v1501 = vunpack.c.l.b16 %v833
    %v1502 = vunpack.c.h.b16 %v833
    %v1503 = vunpack.c.l.b16 %v834
    %v1504 = vunpack.c.h.b16 %v834
    %v1505 = vunpack.c.l.b16 %v835
    %v1506 = vunpack.c.h.b16 %v835
    %v1507 = vunpack.c.l.b16 %v836
    %v1508 = vunpack.c.h.b16 %v836
    %v1509 = vunpack.c.l.b16 %v837
    %v1510 = vunpack.c.h.b16 %v837
    %v1511 = vunpack.c.l.b16 %v838
    %v1512 = vunpack.c.h.b16 %v838
    %v1513 = vunpack.c.l.b16 %v839
    %v1514 = vunpack.c.h.b16 %v839
    %v1515 = vunpack.c.l.b16 %v840
    %v1516 = vunpack.c.h.b16 %v840
    %v1517 = vunpack.c.l.b16 %v841
    %v1518 = vunpack.c.h.b16 %v841
    %v1519 = vunpack.c.l.b16 %v842
    %v1520 = vunpack.c.h.b16 %v842
    %v1521 = vunpack.c.l.b16 %v843
    %v1522 = vunpack.c.h.b16 %v843
    %v1523 = vunpack.c.l.b16 %v844
    %v1524 = vunpack.c.h.b16 %v844
    %v1525 = vunpack.c.l.b16 %v845
    %v1526 = vunpack.c.h.b16 %v845
    %v1527 = vunpack.c.l.b16 %v846
    %v1528 = vunpack.c.h.b16 %v846
    %v1529 = vunpack.c.l.b16 %v847
    %v1530 = vunpack.c.h.b16 %v847
    %v1531 = vunpack.c.l.b16 %v848
    %v1532 = vunpack.c.h.b16 %v848
    %v1533 = vunpack.c.l.b16 %v849
    %v1534 = vunpack.c.h.b16 %v849
    %v1535 = vunpack.c.l.b16 %v850
    %v1536 = vunpack.c.h.b16 %v850
    %v1537 = vunpack.c.l.b16 %v851
    %v1538 = vunpack.c.h.b16 %v851
    %v1539 = vunpack.c.l.b16 %v852
    %v1540 = vunpack.c.h.b16 %v852
    %v1541 = vunpack.c.l.b16 %v853
    %v1542 = vunpack.c.h.b16 %v853
    %v1543 = vunpack.c.l.b16 %v854
    %v1544 = vunpack.c.h.b16 %v854
    %v1545 = vunpack.c.l.b16 %v855
    %v1546 = vunpack.c.h.b16 %v855
    %v1547 = vunpack.c.l.b16 %v856
    %v1548 = vunpack.c.h.b16 %v856
    %v1549 = vunpack.c.l.b16 %v857
    %v1550 = vunpack.c.h.b16 %v857
    %v1551 = vunpack.c.l.b16 %v858
    %v1552 = vunpack.c.h.b16 %v858
    %v1553 = vunpack.c.l.b16 %v859
    %v1554 = vunpack.c.h.b16 %v859
    %v1555 = vunpack.c.l.b16 %v860
    %v1556 = vunpack.c.h.b16 %v860
    %v1557 = vunpack.c.l.b16 %v861
    %v1558 = vunpack.c.h.b16 %v861
    %v1559 = vunpack.c.l.b16 %v862
    %v1560 = vunpack.c.h.b16 %v862
    %v1561 = vunpack.c.l.b16 %v863
    %v1562 = vunpack.c.h.b16 %v863
    %v1563 = vunpack.c.l.b16 %v864
    %v1564 = vunpack.c.h.b16 %v864
    %v1565 = vunpack.c.l.b16 %v865
    %v1566 = vunpack.c.h.b16 %v865
    %v1567 = vunpack.c.l.b16 %v866
    %v1568 = vunpack.c.h.b16 %v866
    %v1569 = vunpack.c.l.b16 %v867
    %v1570 = vunpack.c.h.b16 %v867
    %v1571 = vunpack.c.l.b16 %v868
    %v1572 = vunpack.c.h.b16 %v868
    %v1573 = vunpack.c.l.b16 %v869
    %v1574 = vunpack.c.h.b16 %v869
    %v1575 = vunpack.c.l.b16 %v870
    %v1576 = vunpack.c.h.b16 %v870
    %v1577 = vunpack.c.l.b16 %v871
    %v1578 = vunpack.c.h.b16 %v871
    %v1579 = vunpack.c.l.b16 %v872
    %v1580 = vunpack.c.h.b16 %v872
    %v1581 = vunpack.c.l.b16 %v873
    %v1582 = vunpack.c.h.b16 %v873
    %v1583 = vunpack.c.l.b16 %v874
    %v1584 = vunpack.c.h.b16 %v874
    %v1585 = vunpack.c.l.b16 %v875
    %v1586 = vunpack.c.h.b16 %v875
    %v1587 = vunpack.c.l.b16 %v876
    %v1588 = vunpack.c.h.b16 %v876
    %v1589 = vunpack.c.l.b16 %v877
    %v1590 = vunpack.c.h.b16 %v877
    %v1591 = vunpack.c.l.b16 %v878
    %v1592 = vunpack.c.h.b16 %v878
    %v1593 = vunpack.c.l.b16 %v879
    %v1594 = vunpack.c.h.b16 %v879
    %v1595 = vunpack.c.l.b16 %v880
    %v1596 = vunpack.c.h.b16 %v880
    %v1597 = vunpack.c.l.b16 %v881
    %v1598 = vunpack.c.h.b16 %v881
    %v1599 = vunpack.c.l.b16 %v882
    %v1600 = vunpack.c.h.b16 %v882
    %v1601 = vunpack.c.l.b16 %v883
    %v1602 = vunpack.c.h.b16 %v883
    %v1603 = vunpack.c.l.b16 %v884
    %v1604 = vunpack.c.h.b16 %v884
    %v1605 = vunpack.c.l.b16 %v885
    %v1606 = vunpack.c.h.b16 %v885
    %v1607 = vunpack.c.l.b16 %v886
    %v1608 = vunpack.c.h.b16 %v886
    %v1609 = vunpack.c.l.b16 %v887
    %v1610 = vunpack.c.h.b16 %v887
    %v1611 = vunpack.c.l.b16 %v888
    %v1612 = vunpack.c.h.b16 %v888
    %v1613 = vunpack.c.l.b16 %v889
    %v1614 = vunpack.c.h.b16 %v889
    %v1615 = vunpack.c.l.b16 %v890
    %v1616 = vunpack.c.h.b16 %v890
    %v1617 = vunpack.c.l.b16 %v891
    %v1618 = vunpack.c.h.b16 %v891
    %v1619 = vunpack.c.l.b16 %v892
    %v1620 = vunpack.c.h.b16 %v892
    %v1621 = vunpack.c.l.b16 %v893
    %v1622 = vunpack.c.h.b16 %v893
    %v1623 = vunpack.c.l.b16 %v894
    %v1624 = vunpack.c.h.b16 %v894
    %v1625 = vunpack.c.l.b16 %v895
    %v1626 = vunpack.c.h.b16 %v895
    %v1627 = vunpack.c.l.b16 %v896
    %v1628 = vunpack.c.h.b16 %v896
    %v1629 = vunpack.c.l.b16 %v897
    %v1630 = vunpack.c.h.b16 %v897
    %v1631 = vunpack.c.l.b16 %v898
    %v1632 = vunpack.c.h.b16 %v898
    %v1633 = vunpack.c.l.b16 %v899
    %v1634 = vunpack.c.h.b16 %v899
    %v1635 = vunpack.c.l.b16 %v900
    %v1636 = vunpack.c.h.b16 %v900
    %v1637 = vunpack.c.l.b16 %v901
    %v1638 = vunpack.c.h.b16 %v901
    %v1639 = vunpack.c.l.b16 %v902
    %v1640 = vunpack.c.h.b16 %v902
    %v1641 = vunpack.c.l.b16 %v903
    %v1642 = vunpack.c.h.b16 %v903
    %v1643 = vunpack.c.l.b16 %v904
    %v1644 = vunpack.c.h.b16 %v904
    %v1645 = vunpack.c.l.b16 %v905
    %v1646 = vunpack.c.h.b16 %v905
    %v1647 = vunpack.c.l.b16 %v906
    %v1648 = vunpack.c.h.b16 %v906
    %v1649 = vunpack.c.l.b16 %v907
    %v1650 = vunpack.c.h.b16 %v907
    %v1651 = vunpack.c.l.b16 %v908
    %v1652 = vunpack.c.h.b16 %v908
    %v1653 = vunpack.c.l.b16 %v909
    %v1654 = vunpack.c.h.b16 %v909
    %v1655 = vunpack.c.l.b16 %v910
    %v1656 = vunpack.c.h.b16 %v910
    %v1657 = vunpack.c.l.b16 %v911
    %v1658 = vunpack.c.h.b16 %v911
    %v1659 = vunpack.c.l.b16 %v912
    %v1660 = vunpack.c.h.b16 %v912
    %v1661 = vunpack.c.l.b16 %v913
    %v1662 = vunpack.c.h.b16 %v913
    %v1663 = vunpack.c.l.b16 %v914
    %v1664 = vunpack.c.h.b16 %v914
    %v1665 = vunpack.c.l.b16 %v915
    %v1666 = vunpack.c.h.b16 %v915
    %v1667 = vunpack.c.l.b16 %v916
    %v1668 = vunpack.c.h.b16 %v916
    %v1669 = vunpack.c.l.b16 %v917
    %v1670 = vunpack.c.h.b16 %v917
    %v1671 = vunpack.c.l.b16 %v918
    %v1672 = vunpack.c.h.b16 %v918
    %v1673 = vunpack.c.l.b16 %v919
    %v1674 = vunpack.c.h.b16 %v919
    %v1675 = vunpack.c.l.b16 %v920
    %v1676 = vunpack.c.h.b16 %v920
    %v1677 = vunpack.c.l.b16 %v921
    %v1678 = vunpack.c.h.b16 %v921
    %v1679 = vunpack.c.l.b16 %v922
    %v1680 = vunpack.c.h.b16 %v922
    %v1681 = vunpack.c.l.b16 %v923
    %v1682 = vunpack.c.h.b16 %v923
    %v1683 = vunpack.c.l.b16 %v924
    %v1684 = vunpack.c.h.b16 %v924
    %v1685 = vunpack.c.l.b16 %v925
    %v1686 = vunpack.c.h.b16 %v925
    %v1687 = vunpack.c.l.b16 %v926
    %v1688 = vunpack.c.h.b16 %v926
    %v1689 = vunpack.c.l.b16 %v927
    %v1690 = vunpack.c.h.b16 %v927
    %v1691 = vunpack.c.l.b16 %v928
    %v1692 = vunpack.c.h.b16 %v928
    %v1693 = vunpack.c.l.b16 %v929
    %v1694 = vunpack.c.h.b16 %v929
    %v1695 = vunpack.c.l.b16 %v930
    %v1696 = vunpack.c.h.b16 %v930
    %v1697 = vunpack.c.l.b16 %v931
    %v1698 = vunpack.c.h.b16 %v931
    %v1699 = vunpack.c.l.b16 %v932
    %v1700 = vunpack.c.h.b16 %v932
    %v1701 = vunpack.c.l.b16 %v933
    %v1702 = vunpack.c.h.b16 %v933
    %v1703 = vunpack.c.l.b16 %v934
    %v1704 = vunpack.c.h.b16 %v934
    %v1705 = vunpack.c.l.b16 %v935
    %v1706 = vunpack.c.h.b16 %v935
    %v1707 = vunpack.c.l.b16 %v936
    %v1708 = vunpack.c.h.b16 %v936
    %v1709 = vunpack.c.l.b16 %v937
    %v1710 = vunpack.c.h.b16 %v937
    %v1711 = vunpack.c.l.b16 %v938
    %v1712 = vunpack.c.h.b16 %v938
    %v1713 = vunpack.c.l.b16 %v939
    %v1714 = vunpack.c.h.b16 %v939
    %v1715 = vunpack.c.l.b16 %v940
    %v1716 = vunpack.c.h.b16 %v940
    %v1717 = vunpack.c.l.b16 %v941
    %v1718 = vunpack.c.h.b16 %v941
    %v1719 = vunpack.c.l.b16 %v942
    %v1720 = vunpack.c.h.b16 %v942
    %v1721 = vunpack.c.l.b16 %v943
    %v1722 = vunpack.c.h.b16 %v943
    %v1723 = vunpack.c.l.b16 %v944
    %v1724 = vunpack.c.h.b16 %v944
    %v1725 = vunpack.c.l.b16 %v945
    %v1726 = vunpack.c.h.b16 %v945
    %v1727 = vunpack.c.l.b16 %v946
    %v1728 = vunpack.c.h.b16 %v946
    %v1729 = vunpack.c.l.b16 %v947
    %v1730 = vunpack.c.h.b16 %v947
    %v1731 = vunpack.c.l.b16 %v948
    %v1732 = vunpack.c.h.b16 %v948
    %v1733 = vunpack.c.l.b16 %v949
    %v1734 = vunpack.c.h.b16 %v949
    %v1735 = vunpack.c.l.b16 %v950
    %v1736 = vunpack.c.h.b16 %v950
    %v1737 = vunpack.c.l.b16 %v951
    %v1738 = vunpack.c.h.b16 %v951
    %v1739 = vunpack.c.l.b16 %v952
    %v1740 = vunpack.c.h.b16 %v952
    %v1741 = vunpack.c.l.b16 %v953
    %v1742 = vunpack.c.h.b16 %v953
    %v1743 = vunpack.c.l.b16 %v954
    %v1744 = vunpack.c.h.b16 %v954
    %v1745 = vpack.c.b16 %v1237, %v1233
    %v1746 = vpack.c.b16 %v1238, %v1234
    %v1747 = vpack.c.b16 %v1239, %v1235
    %v1748 = vpack.c.b16 %v1240, %v1236
    %v1749 = vpack.c.b16 %v1245, %v1241
    %v1750 = vpack.c.b16 %v1246, %v1242
    %v1751 = vpack.c.b16 %v1247, %v1243
    %v1752 = vpack.c.b16 %v1248, %v1244
    %v1753 = vpack.c.b16 %v1253, %v1249
    %v1754 = vpack.c.b16 %v1254, %v1250
    %v1755 = vpack.c.b16 %v1255, %v1251
    %v1756 = vpack.c.b16 %v1256, %v1252
    %v1757 = vpack.c.b16 %v1261, %v1257
    %v1758 = vpack.c.b16 %v1262, %v1258
    %v1759 = vpack.c.b16 %v1263, %v1259
    %v1760 = vpack.c.b16 %v1264, %v1260
    %v1761 = vpack.c.b16 %v1269, %v1265
    %v1762 = vpack.c.b16 %v1270, %v1266
    %v1763 = vpack.c.b16 %v1271, %v1267
    %v1764 = vpack.c.b16 %v1272, %v1268
    %v1765 = vpack.c.b16 %v1277, %v1273
    %v1766 = vpack.c.b16 %v1278, %v1274
    %v1767 = vpack.c.b16 %v1279, %v1275
    %v1768 = vpack.c.b16 %v1280, %v1276
    %v1769 = vpack.c.b16 %v1285, %v1281
    %v1770 = vpack.c.b16 %v1286, %v1282
    %v1771 = vpack.c.b16 %v1287, %v1283
    %v1772 = vpack.c.b16 %v1288, %v1284
    %v1773 = vpack.c.b16 %v1293, %v1289
    %v1774 = vpack.c.b16 %v1294, %v1290
    %v1775 = vpack.c.b16 %v1295, %v1291
    %v1776 = vpack.c.b16 %v1296, %v1292
    %v1777 = vpack.c.b16 %v1301, %v1297
    %v1778 = vpack.c.b16 %v1302, %v1298
    %v1779 = vpack.c.b16 %v1303, %v1299
    %v1780 = vpack.c.b16 %v1304, %v1300
    %v1781 = vpack.c.b16 %v1309, %v1305
    %v1782 = vpack.c.b16 %v1310, %v1306
    %v1783 = vpack.c.b16 %v1311, %v1307
    %v1784 = vpack.c.b16 %v1312, %v1308
    %v1785 = vpack.c.b16 %v1317, %v1313
    %v1786 = vpack.c.b16 %v1318, %v1314
    %v1787 = vpack.c.b16 %v1319, %v1315
    %v1788 = vpack.c.b16 %v1320, %v1316
    %v1789 = vpack.c.b16 %v1325, %v1321
    %v1790 = vpack.c.b16 %v1326, %v1322
    %v1791 = vpack.c.b16 %v1327, %v1323
    %v1792 = vpack.c.b16 %v1328, %v1324
    %v1793 = vpack.c.b16 %v1333, %v1329
    %v1794 = vpack.c.b16 %v1334, %v1330
    %v1795 = vpack.c.b16 %v1335, %v1331
    %v1796 = vpack.c.b16 %v1336, %v1332
    %v1797 = vpack.c.b16 %v1341, %v1337
    %v1798 = vpack.c.b16 %v1342, %v1338
    %v1799 = vpack.c.b16 %v1343, %v1339
    %v1800 = vpack.c.b16 %v1344, %v1340
    %v1801 = vpack.c.b16 %v1349, %v1345
    %v1802 = vpack.c.b16 %v1350, %v1346
    %v1803 = vpack.c.b16 %v1351, %v1347
    %v1804 = vpack.c.b16 %v1352, %v1348
    %v1805 = vpack.c.b16 %v1357, %v1353
    %v1806 = vpack.c.b16 %v1358, %v1354
    %v1807 = vpack.c.b16 %v1359, %v1355
    %v1808 = vpack.c.b16 %v1360, %v1356
    %v1809 = vpack.c.b16 %v1365, %v1361
    %v1810 = vpack.c.b16 %v1366, %v1362
    %v1811 = vpack.c.b16 %v1367, %v1363
    %v1812 = vpack.c.b16 %v1368, %v1364
    %v1813 = vpack.c.b16 %v1373, %v1369
    %v1814 = vpack.c.b16 %v1374, %v1370
    %v1815 = vpack.c.b16 %v1375, %v1371
    %v1816 = vpack.c.b16 %v1376, %v1372
    %v1817 = vpack.c.b16 %v1381, %v1377
    %v1818 = vpack.c.b16 %v1382, %v1378
    %v1819 = vpack.c.b16 %v1383, %v1379
    %v1820 = vpack.c.b16 %v1384, %v1380
    %v1821 = vpack.c.b16 %v1389, %v1385
    %v1822 = vpack.c.b16 %v1390, %v1386
    %v1823 = vpack.c.b16 %v1391, %v1387
    %v1824 = vpack.c.b16 %v1392, %v1388
    %v1825 = vpack.c.b16 %v1397, %v1393
    %v1826 = vpack.c.b16 %v1398, %v1394
    %v1827 = vpack.c.b16 %v1399, %v1395
    %v1828 = vpack.c.b16 %v1400, %v1396
    %v1829 = vpack.c.b16 %v1405, %v1401
    %v1830 = vpack.c.b16 %v1406, %v1402
    %v1831 = vpack.c.b16 %v1407, %v1403
    %v1832 = vpack.c.b16 %v1408, %v1404
    %v1833 = vpack.c.b16 %v1413, %v1409
    %v1834 = vpack.c.b16 %v1414, %v1410
    %v1835 = vpack.c.b16 %v1415, %v1411
    %v1836 = vpack.c.b16 %v1416, %v1412
    %v1837 = vpack.c.b16 %v1421, %v1417
    %v1838 = vpack.c.b16 %v1422, %v1418
    %v1839 = vpack.c.b16 %v1423, %v1419
    %v1840 = vpack.c.b16 %v1424, %v1420
    %v1841 = vpack.c.b16 %v1429, %v1425
    %v1842 = vpack.c.b16 %v1430, %v1426
    %v1843 = vpack.c.b16 %v1431, %v1427
    %v1844 = vpack.c.b16 %v1432, %v1428
    %v1845 = vpack.c.b16 %v1437, %v1433
    %v1846 = vpack.c.b16 %v1438, %v1434
    %v1847 = vpack.c.b16 %v1439, %v1435
    %v1848 = vpack.c.b16 %v1440, %v1436
    %v1849 = vpack.c.b16 %v1445, %v1441
    %v1850 = vpack.c.b16 %v1446, %v1442
    %v1851 = vpack.c.b16 %v1447, %v1443
    %v1852 = vpack.c.b16 %v1448, %v1444
    %v1853 = vpack.c.b16 %v1453, %v1449
    %v1854 = vpack.c.b16 %v1454, %v1450
    %v1855 = vpack.c.b16 %v1455, %v1451
    %v1856 = vpack.c.b16 %v1456, %v1452
    %v1857 = vpack.c.b16 %v1461, %v1457
    %v1858 = vpack.c.b16 %v1462, %v1458
    %v1859 = vpack.c.b16 %v1463, %v1459
    %v1860 = vpack.c.b16 %v1464, %v1460
    %v1861 = vpack.c.b16 %v1469, %v1465
    %v1862 = vpack.c.b16 %v1470, %v1466
    %v1863 = vpack.c.b16 %v1471, %v1467
    %v1864 = vpack.c.b16 %v1472, %v1468
    %v1865 = vpack.c.b16 %v1477, %v1473
    %v1866 = vpack.c.b16 %v1478, %v1474
    %v1867 = vpack.c.b16 %v1479, %v1475
    %v1868 = vpack.c.b16 %v1480, %v1476
    %v1869 = vpack.c.b16 %v1485, %v1481
    %v1870 = vpack.c.b16 %v1486, %v1482
    %v1871 = vpack.c.b16 %v1487, %v1483
    %v1872 = vpack.c.b16 %v1488, %v1484
    %v1873 = vpack.c.b16 %v1493, %v1489
    %v1874 = vpack.c.b16 %v1494, %v1490
    %v1875 = vpack.c.b16 %v1495, %v1491
    %v1876 = vpack.c.b16 %v1496, %v1492
    %v1877 = vpack.c.b16 %v1501, %v1497
    %v1878 = vpack.c.b16 %v1502, %v1498
    %v1879 = vpack.c.b16 %v1503, %v1499
    %v1880 = vpack.c.b16 %v1504, %v1500
    %v1881 = vpack.c.b16 %v1509, %v1505
    %v1882 = vpack.c.b16 %v1510, %v1506
    %v1883 = vpack.c.b16 %v1511, %v1507
    %v1884 = vpack.c.b16 %v1512, %v1508
    %v1885 = vpack.c.b16 %v1517, %v1513
    %v1886 = vpack.c.b16 %v1518, %v1514
    %v1887 = vpack.c.b16 %v1519, %v1515
    %v1888 = vpack.c.b16 %v1520, %v1516
    %v1889 = vpack.c.b16 %v1525, %v1521
    %v1890 = vpack.c.b16 %v1526, %v1522
    %v1891 = vpack.c.b16 %v1527, %v1523
    %v1892 = vpack.c.b16 %v1528, %v1524
    %v1893 = vpack.c.b16 %v1533, %v1529
    %v1894 = vpack.c.b16 %v1534, %v1530
    %v1895 = vpack.c.b16 %v1535, %v1531
    %v1896 = vpack.c.b16 %v1536, %v1532
    %v1897 = vpack.c.b16 %v1541, %v1537
    %v1898 = vpack.c.b16 %v1542, %v1538
    %v1899 = vpack.c.b16 %v1543, %v1539
    %v1900 = vpack.c.b16 %v1544, %v1540
    %v1901 = vpack.c.b16 %v1549, %v1545
    %v1902 = vpack.c.b16 %v1550, %v1546
    %v1903 = vpack.c.b16 %v1551, %v1547
    %v1904 = vpack.c.b16 %v1552, %v1548
    %v1905 = vpack.c.b16 %v1557, %v1553
    %v1906 = vpack.c.b16 %v1558, %v1554
    %v1907 = vpack.c.b16 %v1559, %v1555
    %v1908 = vpack.c.b16 %v1560, %v1556
    %v1909 = vpack.c.b16 %v1565, %v1561
    %v1910 = vpack.c.b16 %v1566, %v1562
    %v1911 = vpack.c.b16 %v1567, %v1563
    %v1912 = vpack.c.b16 %v1568, %v1564
    %v1913 = vpack.c.b16 %v1573, %v1569
    %v1914 = vpack.c.b16 %v1574, %v1570
    %v1915 = vpack.c.b16 %v1575, %v1571
    %v1916 = vpack.c.b16 %v1576, %v1572
    %v1917 = vpack.c.b16 %v1581, %v1577
    %v1918 = vpack.c.b16 %v1582, %v1578
    %v1919 = vpack.c.b16 %v1583, %v1579
    %v1920 = vpack.c.b16 %v1584, %v1580
    %v1921 = vpack.c.b16 %v1589, %v1585
    %v1922 = vpack.c.b16 %v1590, %v1586
    %v1923 = vpack.c.b16 %v1591, %v1587
    %v1924 = vpack.c.b16 %v1592, %v1588
    %v1925 = vpack.c.b16 %v1597, %v1593
    %v1926 = vpack.c.b16 %v1598, %v1594
    %v1927 = vpack.c.b16 %v1599, %v1595
    %v1928 = vpack.c.b16 %v1600, %v1596
    %v1929 = vpack.c.b16 %v1605, %v1601
    %v1930 = vpack.c.b16 %v1606, %v1602
    %v1931 = vpack.c.b16 %v1607, %v1603
    %v1932 = vpack.c.b16 %v1608, %v1604
    %v1933 = vpack.c.b16 %v1613, %v1609
    %v1934 = vpack.c.b16 %v1614, %v1610
    %v1935 = vpack.c.b16 %v1615, %v1611
    %v1936 = vpack.c.b16 %v1616, %v1612
    %v1937 = vpack.c.b16 %v1621, %v1617
    %v1938 = vpack.c.b16 %v1622, %v1618
    %v1939 = vpack.c.b16 %v1623, %v1619
    %v1940 = vpack.c.b16 %v1624, %v1620
    %v1941 = vpack.c.b16 %v1629, %v1625
    %v1942 = vpack.c.b16 %v1630, %v1626
    %v1943 = vpack.c.b16 %v1631, %v1627
    %v1944 = vpack.c.b16 %v1632, %v1628
    %v1945 = vpack.c.b16 %v1637, %v1633
    %v1946 = vpack.c.b16 %v1638, %v1634
    %v1947 = vpack.c.b16 %v1639, %v1635
    %v1948 = vpack.c.b16 %v1640, %v1636
    %v1949 = vpack.c.b16 %v1645, %v1641
    %v1950 = vpack.c.b16 %v1646, %v1642
    %v1951 = vpack.c.b16 %v1647, %v1643
    %v1952 = vpack.c.b16 %v1648, %v1644
    %v1953 = vpack.c.b16 %v1653, %v1649
    %v1954 = vpack.c.b16 %v1654, %v1650
    %v1955 = vpack.c.b16 %v1655, %v1651
    %v1956 = vpack.c.b16 %v1656, %v1652
    %v1957 = vpack.c.b16 %v1661, %v1657
    %v1958 = vpack.c.b16 %v1662, %v1658
    %v1959 = vpack.c.b16 %v1663, %v1659
    %v1960 = vpack.c.b16 %v1664, %v1660
    %v1961 = vpack.c.b16 %v1669, %v1665
    %v1962 = vpack.c.b16 %v1670, %v1666
    %v1963 = vpack.c.b16 %v1671, %v1667
    %v1964 = vpack.c.b16 %v1672, %v1668
    %v1965 = vpack.c.b16 %v1677, %v1673
    %v1966 = vpack.c.b16 %v1678, %v1674
    %v1967 = vpack.c.b16 %v1679, %v1675
    %v1968 = vpack.c.b16 %v1680, %v1676
    %v1969 = vpack.c.b16 %v1685, %v1681
    %v1970 = vpack.c.b16 %v1686, %v1682
    %v1971 = vpack.c.b16 %v1687, %v1683
    %v1972 = vpack.c.b16 %v1688, %v1684
    %v1973 = vpack.c.b16 %v1693, %v1689
    %v1974 = vpack.c.b16 %v1694, %v1690
    %v1975 = vpack.c.b16 %v1695, %v1691
    %v1976 = vpack.c.b16 %v1696, %v1692
    %v1977 = vpack.c.b16 %v1701, %v1697
    %v1978 = vpack.c.b16 %v1702, %v1698
    %v1979 = vpack.c.b16 %v1703, %v1699
    %v1980 = vpack.c.b16 %v1704, %v1700
    %v1981 = vpack.c.b16 %v1709, %v1705
    %v1982 = vpack.c.b16 %v1710, %v1706
    %v1983 = vpack.c.b16 %v1711, %v1707
    %v1984 = vpack.c.b16 %v1712, %v1708
    %v1985 = vpack.c.b16 %v1717, %v1713
    %v1986 = vpack.c.b16 %v1718, %v1714
    %v1987 = vpack.c.b16 %v1719, %v1715
    %v1988 = vpack.c.b16 %v1720, %v1716
    %v1989 = vpack.c.b16 %v1725, %v1721
    %v1990 = vpack.c.b16 %v1726, %v1722
    %v1991 = vpack.c.b16 %v1727, %v1723
    %v1992 = vpack.c.b16 %v1728, %v1724
    %v1993 = vpack.c.b16 %v1733, %v1729
    %v1994 = vpack.c.b16 %v1734, %v1730
    %v1995 = vpack.c.b16 %v1735, %v1731
    %v1996 = vpack.c.b16 %v1736, %v1732
    %v1997 = vpack.c.b16 %v1741, %v1737
    %v1998 = vpack.c.b16 %v1742, %v1738
    %v1999 = vpack.c.b16 %v1743, %v1739
    %v2000 = vpack.c.b16 %v1744, %v1740
    %2257 = vmatprep.subr.bf16.mxu0 %v1746
    %2258 = vmatpush1.bf16.msra.mxu0 %v1745
    %2259 = vmatprep.subr.bf16.mxu0 %v1750
    %2260 = vmatpush1.bf16.msra.mxu0 %v1749
    %2261 = vmatprep.subr.bf16.mxu0 %v1754
    %2262 = vmatpush1.bf16.msra.mxu0 %v1753
    %2263 = vmatprep.subr.bf16.mxu0 %v1758
    %2264 = vmatpush1.bf16.msra.mxu0 %v1757
    %2265 = vmatprep.subr.bf16.mxu0 %v1762
    %2266 = vmatpush1.bf16.msra.mxu0 %v1761
    %2267 = vmatprep.subr.bf16.mxu0 %v1766
    %2268 = vmatpush1.bf16.msra.mxu0 %v1765
    %2269 = vmatprep.subr.bf16.mxu0 %v1770
    %2270 = vmatpush1.bf16.msra.mxu0 %v1769
    %2271 = vmatprep.subr.bf16.mxu0 %v1774
    %2272 = vmatpush1.bf16.msra.mxu0 %v1773
    %2273 = vmatprep.subr.bf16.mxu0 %v1778
    %2274 = vmatpush1.bf16.msra.mxu0 %v1777
    %2275 = vmatprep.subr.bf16.mxu0 %v1782
    %2276 = vmatpush1.bf16.msra.mxu0 %v1781
    %2277 = vmatprep.subr.bf16.mxu0 %v1786
    %2278 = vmatpush1.bf16.msra.mxu0 %v1785
    %2279 = vmatprep.subr.bf16.mxu0 %v1790
    %2280 = vmatpush1.bf16.msra.mxu0 %v1789
    %2281 = vmatprep.subr.bf16.mxu0 %v1794
    %2282 = vmatpush1.bf16.msra.mxu0 %v1793
    %2283 = vmatprep.subr.bf16.mxu0 %v1798
    %2284 = vmatpush1.bf16.msra.mxu0 %v1797
    %2285 = vmatprep.subr.bf16.mxu0 %v1802
    %2286 = vmatpush1.bf16.msra.mxu0 %v1801
    %2287 = vmatprep.subr.bf16.mxu0 %v1806
    %2288 = vmatpush1.bf16.msra.mxu0 %v1805
    %2289 = vmatprep.mubr.bf16.mxu0 %v692
    %2290 = vmatmul.mubr.bf16.gmra.mrb[0].mxu0 %v691
    %v2291 = vpop.f32.mrb[0].mxu0
    %v2292 = vadd.f32 %v960, %v2291
    %v2293 = vpop.f32.mrb[0].mxu0
    %v2294 = vadd.f32 %v964, %v2293
    %v2295 = vpop.f32.mrb[0].mxu0
    %v2296 = vpop.f32.mrb[0].mxu0
    %2297 = vdwg.mxu0
    %2298 = vmatprep.subr.bf16.mxu0 %v1810
    %2299 = vmatpush1.bf16.msra.mxu0 %v1809
    %2300 = vmatprep.subr.bf16.mxu0 %v1814
    %2301 = vmatpush1.bf16.msra.mxu0 %v1813
    %2302 = vmatprep.subr.bf16.mxu0 %v1818
    %2303 = vmatpush1.bf16.msra.mxu0 %v1817
    %2304 = vmatprep.subr.bf16.mxu0 %v1822
    %2305 = vmatpush1.bf16.msra.mxu0 %v1821
    %2306 = vmatprep.subr.bf16.mxu0 %v1826
    %2307 = vmatpush1.bf16.msra.mxu0 %v1825
    %2308 = vmatprep.subr.bf16.mxu0 %v1830
    %2309 = vmatpush1.bf16.msra.mxu0 %v1829
    %2310 = vmatprep.subr.bf16.mxu0 %v1834
    %2311 = vmatpush1.bf16.msra.mxu0 %v1833
    %2312 = vmatprep.subr.bf16.mxu0 %v1838
    %2313 = vmatpush1.bf16.msra.mxu0 %v1837
    %2314 = vmatprep.subr.bf16.mxu0 %v1842
    %2315 = vmatpush1.bf16.msra.mxu0 %v1841
    %2316 = vmatprep.subr.bf16.mxu0 %v1846
    %2317 = vmatpush1.bf16.msra.mxu0 %v1845
    %2318 = vmatprep.subr.bf16.mxu0 %v1850
    %2319 = vmatpush1.bf16.msra.mxu0 %v1849
    %2320 = vmatprep.subr.bf16.mxu0 %v1854
    %2321 = vmatpush1.bf16.msra.mxu0 %v1853
    %2322 = vmatprep.subr.bf16.mxu0 %v1858
    %2323 = vmatpush1.bf16.msra.mxu0 %v1857
    %2324 = vmatprep.subr.bf16.mxu0 %v1862
    %2325 = vmatpush1.bf16.msra.mxu0 %v1861
    %2326 = vmatprep.subr.bf16.mxu0 %v1866
    %2327 = vmatpush1.bf16.msra.mxu0 %v1865
    %2328 = vmatprep.subr.bf16.mxu0 %v1870
    %2329 = vmatpush1.bf16.msra.mxu0 %v1869
    %2330 = vmatprep.mubr.bf16.mxu0 %v694
    %2331 = vmatmul.mubr.bf16.gmra.mrb[0].mxu0 %v693
    %v2332 = vpop.f32.mrb[0].mxu0
    %v2333 = vadd.f32 %v2292, %v2332
    %v2334 = vpop.f32.mrb[0].mxu0
    %v2335 = vadd.f32 %v2294, %v2334
    %v2336 = vpop.f32.mrb[0].mxu0
    %v2337 = vpop.f32.mrb[0].mxu0
    %2338 = vdwg.mxu0
    %2339 = vmatprep.subr.bf16.mxu0 %v1874
    %2340 = vmatpush1.bf16.msra.mxu0 %v1873
    %2341 = vmatprep.subr.bf16.mxu0 %v1878
    %2342 = vmatpush1.bf16.msra.mxu0 %v1877
    %2343 = vmatprep.subr.bf16.mxu0 %v1882
    %2344 = vmatpush1.bf16.msra.mxu0 %v1881
    %2345 = vmatprep.subr.bf16.mxu0 %v1886
    %2346 = vmatpush1.bf16.msra.mxu0 %v1885
    %2347 = vmatprep.subr.bf16.mxu0 %v1890
    %2348 = vmatpush1.bf16.msra.mxu0 %v1889
    %2349 = vmatprep.subr.bf16.mxu0 %v1894
    %2350 = vmatpush1.bf16.msra.mxu0 %v1893
    %2351 = vmatprep.subr.bf16.mxu0 %v1898
    %2352 = vmatpush1.bf16.msra.mxu0 %v1897
    %2353 = vmatprep.subr.bf16.mxu0 %v1902
    %2354 = vmatpush1.bf16.msra.mxu0 %v1901
    %2355 = vmatprep.subr.bf16.mxu0 %v1906
    %2356 = vmatpush1.bf16.msra.mxu0 %v1905
    %2357 = vmatprep.subr.bf16.mxu0 %v1910
    %2358 = vmatpush1.bf16.msra.mxu0 %v1909
    %2359 = vmatprep.subr.bf16.mxu0 %v1914
    %2360 = vmatpush1.bf16.msra.mxu0 %v1913
    %2361 = vmatprep.subr.bf16.mxu0 %v1918
    %2362 = vmatpush1.bf16.msra.mxu0 %v1917
    %2363 = vmatprep.subr.bf16.mxu0 %v1922
    %2364 = vmatpush1.bf16.msra.mxu0 %v1921
    %2365 = vmatprep.subr.bf16.mxu0 %v1926
    %2366 = vmatpush1.bf16.msra.mxu0 %v1925
    %2367 = vmatprep.subr.bf16.mxu0 %v1930
    %2368 = vmatpush1.bf16.msra.mxu0 %v1929
    %2369 = vmatprep.subr.bf16.mxu0 %v1934
    %2370 = vmatpush1.bf16.msra.mxu0 %v1933
    %2371 = vmatprep.mubr.bf16.mxu0 %v696
    %2372 = vmatmul.mubr.bf16.gmra.mrb[0].mxu0 %v695
    %v2373 = vpop.f32.mrb[0].mxu0
    %v2374 = vadd.f32 %v2333, %v2373
    %v2375 = vpop.f32.mrb[0].mxu0
    %v2376 = vadd.f32 %v2335, %v2375
    %v2377 = vpop.f32.mrb[0].mxu0
    %v2378 = vpop.f32.mrb[0].mxu0
    %2379 = vdwg.mxu0
    %2380 = vmatprep.subr.bf16.mxu0 %v1938
    %2381 = vmatpush1.bf16.msra.mxu0 %v1937
    %2382 = vmatprep.subr.bf16.mxu0 %v1942
    %2383 = vmatpush1.bf16.msra.mxu0 %v1941
    %2384 = vmatprep.subr.bf16.mxu0 %v1946
    %2385 = vmatpush1.bf16.msra.mxu0 %v1945
    %2386 = vmatprep.subr.bf16.mxu0 %v1950
    %2387 = vmatpush1.bf16.msra.mxu0 %v1949
    %2388 = vmatprep.subr.bf16.mxu0 %v1954
    %2389 = vmatpush1.bf16.msra.mxu0 %v1953
    %2390 = vmatprep.subr.bf16.mxu0 %v1958
    %2391 = vmatpush1.bf16.msra.mxu0 %v1957
    %2392 = vmatprep.subr.bf16.mxu0 %v1962
    %2393 = vmatpush1.bf16.msra.mxu0 %v1961
    %2394 = vmatprep.subr.bf16.mxu0 %v1966
    %2395 = vmatpush1.bf16.msra.mxu0 %v1965
    %2396 = vmatprep.subr.bf16.mxu0 %v1970
    %2397 = vmatpush1.bf16.msra.mxu0 %v1969
    %2398 = vmatprep.subr.bf16.mxu0 %v1974
    %2399 = vmatpush1.bf16.msra.mxu0 %v1973
    %2400 = vmatprep.subr.bf16.mxu0 %v1978
    %2401 = vmatpush1.bf16.msra.mxu0 %v1977
    %2402 = vmatprep.subr.bf16.mxu0 %v1982
    %2403 = vmatpush1.bf16.msra.mxu0 %v1981
    %2404 = vmatprep.subr.bf16.mxu0 %v1986
    %2405 = vmatpush1.bf16.msra.mxu0 %v1985
    %2406 = vmatprep.subr.bf16.mxu0 %v1990
    %2407 = vmatpush1.bf16.msra.mxu0 %v1989
    %2408 = vmatprep.subr.bf16.mxu0 %v1994
    %2409 = vmatpush1.bf16.msra.mxu0 %v1993
    %2410 = vmatprep.subr.bf16.mxu0 %v1998
    %2411 = vmatpush1.bf16.msra.mxu0 %v1997
    %2412 = vmatprep.mubr.bf16.mxu0 %v698
    %2413 = vmatmul.mubr.bf16.gmra.mrb[0].mxu0 %v697
    %v2414 = vpop.f32.mrb[0].mxu0
    %v2415 = vadd.f32 %v2374, %v2414
    %v2416 = vpop.f32.mrb[0].mxu0
    %v2417 = vadd.f32 %v2376, %v2416
    %v2418 = vpop.f32.mrb[0].mxu0
    %v2419 = vpop.f32.mrb[0].mxu0
    %2420 = vdwg.mxu0
    %2421 = vmatprep.subr.bf16.mxu0 %v1748
    %2422 = vmatpush1.bf16.msra.mxu0 %v1747
    %2423 = vmatprep.subr.bf16.mxu0 %v1752
    %2424 = vmatpush1.bf16.msra.mxu0 %v1751
    %2425 = vmatprep.subr.bf16.mxu0 %v1756
    %2426 = vmatpush1.bf16.msra.mxu0 %v1755
    %2427 = vmatprep.subr.bf16.mxu0 %v1760
    %2428 = vmatpush1.bf16.msra.mxu0 %v1759
    %2429 = vmatprep.subr.bf16.mxu0 %v1764
    %2430 = vmatpush1.bf16.msra.mxu0 %v1763
    %2431 = vmatprep.subr.bf16.mxu0 %v1768
    %2432 = vmatpush1.bf16.msra.mxu0 %v1767
    %2433 = vmatprep.subr.bf16.mxu0 %v1772
    %2434 = vmatpush1.bf16.msra.mxu0 %v1771
    %2435 = vmatprep.subr.bf16.mxu0 %v1776
    %2436 = vmatpush1.bf16.msra.mxu0 %v1775
    %2437 = vmatprep.subr.bf16.mxu0 %v1780
    %2438 = vmatpush1.bf16.msra.mxu0 %v1779
    %2439 = vmatprep.subr.bf16.mxu0 %v1784
    %2440 = vmatpush1.bf16.msra.mxu0 %v1783
    %2441 = vmatprep.subr.bf16.mxu0 %v1788
    %2442 = vmatpush1.bf16.msra.mxu0 %v1787
    %2443 = vmatprep.subr.bf16.mxu0 %v1792
    %2444 = vmatpush1.bf16.msra.mxu0 %v1791
    %2445 = vmatprep.subr.bf16.mxu0 %v1796
    %2446 = vmatpush1.bf16.msra.mxu0 %v1795
    %2447 = vmatprep.subr.bf16.mxu0 %v1800
    %2448 = vmatpush1.bf16.msra.mxu0 %v1799
    %2449 = vmatprep.subr.bf16.mxu0 %v1804
    %2450 = vmatpush1.bf16.msra.mxu0 %v1803
    %2451 = vmatprep.subr.bf16.mxu0 %v1808
    %2452 = vmatpush1.bf16.msra.mxu0 %v1807
    %2453 = vmatprep.mubr.bf16.mxu0 %v692
    %2454 = vmatmul.mubr.bf16.gmra.mrb[0].mxu0 %v691
    %v2455 = vpop.f32.mrb[0].mxu0
    %v2456 = vadd.f32 %v968, %v2455
    %v2457 = vpop.f32.mrb[0].mxu0
    %v2458 = vadd.f32 %v972, %v2457
    %v2459 = vpop.f32.mrb[0].mxu0
    %v2460 = vpop.f32.mrb[0].mxu0
    %2461 = vdwg.mxu0
    %2462 = vmatprep.subr.bf16.mxu0 %v1812
    %2463 = vmatpush1.bf16.msra.mxu0 %v1811
    %2464 = vmatprep.subr.bf16.mxu0 %v1816
    %2465 = vmatpush1.bf16.msra.mxu0 %v1815
    %2466 = vmatprep.subr.bf16.mxu0 %v1820
    %2467 = vmatpush1.bf16.msra.mxu0 %v1819
    %2468 = vmatprep.subr.bf16.mxu0 %v1824
    %2469 = vmatpush1.bf16.msra.mxu0 %v1823
    %2470 = vmatprep.subr.bf16.mxu0 %v1828
    %2471 = vmatpush1.bf16.msra.mxu0 %v1827
    %2472 = vmatprep.subr.bf16.mxu0 %v1832
    %2473 = vmatpush1.bf16.msra.mxu0 %v1831
    %2474 = vmatprep.subr.bf16.mxu0 %v1836
    %2475 = vmatpush1.bf16.msra.mxu0 %v1835
    %2476 = vmatprep.subr.bf16.mxu0 %v1840
    %2477 = vmatpush1.bf16.msra.mxu0 %v1839
    %2478 = vmatprep.subr.bf16.mxu0 %v1844
    %2479 = vmatpush1.bf16.msra.mxu0 %v1843
    %2480 = vmatprep.subr.bf16.mxu0 %v1848
    %2481 = vmatpush1.bf16.msra.mxu0 %v1847
    %2482 = vmatprep.subr.bf16.mxu0 %v1852
    %2483 = vmatpush1.bf16.msra.mxu0 %v1851
    %2484 = vmatprep.subr.bf16.mxu0 %v1856
    %2485 = vmatpush1.bf16.msra.mxu0 %v1855
    %2486 = vmatprep.subr.bf16.mxu0 %v1860
    %2487 = vmatpush1.bf16.msra.mxu0 %v1859
    %2488 = vmatprep.subr.bf16.mxu0 %v1864
    %2489 = vmatpush1.bf16.msra.mxu0 %v1863
    %2490 = vmatprep.subr.bf16.mxu0 %v1868
    %2491 = vmatpush1.bf16.msra.mxu0 %v1867
    %2492 = vmatprep.subr.bf16.mxu0 %v1872
    %2493 = vmatpush1.bf16.msra.mxu0 %v1871
    %2494 = vmatprep.mubr.bf16.mxu0 %v694
    %2495 = vmatmul.mubr.bf16.gmra.mrb[0].mxu0 %v693
    %v2496 = vpop.f32.mrb[0].mxu0
    %v2497 = vadd.f32 %v2456, %v2496
    %v2498 = vpop.f32.mrb[0].mxu0
    %v2499 = vadd.f32 %v2458, %v2498
    %v2500 = vpop.f32.mrb[0].mxu0
    %v2501 = vpop.f32.mrb[0].mxu0
    %2502 = vdwg.mxu0
    %2503 = vmatprep.subr.bf16.mxu0 %v1876
    %2504 = vmatpush1.bf16.msra.mxu0 %v1875
    %2505 = vmatprep.subr.bf16.mxu0 %v1880
    %2506 = vmatpush1.bf16.msra.mxu0 %v1879
    %2507 = vmatprep.subr.bf16.mxu0 %v1884
    %2508 = vmatpush1.bf16.msra.mxu0 %v1883
    %2509 = vmatprep.subr.bf16.mxu0 %v1888
    %2510 = vmatpush1.bf16.msra.mxu0 %v1887
    %2511 = vmatprep.subr.bf16.mxu0 %v1892
    %2512 = vmatpush1.bf16.msra.mxu0 %v1891
    %2513 = vmatprep.subr.bf16.mxu0 %v1896
    %2514 = vmatpush1.bf16.msra.mxu0 %v1895
    %2515 = vmatprep.subr.bf16.mxu0 %v1900
    %2516 = vmatpush1.bf16.msra.mxu0 %v1899
    %2517 = vmatprep.subr.bf16.mxu0 %v1904
    %2518 = vmatpush1.bf16.msra.mxu0 %v1903
    %2519 = vmatprep.subr.bf16.mxu0 %v1908
    %2520 = vmatpush1.bf16.msra.mxu0 %v1907
    %2521 = vmatprep.subr.bf16.mxu0 %v1912
    %2522 = vmatpush1.bf16.msra.mxu0 %v1911
    %2523 = vmatprep.subr.bf16.mxu0 %v1916
    %2524 = vmatpush1.bf16.msra.mxu0 %v1915
    %2525 = vmatprep.subr.bf16.mxu0 %v1920
    %2526 = vmatpush1.bf16.msra.mxu0 %v1919
    %2527 = vmatprep.subr.bf16.mxu0 %v1924
    %2528 = vmatpush1.bf16.msra.mxu0 %v1923
    %2529 = vmatprep.subr.bf16.mxu0 %v1928
    %2530 = vmatpush1.bf16.msra.mxu0 %v1927
    %2531 = vmatprep.subr.bf16.mxu0 %v1932
    %2532 = vmatpush1.bf16.msra.mxu0 %v1931
    %2533 = vmatprep.subr.bf16.mxu0 %v1936
    %2534 = vmatpush1.bf16.msra.mxu0 %v1935
    %2535 = vmatprep.mubr.bf16.mxu0 %v696
    %2536 = vmatmul.mubr.bf16.gmra.mrb[0].mxu0 %v695
    %v2537 = vpop.f32.mrb[0].mxu0
    %v2538 = vadd.f32 %v2497, %v2537
    %v2539 = vpop.f32.mrb[0].mxu0
    %v2540 = vadd.f32 %v2499, %v2539
    %v2541 = vpop.f32.mrb[0].mxu0
    %v2542 = vpop.f32.mrb[0].mxu0
    %2543 = vdwg.mxu0
    %2544 = vmatprep.subr.bf16.mxu0 %v1940
    %2545 = vmatpush1.bf16.msra.mxu0 %v1939
    %2546 = vmatprep.subr.bf16.mxu0 %v1944
    %2547 = vmatpush1.bf16.msra.mxu0 %v1943
    %2548 = vmatprep.subr.bf16.mxu0 %v1948
    %2549 = vmatpush1.bf16.msra.mxu0 %v1947
    %2550 = vmatprep.subr.bf16.mxu0 %v1952
    %2551 = vmatpush1.bf16.msra.mxu0 %v1951
    %2552 = vmatprep.subr.bf16.mxu0 %v1956
    %2553 = vmatpush1.bf16.msra.mxu0 %v1955
    %2554 = vmatprep.subr.bf16.mxu0 %v1960
    %2555 = vmatpush1.bf16.msra.mxu0 %v1959
    %2556 = vmatprep.subr.bf16.mxu0 %v1964
    %2557 = vmatpush1.bf16.msra.mxu0 %v1963
    %2558 = vmatprep.subr.bf16.mxu0 %v1968
    %2559 = vmatpush1.bf16.msra.mxu0 %v1967
    %2560 = vmatprep.subr.bf16.mxu0 %v1972
    %2561 = vmatpush1.bf16.msra.mxu0 %v1971
    %2562 = vmatprep.subr.bf16.mxu0 %v1976
    %2563 = vmatpush1.bf16.msra.mxu0 %v1975
    %2564 = vmatprep.subr.bf16.mxu0 %v1980
    %2565 = vmatpush1.bf16.msra.mxu0 %v1979
    %2566 = vmatprep.subr.bf16.mxu0 %v1984
    %2567 = vmatpush1.bf16.msra.mxu0 %v1983
    %2568 = vmatprep.subr.bf16.mxu0 %v1988
    %2569 = vmatpush1.bf16.msra.mxu0 %v1987
    %2570 = vmatprep.subr.bf16.mxu0 %v1992
    %2571 = vmatpush1.bf16.msra.mxu0 %v1991
    %2572 = vmatprep.subr.bf16.mxu0 %v1996
    %2573 = vmatpush1.bf16.msra.mxu0 %v1995
    %2574 = vmatprep.subr.bf16.mxu0 %v2000
    %2575 = vmatpush1.bf16.msra.mxu0 %v1999
    %2576 = vmatprep.mubr.bf16.mxu0 %v698
    %2577 = vmatmul.mubr.bf16.gmra.mrb[0].mxu0 %v697
    %v2578 = vpop.f32.mrb[0].mxu0
    %v2579 = vadd.f32 %v2538, %v2578
    %v2580 = vpop.f32.mrb[0].mxu0
    %v2581 = vadd.f32 %v2540, %v2580
    %v2582 = vpop.f32.mrb[0].mxu0
    %v2583 = vpop.f32.mrb[0].mxu0
    %2584 = vdwg.mxu0
    %v2585 = vmax.f32 %v2415, 0.0
    %v2586 = vmax.f32 %v2417, 0.0
    %v2587 = vmax.f32 %v2579, 0.0
    %v2588 = vmax.f32 %v2581, 0.0
    %v2589 = vpack.c.bf16 %v2585, %v2585
    %v2590 = vpack.c.bf16 %v2586, %v2586
    %v2591 = vpack.c.bf16 %v2587, %v2587
    %v2592 = vpack.c.bf16 %v2588, %v2588
    %v2593 = vld [vmem:[#allocation10] sm:$0xf]
    %v2594 = vld [vmem:[#allocation10 + $0x4] sm:$0xf]
    %v2595 = vld [vmem:[#allocation10 + $0x8] sm:$0xf]
    %v2596 = vld [vmem:[#allocation10 + $0xc] sm:$0xf]
    %v2597 = vld [vmem:[#allocation10 + $0x10] sm:$0xf]
    %v2598 = vld [vmem:[#allocation10 + $0x14] sm:$0xf]
    %v2599 = vld [vmem:[#allocation10 + $0x18] sm:$0xf]
    %v2600 = vld [vmem:[#allocation10 + $0x1c] sm:$0xf]
    %v2601 = vld [vmem:[#allocation10 + $0x20] sm:$0xf]
    %v2602 = vld [vmem:[#allocation10 + $0x24] sm:$0xf]
    %v2603 = vld [vmem:[#allocation10 + $0x28] sm:$0xf]
    %v2604 = vld [vmem:[#allocation10 + $0x2c] sm:$0xf]
    %v2605 = vld [vmem:[#allocation10 + $0x30] sm:$0xf]
    %v2606 = vld [vmem:[#allocation10 + $0x34] sm:$0xf]
    %v2607 = vld [vmem:[#allocation10 + $0x38] sm:$0xf]
    %v2608 = vld [vmem:[#allocation10 + $0x3c] sm:$0xf]
    %v2609 = vld [vmem:[#allocation10 + $0x40] sm:$0xf]
    %v2610 = vld [vmem:[#allocation10 + $0x44] sm:$0xf]
    %v2611 = vld [vmem:[#allocation10 + $0x48] sm:$0xf]
    %v2612 = vld [vmem:[#allocation10 + $0x4c] sm:$0xf]
    %v2613 = vld [vmem:[#allocation10 + $0x50] sm:$0xf]
    %v2614 = vld [vmem:[#allocation10 + $0x54] sm:$0xf]
    %v2615 = vld [vmem:[#allocation10 + $0x58] sm:$0xf]
    %v2616 = vld [vmem:[#allocation10 + $0x5c] sm:$0xf]
    %v2617 = vld [vmem:[#allocation10 + $0x60] sm:$0xf]
    %v2618 = vld [vmem:[#allocation10 + $0x64] sm:$0xf]
    %v2619 = vld [vmem:[#allocation10 + $0x68] sm:$0xf]
    %v2620 = vld [vmem:[#allocation10 + $0x6c] sm:$0xf]
    %v2621 = vld [vmem:[#allocation10 + $0x70] sm:$0xf]
    %v2622 = vld [vmem:[#allocation10 + $0x74] sm:$0xf]
    %v2623 = vld [vmem:[#allocation10 + $0x78] sm:$0xf]
    %v2624 = vld [vmem:[#allocation10 + $0x7c] sm:$0xf]
    %v2625 = vld [vmem:[#allocation10 + $0x80] sm:$0xf]
    %v2626 = vld [vmem:[#allocation10 + $0x84] sm:$0xf]
    %v2627 = vld [vmem:[#allocation10 + $0x88] sm:$0xf]
    %v2628 = vld [vmem:[#allocation10 + $0x8c] sm:$0xf]
    %v2629 = vld [vmem:[#allocation10 + $0x90] sm:$0xf]
    %v2630 = vld [vmem:[#allocation10 + $0x94] sm:$0xf]
    %v2631 = vld [vmem:[#allocation10 + $0x98] sm:$0xf]
    %v2632 = vld [vmem:[#allocation10 + $0x9c] sm:$0xf]
    %v2633 = vld [vmem:[#allocation10 + $0xa0] sm:$0xf]
    %v2634 = vld [vmem:[#allocation10 + $0xa4] sm:$0xf]
    %v2635 = vld [vmem:[#allocation10 + $0xa8] sm:$0xf]
    %v2636 = vld [vmem:[#allocation10 + $0xac] sm:$0xf]
    %v2637 = vld [vmem:[#allocation10 + $0xb0] sm:$0xf]
    %v2638 = vld [vmem:[#allocation10 + $0xb4] sm:$0xf]
    %v2639 = vld [vmem:[#allocation10 + $0xb8] sm:$0xf]
    %v2640 = vld [vmem:[#allocation10 + $0xbc] sm:$0xf]
    %v2641 = vld [vmem:[#allocation10 + $0xc0] sm:$0xf]
    %v2642 = vld [vmem:[#allocation10 + $0xc4] sm:$0xf]
    %v2643 = vld [vmem:[#allocation10 + $0xc8] sm:$0xf]
    %v2644 = vld [vmem:[#allocation10 + $0xcc] sm:$0xf]
    %v2645 = vld [vmem:[#allocation10 + $0xd0] sm:$0xf]
    %v2646 = vld [vmem:[#allocation10 + $0xd4] sm:$0xf]
    %v2647 = vld [vmem:[#allocation10 + $0xd8] sm:$0xf]
    %v2648 = vld [vmem:[#allocation10 + $0xdc] sm:$0xf]
    %v2649 = vld [vmem:[#allocation10 + $0xe0] sm:$0xf]
    %v2650 = vld [vmem:[#allocation10 + $0xe4] sm:$0xf]
    %v2651 = vld [vmem:[#allocation10 + $0xe8] sm:$0xf]
    %v2652 = vld [vmem:[#allocation10 + $0xec] sm:$0xf]
    %v2653 = vld [vmem:[#allocation10 + $0xf0] sm:$0xf]
    %v2654 = vld [vmem:[#allocation10 + $0xf4] sm:$0xf]
    %v2655 = vld [vmem:[#allocation10 + $0xf8] sm:$0xf]
    %v2656 = vld [vmem:[#allocation10 + $0xfc] sm:$0xf]
    %v2657 = vld [vmem:[%s6] sm:$0x1]
    %v2659 = vlaneseq
    %v2660 = vshrl.u32 %v2659, 7
    %v2661 = vsub.s32 0, %v2660
    %v2662 = vrot.slane %v2657, %v2661
    %v2728 = vunpack.c.l.b16 %v2593
    %v2729 = vunpack.c.l.b16 %v2594
    %v2730 = vunpack.c.l.b16 %v2595
    %v2731 = vunpack.c.l.b16 %v2596
    %v2732 = vunpack.c.l.b16 %v2597
    %v2733 = vunpack.c.l.b16 %v2598
    %v2734 = vunpack.c.l.b16 %v2599
    %v2735 = vunpack.c.l.b16 %v2600
    %v2736 = vunpack.c.l.b16 %v2601
    %v2737 = vunpack.c.l.b16 %v2602
    %v2738 = vunpack.c.l.b16 %v2603
    %v2739 = vunpack.c.l.b16 %v2604
    %v2740 = vunpack.c.l.b16 %v2605
    %v2741 = vunpack.c.l.b16 %v2606
    %v2742 = vunpack.c.l.b16 %v2607
    %v2743 = vunpack.c.l.b16 %v2608
    %v2744 = vunpack.c.l.b16 %v2609
    %v2745 = vunpack.c.l.b16 %v2610
    %v2746 = vunpack.c.l.b16 %v2611
    %v2747 = vunpack.c.l.b16 %v2612
    %v2748 = vunpack.c.l.b16 %v2613
    %v2749 = vunpack.c.l.b16 %v2614
    %v2750 = vunpack.c.l.b16 %v2615
    %v2751 = vunpack.c.l.b16 %v2616
    %v2752 = vunpack.c.l.b16 %v2617
    %v2753 = vunpack.c.l.b16 %v2618
    %v2754 = vunpack.c.l.b16 %v2619
    %v2755 = vunpack.c.l.b16 %v2620
    %v2756 = vunpack.c.l.b16 %v2621
    %v2757 = vunpack.c.l.b16 %v2622
    %v2758 = vunpack.c.l.b16 %v2623
    %v2759 = vunpack.c.l.b16 %v2624
    %v2760 = vunpack.c.l.b16 %v2625
    %v2761 = vunpack.c.l.b16 %v2626
    %v2762 = vunpack.c.l.b16 %v2627
    %v2763 = vunpack.c.l.b16 %v2628
    %v2764 = vunpack.c.l.b16 %v2629
    %v2765 = vunpack.c.l.b16 %v2630
    %v2766 = vunpack.c.l.b16 %v2631
    %v2767 = vunpack.c.l.b16 %v2632
    %v2768 = vunpack.c.l.b16 %v2633
    %v2769 = vunpack.c.l.b16 %v2634
    %v2770 = vunpack.c.l.b16 %v2635
    %v2771 = vunpack.c.l.b16 %v2636
    %v2772 = vunpack.c.l.b16 %v2637
    %v2773 = vunpack.c.l.b16 %v2638
    %v2774 = vunpack.c.l.b16 %v2639
    %v2775 = vunpack.c.l.b16 %v2640
    %v2776 = vunpack.c.l.b16 %v2641
    %v2777 = vunpack.c.l.b16 %v2642
    %v2778 = vunpack.c.l.b16 %v2643
    %v2779 = vunpack.c.l.b16 %v2644
    %v2780 = vunpack.c.l.b16 %v2645
    %v2781 = vunpack.c.l.b16 %v2646
    %v2782 = vunpack.c.l.b16 %v2647
    %v2783 = vunpack.c.l.b16 %v2648
    %v2784 = vunpack.c.l.b16 %v2649
    %v2785 = vunpack.c.l.b16 %v2650
    %v2786 = vunpack.c.l.b16 %v2651
    %v2787 = vunpack.c.l.b16 %v2652
    %v2788 = vunpack.c.l.b16 %v2653
    %v2789 = vunpack.c.l.b16 %v2654
    %v2790 = vunpack.c.l.b16 %v2655
    %v2791 = vunpack.c.l.b16 %v2656
    %v2792 = vpack.c.b16 %v2729, %v2728
    %v2793 = vpack.c.b16 %v2731, %v2730
    %v2794 = vpack.c.b16 %v2733, %v2732
    %v2795 = vpack.c.b16 %v2735, %v2734
    %v2796 = vpack.c.b16 %v2737, %v2736
    %v2797 = vpack.c.b16 %v2739, %v2738
    %v2798 = vpack.c.b16 %v2741, %v2740
    %v2799 = vpack.c.b16 %v2743, %v2742
    %v2800 = vpack.c.b16 %v2745, %v2744
    %v2801 = vpack.c.b16 %v2747, %v2746
    %v2802 = vpack.c.b16 %v2749, %v2748
    %v2803 = vpack.c.b16 %v2751, %v2750
    %v2804 = vpack.c.b16 %v2753, %v2752
    %v2805 = vpack.c.b16 %v2755, %v2754
    %v2806 = vpack.c.b16 %v2757, %v2756
    %v2807 = vpack.c.b16 %v2759, %v2758
    %v2808 = vpack.c.b16 %v2761, %v2760
    %v2809 = vpack.c.b16 %v2763, %v2762
    %v2810 = vpack.c.b16 %v2765, %v2764
    %v2811 = vpack.c.b16 %v2767, %v2766
    %v2812 = vpack.c.b16 %v2769, %v2768
    %v2813 = vpack.c.b16 %v2771, %v2770
    %v2814 = vpack.c.b16 %v2773, %v2772
    %v2815 = vpack.c.b16 %v2775, %v2774
    %v2816 = vpack.c.b16 %v2777, %v2776
    %v2817 = vpack.c.b16 %v2779, %v2778
    %v2818 = vpack.c.b16 %v2781, %v2780
    %v2819 = vpack.c.b16 %v2783, %v2782
    %v2820 = vpack.c.b16 %v2785, %v2784
    %v2821 = vpack.c.b16 %v2787, %v2786
    %v2822 = vpack.c.b16 %v2789, %v2788
    %v2823 = vpack.c.b16 %v2791, %v2790
    %2856 = vmatprep.subr.bf16.mxu0 0
    %2857 = vmatpush1.bf16.msra.mxu0 %v2792
    %2858 = vmatprep.subr.bf16.mxu0 0
    %2859 = vmatpush1.bf16.msra.mxu0 %v2793
    %2860 = vmatprep.subr.bf16.mxu0 0
    %2861 = vmatpush1.bf16.msra.mxu0 %v2794
    %2862 = vmatprep.subr.bf16.mxu0 0
    %2863 = vmatpush1.bf16.msra.mxu0 %v2795
    %2864 = vmatprep.subr.bf16.mxu0 0
    %2865 = vmatpush1.bf16.msra.mxu0 %v2796
    %2866 = vmatprep.subr.bf16.mxu0 0
    %2867 = vmatpush1.bf16.msra.mxu0 %v2797
    %2868 = vmatprep.subr.bf16.mxu0 0
    %2869 = vmatpush1.bf16.msra.mxu0 %v2798
    %2870 = vmatprep.subr.bf16.mxu0 0
    %2871 = vmatpush1.bf16.msra.mxu0 %v2799
    %2872 = vmatprep.subr.bf16.mxu0 0
    %2873 = vmatpush1.bf16.msra.mxu0 %v2800
    %2874 = vmatprep.subr.bf16.mxu0 0
    %2875 = vmatpush1.bf16.msra.mxu0 %v2801
    %2876 = vmatprep.subr.bf16.mxu0 0
    %2877 = vmatpush1.bf16.msra.mxu0 %v2802
    %2878 = vmatprep.subr.bf16.mxu0 0
    %2879 = vmatpush1.bf16.msra.mxu0 %v2803
    %2880 = vmatprep.subr.bf16.mxu0 0
    %2881 = vmatpush1.bf16.msra.mxu0 %v2804
    %2882 = vmatprep.subr.bf16.mxu0 0
    %2883 = vmatpush1.bf16.msra.mxu0 %v2805
    %2884 = vmatprep.subr.bf16.mxu0 0
    %2885 = vmatpush1.bf16.msra.mxu0 %v2806
    %2886 = vmatprep.subr.bf16.mxu0 0
    %2887 = vmatpush1.bf16.msra.mxu0 %v2807
    %2888 = vmatprep.mubr.bf16.mxu0 %v2590
    %2889 = vmatmul.mubr.bf16.gmra.mrb[0].mxu0 %v2589
    %v2890 = vpop.f32.mrb[0].mxu0
    %v2891 = vadd.f32 %v2662, %v2890
    %v2892 = vpop.f32.mrb[0].mxu0
    %v2893 = vpop.f32.mrb[0].mxu0
    %v2894 = vpop.f32.mrb[0].mxu0
    %2895 = vdwg.mxu0
    %2896 = vmatprep.subr.bf16.mxu0 0
    %2897 = vmatpush1.bf16.msra.mxu0 %v2808
    %2898 = vmatprep.subr.bf16.mxu0 0
    %2899 = vmatpush1.bf16.msra.mxu0 %v2809
    %2900 = vmatprep.subr.bf16.mxu0 0
    %2901 = vmatpush1.bf16.msra.mxu0 %v2810
    %2902 = vmatprep.subr.bf16.mxu0 0
    %2903 = vmatpush1.bf16.msra.mxu0 %v2811
    %2904 = vmatprep.subr.bf16.mxu0 0
    %2905 = vmatpush1.bf16.msra.mxu0 %v2812
    %2906 = vmatprep.subr.bf16.mxu0 0
    %2907 = vmatpush1.bf16.msra.mxu0 %v2813
    %2908 = vmatprep.subr.bf16.mxu0 0
    %2909 = vmatpush1.bf16.msra.mxu0 %v2814
    %2910 = vmatprep.subr.bf16.mxu0 0
    %2911 = vmatpush1.bf16.msra.mxu0 %v2815
    %2912 = vmatprep.subr.bf16.mxu0 0
    %2913 = vmatpush1.bf16.msra.mxu0 %v2816
    %2914 = vmatprep.subr.bf16.mxu0 0
    %2915 = vmatpush1.bf16.msra.mxu0 %v2817
    %2916 = vmatprep.subr.bf16.mxu0 0
    %2917 = vmatpush1.bf16.msra.mxu0 %v2818
    %2918 = vmatprep.subr.bf16.mxu0 0
    %2919 = vmatpush1.bf16.msra.mxu0 %v2819
    %2920 = vmatprep.subr.bf16.mxu0 0
    %2921 = vmatpush1.bf16.msra.mxu0 %v2820
    %2922 = vmatprep.subr.bf16.mxu0 0
    %2923 = vmatpush1.bf16.msra.mxu0 %v2821
    %2924 = vmatprep.subr.bf16.mxu0 0
    %2925 = vmatpush1.bf16.msra.mxu0 %v2822
    %2926 = vmatprep.subr.bf16.mxu0 0
    %2927 = vmatpush1.bf16.msra.mxu0 %v2823
    %2928 = vmatprep.mubr.bf16.mxu0 %v2592
    %2929 = vmatmul.mubr.bf16.gmra.mrb[0].mxu0 %v2591
    %v2930 = vpop.f32.mrb[0].mxu0
    %v2931 = vadd.f32 %v2891, %v2930
    %v2932 = vpop.f32.mrb[0].mxu0
    %v2933 = vpop.f32.mrb[0].mxu0
    %v2934 = vpop.f32.mrb[0].mxu0
    %2935 = vdwg.mxu0
    %2936 = vmax.xlane.f32.xlu0 %v2931
    %v2937 = vpop.xlane.xlu0 %2936
    %v2938 = vsub.f32 %v2931, %v2937
    %v2939 = vmul.f32 %v2938, 1.442695
    %v2940 = vpow.pop %v2939
    %2941 = vadd.xlane.f32.xlu0 %v2940
    %v2942 = vpop.xlane.xlu0 %2941
    %v2943 = vrcp.pop %v2942
    %v2944 = vmul.f32 %v2940, %v2943
    %2945 = vst [vmem:[#allocation11] sm:$0xff] %v2944
    // Predicated region
    $region50: #{tpu_custom_call.1} parent=1 // pred_check
      _
    $region51: #{tpu_custom_call.1} parent=1 // pred_check_branch
      %2947 = sbr.rel (0) target = $region53
    $region52: #{tpu_custom_call.1} parent=1 // pred_region
      %s2949 = ssub.s32 128, 128
      %2950 = vsyncadd [#allocation4], %s2949
      %s2952 = sshll.u32 [#allocation11], 4
      %s2953 = int_to_ptr.vmem [resolvable:$true] %s2952
      %2955 = dma.vmem_to_hbm [thread:$0]  %s2953, 128, %s7, [#allocation4]
    $region53: #{tpu_custom_call.1} parent=1 // pred_fallthru
      _
    // Predicated region
    $region54: #{tpu_custom_call.1} parent=1 // pred_check
      _
    $region55: #{tpu_custom_call.1} parent=1 // pred_check_branch
      %2957 = sbr.rel (0) target = $region57
    $region56: #{tpu_custom_call.1} parent=1 // pred_region
      %2958 = dma.done [#allocation4], 128
    $region57: #{tpu_custom_call.1} parent=1 // pred_fallthru
      _
    %2959 = vsyncpa [#allocation3], 1
    %2960 = vsyncpa [#allocation6], 1
    %2961 = vsyncpa [#allocation9], 1
    %2962 = vsyncpa [#allocation4], 1

</llo_original>
